<compile_context>
chip_gen: v7x
topology: tpu7x:2x2x1
jax: 0.10.0
libtpu: 0.0.40
codegen_flags: <defaults>
</compile_context>

<pallas_src>
import functools
import math

import jax
import jax.numpy as jnp
from jax.experimental import pallas as pl
from jax.experimental.pallas import tpu as pltpu


# ----------------------------- helpers -----------------------------

def _round_up(n, m):
    return -(-n // m) * m


def _pad_rows(n):
    """Pad point count so tiles are (8,128)/bf16 friendly."""
    return _round_up(n, 128) if n >= 128 else _round_up(n, 16)


def _pick_tile(n, pref):
    """Largest tile <= pref that divides n and is a multiple of 8 (else full n)."""
    if n <= pref:
        return n
    t = (pref // 8) * 8
    while t >= 8:
        if n % t == 0:
            return t
        t -= 8
    return n


def _dgcnn_vmem_bytes(k, tp, emb, c2):
    f32, b16 = 4, 2
    act = 2 * k * tp * 256 * (f32 + b16)                       # peak edge-conv activations (2x slack)
    maxes = tp * (64 + 64 + 128 + 256) * (f32 + b16)
    io = 2 * k * tp * c2 * b16 + 2 * tp * emb * b16            # double-buffered in/out blocks
    mlp = tp * (emb + 256 + 128 + emb) * (f32 + b16)
    wts = (6 * 64 + 64 * 64 + 64 * 128 + 128 * 256 + 512 * emb
           + emb * 256 + 256 * 128 + 128 * emb) * b16
    wts += (64 + 64 + 128 + 256 + emb + 256 + 128 + emb) * f32
    return act + maxes + io + mlp + wts + (1 << 20)


def _head_vmem_bytes(ta, nb, emb):
    f32, b16 = 4, 2
    kv = 2 * nb * emb * b16 + 2 * nb * 4 * b16                 # K / kpts blocks (double-buffered)
    qv = 2 * ta * emb * b16 + 4 * ta * 4 * f32
    scores = ta * nb * (3 * f32 + b16)                         # s, e, p temporaries
    wts = (emb * 128 + 3 * 128 * 128 + 128 * 512 + 512 * 4) * b16 + (4 * 128 + 512 + 4) * f32
    return kv + qv + scores + wts + (1 << 20)


def _compiler_params(sem, est_bytes):
    kw = {"dimension_semantics": sem}
    if est_bytes > 30 * (1 << 20):
        # TODO(synk): query pltpu.get_tpu_info() to respect v7x's 64 MiB physical VMEM.
        kw["vmem_limit_bytes"] = int(min(est_bytes, 64 * (1 << 20)))
    return pltpu.CompilerParams(**kw)


# ----------------------------- fused DGCNN + MLP-transformer kernel -----------------------------

def _dgcnn_mlp_kernel(x_ref,
                      w1, b1, w2, b2, w3, b3, w4, b4, w5, b5,
                      wm1, bm1, wm2, bm2, wm3, bm3,
                      o_ref, *, k, tp):
    def conv(h, w_ref, b_ref):
        y = jnp.dot(h.astype(jnp.bfloat16), w_ref[...],
                    preferred_element_type=jnp.float32)
        return jnp.maximum(y + b_ref[...], 0.0)

    # x_ref block: (1, k*tp, 6) bf16, rows neighbor-major: row = j*tp + p
    h = x_ref[0]
    maxes = []
    for (w, b) in ((w1, b1), (w2, b2), (w3, b3), (w4, b4)):
        h = conv(h, w, b)                               # (k*tp, Cout) f32
        m = h[0:tp]                                     # unrolled max over k
        for j in range(1, k):
            m = jnp.maximum(m, h[j * tp:(j + 1) * tp])
        maxes.append(m)                                 # (tp, Cout)

    # conv5 on concat(maxes) done as partial matmuls (avoids minor-dim concat):
    #   cat @ W5 == sum_l  m_l @ W5[off_l : off_l + C_l]
    acc = None
    off = 0
    for m in maxes:
        c = m.shape[-1]
        part = jnp.dot(m.astype(jnp.bfloat16), w5[off:off + c, :],
                       preferred_element_type=jnp.float32)
        acc = part if acc is None else acc + part
        off += c
    e5 = jnp.maximum(acc + b5[...], 0.0)                # (tp, emb) f32 = DGCNN embedding

    # fused MLP transformer (emb -> 250 -> 100 -> emb, zero-padded to 256/128) + residual
    hm = jnp.maximum(jnp.dot(e5.astype(jnp.bfloat16), wm1[...],
                             preferred_element_type=jnp.float32) + bm1[...], 0.0)
    hm = jnp.maximum(jnp.dot(hm.astype(jnp.bfloat16), wm2[...],
                             preferred_element_type=jnp.float32) + bm2[...], 0.0)
    y = jnp.dot(hm.astype(jnp.bfloat16), wm3[...],
                preferred_element_type=jnp.float32) + bm3[...]
    o_ref[0] = (e5 + y).astype(o_ref.dtype)             # bf16 store


def dgcnn_mlp(points, dg_layers, mlp_layers, *, k, tp_pref=128):
    """DCP-style DGCNN + fused MLP transformer + residual.

    points: (B, N, 3) -> (emb (B, N_pad, emb) bf16, N_pad)."""
    B, N, C = points.shape
    # TODO(synk): knn top-k + neighbor gather is data-dependent indexing; kept in XLA glue
    # (could move in-kernel via scalar-prefetched idx + in-VMEM takes to avoid the
    # (B,N,k,2C) HBM materialization).
    inner = jnp.einsum('bnd,bmd->bnm', points, points)
    sq = jnp.sum(points * points, axis=-1)
    neg_dist = -(sq[:, :, None] - 2.0 * inner + sq[:, None, :])
    idx = jax.lax.top_k(neg_dist, k)[1]                            # (B, N, k)
    nbr = jax.vmap(lambda pts, ix: pts[ix])(points, idx)           # (B, N, k, C)
    ctr = jnp.broadcast_to(points[:, :, None, :], nbr.shape)
    feat = jnp.concatenate([nbr - ctr, ctr], axis=-1).astype(jnp.bfloat16)   # (B, N, k, 2C)

    n_pad = _pad_rows(N)
    if n_pad != N:
        feat = jnp.pad(feat, ((0, 0), (0, n_pad - N), (0, 0), (0, 0)))

    tp = _pick_tile(n_pad, tp_pref)
    nt = n_pad // tp
    # neighbor-major within each point tile: (B, nt, k, tp, 2C) -> (B*nt, k*tp, 2C)
    feat = feat.reshape(B, nt, tp, k, 2 * C)
    feat = jnp.transpose(feat, (0, 1, 3, 2, 4)).reshape(B * nt, k * tp, 2 * C)

    emb = dg_layers[4][0].shape[1]
    wargs, wspecs = [], []
    for (w, b) in list(dg_layers) + list(mlp_layers):
        wargs += [w, b]
        wspecs += [pl.BlockSpec(w.shape, lambda i: (0, 0)),
                   pl.BlockSpec(b.shape, lambda i: (0, 0))]

    cp = _compiler_params(("parallel",), _dgcnn_vmem_bytes(k, tp, emb, 2 * C))
    out = pl.pallas_call(
        functools.partial(_dgcnn_mlp_kernel, k=k, tp=tp),
        out_shape=jax.ShapeDtypeStruct((B * nt, tp, emb), jnp.bfloat16),
        grid=(B * nt,),
        in_specs=[pl.BlockSpec((1, k * tp, 2 * C), lambda i: (i, 0, 0))] + wspecs,
        out_specs=pl.BlockSpec((1, tp, emb), lambda i: (i, 0, 0)),
        compiler_params=cp,
    )(feat, *wargs)
    return out.reshape(B, n_pad, emb), n_pad


# ----------------------------- fused correspondence head kernel -----------------------------

def _head_kernel(q_ref, k_ref, kpts_ref, qpts_ref,
                 w1, b1, w2, b2, w3, b3, w4, b4, w5, b5, wf_ref,
                 o_ref, *, scale, nb_valid, nb_total):
    q = q_ref[0]                                   # (ta, E) bf16
    kk = k_ref[0]                                  # (Nb, E) bf16
    # scores = softmax(Q K^T / sqrt(d_k)) over the anchor axis; scale folded into Q
    qs = (q.astype(jnp.float32) * scale).astype(jnp.bfloat16)
    s = jax.lax.dot_general(qs, kk, (((1,), (1,)), ((), ())),
                            preferred_element_type=jnp.float32)   # (ta, Nb)
    if nb_valid < nb_total:                        # mask zero-padded anchor columns
        col = jax.lax.broadcasted_iota(jnp.int32, s.shape, 1)
        s = jnp.where(col < nb_valid, s, -1e30)
    s = s - jnp.max(s, axis=-1, keepdims=True)
    e = jnp.exp(s)
    p = (e * pl.reciprocal(jnp.sum(e, axis=-1, keepdims=True), approx=True)
         ).astype(jnp.bfloat16)

    # kpts/qpts are pre-padded to 4 columns (col 3 == 0); wf is (512, 4) with only col 3
    # nonzero, so the sum below IS concat([flow_xyz, weight], -1), lane-dense.
    # bf16 x bf16 -> f32 accumulate (explicit precision, single-pass MXU).
    out = jnp.dot(p, kpts_ref[0], preferred_element_type=jnp.float32) - qpts_ref[0]

    h = q                                          # PointNet weight branch on action emb
    for (w, b) in ((w1, b1), (w2, b2), (w3, b3), (w4, b4), (w5, b5)):
        h = jnp.maximum(jnp.dot(h, w[...], preferred_element_type=jnp.float32)
                        + b[...], 0.0).astype(jnp.bfloat16)
    out = out + jnp.dot(h, wf_ref[...], preferred_element_type=jnp.float32)
    o_ref[0] = out.astype(o_ref.dtype)


def corr_mlp_head(q_emb, k_emb, q_pts4, k_pts4, head_params, *, nb_valid, ta_pref=256):
    """CorrespondenceMLPHead; returns (B, Na_pad, 4) = [flow_xyz, weight]."""
    layers, wf4 = head_params
    B, Na_p, E = q_emb.shape
    Nb_p = k_emb.shape[1]
    ta = _pick_tile(Na_p, ta_pref)
    if ta > 128 and Na_p % 128 == 0 and B * (Na_p // ta) < 4:
        ta = 128                                   # keep both v7x TensorCores busy
    scale = 1.0 / math.sqrt(E)
    # TODO(synk): for very large Nb, tile the anchor axis with a flash-style online-softmax
    # accumulator instead of holding the full (ta, Nb) score block.
    wargs, wspecs = [], []
    for (w, b) in layers:
        wargs += [w, b]
        wspecs += [pl.BlockSpec(w.shape, lambda bb, i: (0, 0)),
                   pl.BlockSpec(b.shape, lambda bb, i: (0, 0))]
    wargs.append(wf4)
    wspecs.append(pl.BlockSpec(wf4.shape, lambda bb, i: (0, 0)))

    cp = _compiler_params(("parallel", "parallel"), _head_vmem_bytes(ta, Nb_p, E))
    return pl.pallas_call(
        functools.partial(_head_kernel, scale=scale, nb_valid=nb_valid, nb_total=Nb_p),
        out_shape=jax.ShapeDtypeStruct((B, Na_p, 4), jnp.float32),
        grid=(B, Na_p // ta),
        in_specs=[pl.BlockSpec((1, ta, E), lambda bb, i: (bb, i, 0)),
                  pl.BlockSpec((1, Nb_p, E), lambda bb, i: (bb, 0, 0)),
                  pl.BlockSpec((1, Nb_p, 4), lambda bb, i: (bb, 0, 0)),
                  pl.BlockSpec((1, ta, 4), lambda bb, i: (bb, i, 0))] + wspecs,
        out_specs=pl.BlockSpec((1, ta, 4), lambda bb, i: (bb, i, 0)),
        compiler_params=cp,
    )(q_emb, k_emb, k_pts4, q_pts4, *wargs)


# ----------------------------- parameters -----------------------------

def _init_w(key, cin, cout):
    return jax.random.normal(key, (cin, cout), jnp.float32) / jnp.sqrt(float(cin))


def _init_bn(key, c):
    k1, k2, k3 = jax.random.split(key, 3)
    gamma = 1.0 + 0.1 * jax.random.normal(k1, (c,), jnp.float32)
    beta = 0.1 * jax.random.normal(k2, (c,), jnp.float32)
    mean = 0.1 * jax.random.normal(k3, (c,), jnp.float32)
    var = jnp.ones((c,), jnp.float32)
    return gamma, beta, mean, var


def _fold_bn_f32(w, gamma, beta, mean, var, eps=1e-5):
    # bias-free conv + eval-mode BatchNorm folds into (W*scale, shift); kept f32, cast later
    scale = gamma / jnp.sqrt(var + eps)
    return w * scale[None, :], (beta - mean * scale).reshape(1, -1)


def _pad_wb(w, b, pin, pout):
    """Zero-pad (w:(cin,cout) f32, b:(1,cout) f32) to (pin,pout); cast w to bf16."""
    cin, cout = w.shape
    wp = jnp.zeros((pin, pout), jnp.float32).at[:cin, :cout].set(w)
    bp = jnp.zeros((1, pout), jnp.float32).at[:, :cout].set(b)
    return wp.astype(jnp.bfloat16), bp


def init_dgcnn(key, emb):
    dims = [(6, 64), (64, 64), (64, 128), (128, 256), (512, emb)]
    layers = []
    for cin, cout in dims:
        key, k1, k2 = jax.random.split(key, 3)
        w, b = _fold_bn_f32(_init_w(k1, cin, cout), *_init_bn(k2, cout))
        layers.append((w.astype(jnp.bfloat16), b))
    return layers


def init_mlp(key, emb):
    # logical dims emb -> 250 -> 100 -> emb, zero-padded to emb -> 256 -> 128 -> emb
    k1, k2, k3, kb1, kb2, kb3 = jax.random.split(key, 6)
    w1 = _init_w(k1, emb, 250); b1 = 0.1 * jax.random.normal(kb1, (1, 250), jnp.float32)
    w2 = _init_w(k2, 250, 100); b2 = 0.1 * jax.random.normal(kb2, (1, 100), jnp.float32)
    w3 = _init_w(k3, 100, emb); b3 = 0.1 * jax.random.normal(kb3, (1, emb), jnp.float32)
    return [_pad_wb(w1, b1, emb, 256),
            _pad_wb(w2, b2, 256, 128),
            _pad_wb(w3, b3, 128, emb)]


def init_head(key, emb):
    # PointNet [emb, 64, 64, 64, 128, 512]; 64-wide hiddens zero-padded to 128 lanes
    logical = [(emb, 64), (64, 64), (64, 64), (64, 128), (128, 512)]
    padded = [(emb, 128), (128, 128), (128, 128), (128, 128), (128, 512)]
    layers = []
    for (cin, cout), (pin, pout) in zip(logical, padded):
        key, k1, k2 = jax.random.split(key, 3)
        w, b = _fold_bn_f32(_init_w(k1, cin, cout), *_init_bn(k2, cout))
        layers.append(_pad_wb(w, b, pin, pout))
    key, k1 = jax.random.split(key)
    w_final = _init_w(k1, 512, 1)                   # Conv1d(512, 1, bias=False)
    wf4 = jnp.zeros((512, 4), jnp.float32).at[:, 3:4].set(w_final).astype(jnp.bfloat16)
    return layers, wf4


# ----------------------------- full forward -----------------------------

def correspondence_flow_diff_emb_mlp(points_action, points_anchor, params, *,
                                     k, cycle=True, center_feature=True):
    # points_*: (B, N, D>=3).  Output (B, N, 4) == PyTorch output after permute(0, 2, 1).
    act_pts = points_action[..., :3].astype(jnp.float32)
    anc_pts = points_anchor[..., :3].astype(jnp.float32)
    B, Na, _ = act_pts.shape
    Nb = anc_pts.shape[1]
    if center_feature:
        act_dm = act_pts - jnp.mean(act_pts, axis=1, keepdims=True)
        anc_dm = anc_pts - jnp.mean(anc_pts, axis=1, keepdims=True)
    else:
        act_dm, anc_dm = act_pts, anc_pts

    # fused DGCNN + MLP transformer + residual; bf16 embeddings, padded point rows
    act_tf, Na_p = dgcnn_mlp(act_dm, params['dgcnn_action'], params['mlp_action'], k=k)
    anc_tf, Nb_p = dgcnn_mlp(anc_dm, params['dgcnn_anchor'], params['mlp_anchor'], k=k)

    # pad points once to a lane-dense 4-wide layout (4th column zero), rows to match emb
    act4 = jnp.pad(act_pts, ((0, 0), (0, Na_p - Na), (0, 1)))
    anc4 = jnp.pad(anc_pts, ((0, 0), (0, Nb_p - Nb), (0, 1)))
    act4_bf = act4.astype(jnp.bfloat16)             # anchor-side operand of p @ kpts
    anc4_bf = anc4.astype(jnp.bfloat16)

    flow_action = corr_mlp_head(act_tf, anc_tf, act4, anc4_bf,
                                params['head_action'], nb_valid=Nb)[:, :Na]
    if cycle:
        flow_anchor = corr_mlp_head(anc_tf, act_tf, anc4, act4_bf,
                                    params['head_anchor'], nb_valid=Na)[:, :Nb]
        return flow_action, flow_anchor
    return flow_action


# ----------------------------- main -----------------------------

if __name__ == "__main__":
    EMB = 128          # emb_dims (kept small/consistent with the module)
    B, N, K = 2, 32, 8  # batch, points per cloud, knn neighbors

    key = jax.random.PRNGKey(0)
    k_in1, k_in2, kp = jax.random.split(key, 3)
    points_action = jax.random.normal(k_in1, (B, N, 3), jnp.float32)
    points_anchor = jax.random.normal(k_in2, (B, N, 3), jnp.float32)

    keys = jax.random.split(kp, 6)
    params = {
        'dgcnn_action': init_dgcnn(keys[0], EMB),
        'dgcnn_anchor': init_dgcnn(keys[1], EMB),
        'mlp_action': init_mlp(keys[2], EMB),
        'mlp_anchor': init_mlp(keys[3], EMB),
        'head_action': init_head(keys[4], EMB),
        'head_anchor': init_head(keys[5], EMB),
    }

    fwd = jax.jit(functools.partial(correspondence_flow_diff_emb_mlp,
                                    k=K, cycle=True, center_feature=True))
    flow_action, flow_anchor = fwd(points_action, points_anchor, params)
    jax.block_until_ready((flow_action, flow_anchor))

    assert flow_action.shape == (B, N, 4) and flow_anchor.shape == (B, N, 4)
    assert bool(jnp.all(jnp.isfinite(flow_action))) and bool(jnp.all(jnp.isfinite(flow_anchor)))
    print("KERNEL_OK")
</pallas_src>

<mosaic_0001>
module attributes {stable_mosaic.version = 11 : i64} {
  func.func @_dgcnn_mlp_kernel(%arg0: i32, %arg1: memref<1x256x6xbf16, #tpu.memory_space<vmem>>, %arg2: memref<6x64xbf16, #tpu.memory_space<vmem>>, %arg3: memref<1x64xf32, #tpu.memory_space<vmem>>, %arg4: memref<64x64xbf16, #tpu.memory_space<vmem>>, %arg5: memref<1x64xf32, #tpu.memory_space<vmem>>, %arg6: memref<64x128xbf16, #tpu.memory_space<vmem>>, %arg7: memref<1x128xf32, #tpu.memory_space<vmem>>, %arg8: memref<128x256xbf16, #tpu.memory_space<vmem>>, %arg9: memref<1x256xf32, #tpu.memory_space<vmem>>, %arg10: memref<512x128xbf16, #tpu.memory_space<vmem>>, %arg11: memref<1x128xf32, #tpu.memory_space<vmem>>, %arg12: memref<128x256xbf16, #tpu.memory_space<vmem>>, %arg13: memref<1x256xf32, #tpu.memory_space<vmem>>, %arg14: memref<256x128xbf16, #tpu.memory_space<vmem>>, %arg15: memref<1x128xf32, #tpu.memory_space<vmem>>, %arg16: memref<128x128xbf16, #tpu.memory_space<vmem>>, %arg17: memref<1x128xf32, #tpu.memory_space<vmem>>, %arg18: memref<1x32x128xbf16, #tpu.memory_space<vmem>>) attributes {dimension_semantics = [#tpu.dimension_semantics<parallel>], iteration_bounds = array<i64: 2>, scalar_prefetch = 0 : i64, scratch_operands = 0 : i64, tpu.core_type = #tpu.core_type<tc>, window_params = [{transform_indices = @transform_0, window_bounds = array<i64: 1, 256, 6>}, {pipeline_mode = #tpu.pipeline_mode<synchronous>, transform_indices = @transform_1, window_bounds = array<i64: 6, 64>}, {pipeline_mode = #tpu.pipeline_mode<synchronous>, transform_indices = @transform_2, window_bounds = array<i64: 1, 64>}, {pipeline_mode = #tpu.pipeline_mode<synchronous>, transform_indices = @transform_3, window_bounds = array<i64: 64, 64>}, {pipeline_mode = #tpu.pipeline_mode<synchronous>, transform_indices = @transform_4, window_bounds = array<i64: 1, 64>}, {pipeline_mode = #tpu.pipeline_mode<synchronous>, transform_indices = @transform_5, window_bounds = array<i64: 64, 128>}, {pipeline_mode = #tpu.pipeline_mode<synchronous>, transform_indices = @transform_6, window_bounds = array<i64: 1, 128>}, {pipeline_mode = #tpu.pipeline_mode<synchronous>, transform_indices = @transform_7, window_bounds = array<i64: 128, 256>}, {pipeline_mode = #tpu.pipeline_mode<synchronous>, transform_indices = @transform_8, window_bounds = array<i64: 1, 256>}, {pipeline_mode = #tpu.pipeline_mode<synchronous>, transform_indices = @transform_9, window_bounds = array<i64: 512, 128>}, {pipeline_mode = #tpu.pipeline_mode<synchronous>, transform_indices = @transform_10, window_bounds = array<i64: 1, 128>}, {pipeline_mode = #tpu.pipeline_mode<synchronous>, transform_indices = @transform_11, window_bounds = array<i64: 128, 256>}, {pipeline_mode = #tpu.pipeline_mode<synchronous>, transform_indices = @transform_12, window_bounds = array<i64: 1, 256>}, {pipeline_mode = #tpu.pipeline_mode<synchronous>, transform_indices = @transform_13, window_bounds = array<i64: 256, 128>}, {pipeline_mode = #tpu.pipeline_mode<synchronous>, transform_indices = @transform_14, window_bounds = array<i64: 1, 128>}, {pipeline_mode = #tpu.pipeline_mode<synchronous>, transform_indices = @transform_15, window_bounds = array<i64: 128, 128>}, {pipeline_mode = #tpu.pipeline_mode<synchronous>, transform_indices = @transform_16, window_bounds = array<i64: 1, 128>}, {transform_indices = @transform_17, window_bounds = array<i64: 1, 32, 128>}]} {
    %c0 = arith.constant 0 : index
    %c0_0 = arith.constant 0 : index
    %c0_1 = arith.constant 0 : index
    %0 = vector.load %arg1[%c0, %c0_0, %c0_1] : memref<1x256x6xbf16, #tpu.memory_space<vmem>>, vector<1x256x6xbf16>
    %1 = vector.shape_cast %0 : vector<1x256x6xbf16> to vector<256x6xbf16>
    %c0_2 = arith.constant 0 : index
    %c0_3 = arith.constant 0 : index
    %2 = vector.load %arg2[%c0_2, %c0_3] : memref<6x64xbf16, #tpu.memory_space<vmem>>, vector<6x64xbf16>
    %cst = arith.constant dense<0.000000e+00> : vector<256x64xf32>
    %3 = tpu.matmul %1, %2, %cst {dimension_numbers = #tpu.dot_dimension_numbers<[1], [0], [0], [1], [0, 0, 1, 1], [], []>} : vector<256x6xbf16>, vector<6x64xbf16>, vector<256x64xf32> -> vector<256x64xf32>
    %c0_4 = arith.constant 0 : index
    %c0_5 = arith.constant 0 : index
    %4 = vector.load %arg3[%c0_4, %c0_5] : memref<1x64xf32, #tpu.memory_space<vmem>>, vector<1x64xf32>
    %5 = vector.broadcast %4 : vector<1x64xf32> to vector<256x64xf32>
    %6 = arith.addf %3, %5 : vector<256x64xf32>
    %cst_6 = arith.constant 0.000000e+00 : f32
    %7 = vector.broadcast %cst_6 : f32 to vector<256x64xf32>
    %8 = arith.maximumf %6, %7 : vector<256x64xf32>
    %9 = vector.extract_strided_slice %8 {offsets = [0, 0], sizes = [32, 64], strides = [1, 1]} : vector<256x64xf32> to vector<32x64xf32>
    %10 = vector.extract_strided_slice %8 {offsets = [32, 0], sizes = [32, 64], strides = [1, 1]} : vector<256x64xf32> to vector<32x64xf32>
    %11 = arith.maximumf %9, %10 : vector<32x64xf32>
    %12 = vector.extract_strided_slice %8 {offsets = [64, 0], sizes = [32, 64], strides = [1, 1]} : vector<256x64xf32> to vector<32x64xf32>
    %13 = arith.maximumf %11, %12 : vector<32x64xf32>
    %14 = vector.extract_strided_slice %8 {offsets = [96, 0], sizes = [32, 64], strides = [1, 1]} : vector<256x64xf32> to vector<32x64xf32>
    %15 = arith.maximumf %13, %14 : vector<32x64xf32>
    %16 = vector.extract_strided_slice %8 {offsets = [128, 0], sizes = [32, 64], strides = [1, 1]} : vector<256x64xf32> to vector<32x64xf32>
    %17 = arith.maximumf %15, %16 : vector<32x64xf32>
    %18 = vector.extract_strided_slice %8 {offsets = [160, 0], sizes = [32, 64], strides = [1, 1]} : vector<256x64xf32> to vector<32x64xf32>
    %19 = arith.maximumf %17, %18 : vector<32x64xf32>
    %20 = vector.extract_strided_slice %8 {offsets = [192, 0], sizes = [32, 64], strides = [1, 1]} : vector<256x64xf32> to vector<32x64xf32>
    %21 = arith.maximumf %19, %20 : vector<32x64xf32>
    %22 = vector.extract_strided_slice %8 {offsets = [224, 0], sizes = [32, 64], strides = [1, 1]} : vector<256x64xf32> to vector<32x64xf32>
    %23 = arith.maximumf %21, %22 : vector<32x64xf32>
    %24 = arith.truncf %8 : vector<256x64xf32> to vector<256x64xbf16>
    %c0_7 = arith.constant 0 : index
    %c0_8 = arith.constant 0 : index
    %25 = vector.load %arg4[%c0_7, %c0_8] : memref<64x64xbf16, #tpu.memory_space<vmem>>, vector<64x64xbf16>
    %cst_9 = arith.constant dense<0.000000e+00> : vector<256x64xf32>
    %26 = tpu.matmul %24, %25, %cst_9 {dimension_numbers = #tpu.dot_dimension_numbers<[1], [0], [0], [1], [0, 0, 1, 1], [], []>} : vector<256x64xbf16>, vector<64x64xbf16>, vector<256x64xf32> -> vector<256x64xf32>
    %c0_10 = arith.constant 0 : index
    %c0_11 = arith.constant 0 : index
    %27 = vector.load %arg5[%c0_10, %c0_11] : memref<1x64xf32, #tpu.memory_space<vmem>>, vector<1x64xf32>
    %28 = vector.broadcast %27 : vector<1x64xf32> to vector<256x64xf32>
    %29 = arith.addf %26, %28 : vector<256x64xf32>
    %cst_12 = arith.constant 0.000000e+00 : f32
    %30 = vector.broadcast %cst_12 : f32 to vector<256x64xf32>
    %31 = arith.maximumf %29, %30 : vector<256x64xf32>
    %32 = vector.extract_strided_slice %31 {offsets = [0, 0], sizes = [32, 64], strides = [1, 1]} : vector<256x64xf32> to vector<32x64xf32>
    %33 = vector.extract_strided_slice %31 {offsets = [32, 0], sizes = [32, 64], strides = [1, 1]} : vector<256x64xf32> to vector<32x64xf32>
    %34 = arith.maximumf %32, %33 : vector<32x64xf32>
    %35 = vector.extract_strided_slice %31 {offsets = [64, 0], sizes = [32, 64], strides = [1, 1]} : vector<256x64xf32> to vector<32x64xf32>
    %36 = arith.maximumf %34, %35 : vector<32x64xf32>
    %37 = vector.extract_strided_slice %31 {offsets = [96, 0], sizes = [32, 64], strides = [1, 1]} : vector<256x64xf32> to vector<32x64xf32>
    %38 = arith.maximumf %36, %37 : vector<32x64xf32>
    %39 = vector.extract_strided_slice %31 {offsets = [128, 0], sizes = [32, 64], strides = [1, 1]} : vector<256x64xf32> to vector<32x64xf32>
    %40 = arith.maximumf %38, %39 : vector<32x64xf32>
    %41 = vector.extract_strided_slice %31 {offsets = [160, 0], sizes = [32, 64], strides = [1, 1]} : vector<256x64xf32> to vector<32x64xf32>
    %42 = arith.maximumf %40, %41 : vector<32x64xf32>
    %43 = vector.extract_strided_slice %31 {offsets = [192, 0], sizes = [32, 64], strides = [1, 1]} : vector<256x64xf32> to vector<32x64xf32>
    %44 = arith.maximumf %42, %43 : vector<32x64xf32>
    %45 = vector.extract_strided_slice %31 {offsets = [224, 0], sizes = [32, 64], strides = [1, 1]} : vector<256x64xf32> to vector<32x64xf32>
    %46 = arith.maximumf %44, %45 : vector<32x64xf32>
    %47 = arith.truncf %31 : vector<256x64xf32> to vector<256x64xbf16>
    %c0_13 = arith.constant 0 : index
    %c0_14 = arith.constant 0 : index
    %48 = vector.load %arg6[%c0_13, %c0_14] : memref<64x128xbf16, #tpu.memory_space<vmem>>, vector<64x128xbf16>
    %cst_15 = arith.constant dense<0.000000e+00> : vector<256x128xf32>
    %49 = tpu.matmul %47, %48, %cst_15 {dimension_numbers = #tpu.dot_dimension_numbers<[1], [0], [0], [1], [0, 0, 1, 1], [], []>} : vector<256x64xbf16>, vector<64x128xbf16>, vector<256x128xf32> -> vector<256x128xf32>
    %c0_16 = arith.constant 0 : index
    %c0_17 = arith.constant 0 : index
    %50 = vector.load %arg7[%c0_16, %c0_17] : memref<1x128xf32, #tpu.memory_space<vmem>>, vector<1x128xf32>
    %51 = vector.broadcast %50 : vector<1x128xf32> to vector<256x128xf32>
    %52 = arith.addf %49, %51 : vector<256x128xf32>
    %cst_18 = arith.constant 0.000000e+00 : f32
    %53 = vector.broadcast %cst_18 : f32 to vector<256x128xf32>
    %54 = arith.maximumf %52, %53 : vector<256x128xf32>
    %55 = vector.extract_strided_slice %54 {offsets = [0, 0], sizes = [32, 128], strides = [1, 1]} : vector<256x128xf32> to vector<32x128xf32>
    %56 = vector.extract_strided_slice %54 {offsets = [32, 0], sizes = [32, 128], strides = [1, 1]} : vector<256x128xf32> to vector<32x128xf32>
    %57 = arith.maximumf %55, %56 : vector<32x128xf32>
    %58 = vector.extract_strided_slice %54 {offsets = [64, 0], sizes = [32, 128], strides = [1, 1]} : vector<256x128xf32> to vector<32x128xf32>
    %59 = arith.maximumf %57, %58 : vector<32x128xf32>
    %60 = vector.extract_strided_slice %54 {offsets = [96, 0], sizes = [32, 128], strides = [1, 1]} : vector<256x128xf32> to vector<32x128xf32>
    %61 = arith.maximumf %59, %60 : vector<32x128xf32>
    %62 = vector.extract_strided_slice %54 {offsets = [128, 0], sizes = [32, 128], strides = [1, 1]} : vector<256x128xf32> to vector<32x128xf32>
    %63 = arith.maximumf %61, %62 : vector<32x128xf32>
    %64 = vector.extract_strided_slice %54 {offsets = [160, 0], sizes = [32, 128], strides = [1, 1]} : vector<256x128xf32> to vector<32x128xf32>
    %65 = arith.maximumf %63, %64 : vector<32x128xf32>
    %66 = vector.extract_strided_slice %54 {offsets = [192, 0], sizes = [32, 128], strides = [1, 1]} : vector<256x128xf32> to vector<32x128xf32>
    %67 = arith.maximumf %65, %66 : vector<32x128xf32>
    %68 = vector.extract_strided_slice %54 {offsets = [224, 0], sizes = [32, 128], strides = [1, 1]} : vector<256x128xf32> to vector<32x128xf32>
    %69 = arith.maximumf %67, %68 : vector<32x128xf32>
    %70 = arith.truncf %54 : vector<256x128xf32> to vector<256x128xbf16>
    %c0_19 = arith.constant 0 : index
    %c0_20 = arith.constant 0 : index
    %71 = vector.load %arg8[%c0_19, %c0_20] : memref<128x256xbf16, #tpu.memory_space<vmem>>, vector<128x256xbf16>
    %cst_21 = arith.constant dense<0.000000e+00> : vector<256x256xf32>
    %72 = tpu.matmul %70, %71, %cst_21 {dimension_numbers = #tpu.dot_dimension_numbers<[1], [0], [0], [1], [0, 0, 1, 1], [], []>} : vector<256x128xbf16>, vector<128x256xbf16>, vector<256x256xf32> -> vector<256x256xf32>
    %c0_22 = arith.constant 0 : index
    %c0_23 = arith.constant 0 : index
    %73 = vector.load %arg9[%c0_22, %c0_23] : memref<1x256xf32, #tpu.memory_space<vmem>>, vector<1x256xf32>
    %74 = vector.broadcast %73 : vector<1x256xf32> to vector<256x256xf32>
    %75 = arith.addf %72, %74 : vector<256x256xf32>
    %cst_24 = arith.constant 0.000000e+00 : f32
    %76 = vector.broadcast %cst_24 : f32 to vector<256x256xf32>
    %77 = arith.maximumf %75, %76 : vector<256x256xf32>
    %78 = vector.extract_strided_slice %77 {offsets = [0, 0], sizes = [32, 256], strides = [1, 1]} : vector<256x256xf32> to vector<32x256xf32>
    %79 = vector.extract_strided_slice %77 {offsets = [32, 0], sizes = [32, 256], strides = [1, 1]} : vector<256x256xf32> to vector<32x256xf32>
    %80 = arith.maximumf %78, %79 : vector<32x256xf32>
    %81 = vector.extract_strided_slice %77 {offsets = [64, 0], sizes = [32, 256], strides = [1, 1]} : vector<256x256xf32> to vector<32x256xf32>
    %82 = arith.maximumf %80, %81 : vector<32x256xf32>
    %83 = vector.extract_strided_slice %77 {offsets = [96, 0], sizes = [32, 256], strides = [1, 1]} : vector<256x256xf32> to vector<32x256xf32>
    %84 = arith.maximumf %82, %83 : vector<32x256xf32>
    %85 = vector.extract_strided_slice %77 {offsets = [128, 0], sizes = [32, 256], strides = [1, 1]} : vector<256x256xf32> to vector<32x256xf32>
    %86 = arith.maximumf %84, %85 : vector<32x256xf32>
    %87 = vector.extract_strided_slice %77 {offsets = [160, 0], sizes = [32, 256], strides = [1, 1]} : vector<256x256xf32> to vector<32x256xf32>
    %88 = arith.maximumf %86, %87 : vector<32x256xf32>
    %89 = vector.extract_strided_slice %77 {offsets = [192, 0], sizes = [32, 256], strides = [1, 1]} : vector<256x256xf32> to vector<32x256xf32>
    %90 = arith.maximumf %88, %89 : vector<32x256xf32>
    %91 = vector.extract_strided_slice %77 {offsets = [224, 0], sizes = [32, 256], strides = [1, 1]} : vector<256x256xf32> to vector<32x256xf32>
    %92 = arith.maximumf %90, %91 : vector<32x256xf32>
    %93 = arith.truncf %23 : vector<32x64xf32> to vector<32x64xbf16>
    %c0_25 = arith.constant 0 : index
    %c0_26 = arith.constant 0 : index
    %94 = vector.load %arg10[%c0_25, %c0_26] : memref<512x128xbf16, #tpu.memory_space<vmem>>, vector<64x128xbf16>
    %cst_27 = arith.constant dense<0.000000e+00> : vector<32x128xf32>
    %95 = tpu.matmul %93, %94, %cst_27 {dimension_numbers = #tpu.dot_dimension_numbers<[1], [0], [0], [1], [0, 0, 1, 1], [], []>} : vector<32x64xbf16>, vector<64x128xbf16>, vector<32x128xf32> -> vector<32x128xf32>
    %96 = arith.truncf %46 : vector<32x64xf32> to vector<32x64xbf16>
    %c64 = arith.constant 64 : index
    %c0_28 = arith.constant 0 : index
    %97 = vector.load %arg10[%c64, %c0_28] : memref<512x128xbf16, #tpu.memory_space<vmem>>, vector<64x128xbf16>
    %cst_29 = arith.constant dense<0.000000e+00> : vector<32x128xf32>
    %98 = tpu.matmul %96, %97, %cst_29 {dimension_numbers = #tpu.dot_dimension_numbers<[1], [0], [0], [1], [0, 0, 1, 1], [], []>} : vector<32x64xbf16>, vector<64x128xbf16>, vector<32x128xf32> -> vector<32x128xf32>
    %99 = arith.addf %95, %98 : vector<32x128xf32>
    %100 = arith.truncf %69 : vector<32x128xf32> to vector<32x128xbf16>
    %c128 = arith.constant 128 : index
    %c0_30 = arith.constant 0 : index
    %101 = vector.load %arg10[%c128, %c0_30] : memref<512x128xbf16, #tpu.memory_space<vmem>>, vector<128x128xbf16>
    %cst_31 = arith.constant dense<0.000000e+00> : vector<32x128xf32>
    %102 = tpu.matmul %100, %101, %cst_31 {dimension_numbers = #tpu.dot_dimension_numbers<[1], [0], [0], [1], [0, 0, 1, 1], [], []>} : vector<32x128xbf16>, vector<128x128xbf16>, vector<32x128xf32> -> vector<32x128xf32>
    %103 = arith.addf %99, %102 : vector<32x128xf32>
    %104 = arith.truncf %92 : vector<32x256xf32> to vector<32x256xbf16>
    %c256 = arith.constant 256 : index
    %c0_32 = arith.constant 0 : index
    %105 = vector.load %arg10[%c256, %c0_32] : memref<512x128xbf16, #tpu.memory_space<vmem>>, vector<256x128xbf16>
    %cst_33 = arith.constant dense<0.000000e+00> : vector<32x128xf32>
    %106 = tpu.matmul %104, %105, %cst_33 {dimension_numbers = #tpu.dot_dimension_numbers<[1], [0], [0], [1], [0, 0, 1, 1], [], []>} : vector<32x256xbf16>, vector<256x128xbf16>, vector<32x128xf32> -> vector<32x128xf32>
    %107 = arith.addf %103, %106 : vector<32x128xf32>
    %c0_34 = arith.constant 0 : index
    %c0_35 = arith.constant 0 : index
    %108 = vector.load %arg11[%c0_34, %c0_35] : memref<1x128xf32, #tpu.memory_space<vmem>>, vector<1x128xf32>
    %109 = vector.broadcast %108 : vector<1x128xf32> to vector<32x128xf32>
    %110 = arith.addf %107, %109 : vector<32x128xf32>
    %cst_36 = arith.constant 0.000000e+00 : f32
    %111 = vector.broadcast %cst_36 : f32 to vector<32x128xf32>
    %112 = arith.maximumf %110, %111 : vector<32x128xf32>
    %113 = arith.truncf %112 : vector<32x128xf32> to vector<32x128xbf16>
    %c0_37 = arith.constant 0 : index
    %c0_38 = arith.constant 0 : index
    %114 = vector.load %arg12[%c0_37, %c0_38] : memref<128x256xbf16, #tpu.memory_space<vmem>>, vector<128x256xbf16>
    %cst_39 = arith.constant dense<0.000000e+00> : vector<32x256xf32>
    %115 = tpu.matmul %113, %114, %cst_39 {dimension_numbers = #tpu.dot_dimension_numbers<[1], [0], [0], [1], [0, 0, 1, 1], [], []>} : vector<32x128xbf16>, vector<128x256xbf16>, vector<32x256xf32> -> vector<32x256xf32>
    %c0_40 = arith.constant 0 : index
    %c0_41 = arith.constant 0 : index
    %116 = vector.load %arg13[%c0_40, %c0_41] : memref<1x256xf32, #tpu.memory_space<vmem>>, vector<1x256xf32>
    %117 = vector.broadcast %116 : vector<1x256xf32> to vector<32x256xf32>
    %118 = arith.addf %115, %117 : vector<32x256xf32>
    %cst_42 = arith.constant 0.000000e+00 : f32
    %119 = vector.broadcast %cst_42 : f32 to vector<32x256xf32>
    %120 = arith.maximumf %118, %119 : vector<32x256xf32>
    %121 = arith.truncf %120 : vector<32x256xf32> to vector<32x256xbf16>
    %c0_43 = arith.constant 0 : index
    %c0_44 = arith.constant 0 : index
    %122 = vector.load %arg14[%c0_43, %c0_44] : memref<256x128xbf16, #tpu.memory_space<vmem>>, vector<256x128xbf16>
    %cst_45 = arith.constant dense<0.000000e+00> : vector<32x128xf32>
    %123 = tpu.matmul %121, %122, %cst_45 {dimension_numbers = #tpu.dot_dimension_numbers<[1], [0], [0], [1], [0, 0, 1, 1], [], []>} : vector<32x256xbf16>, vector<256x128xbf16>, vector<32x128xf32> -> vector<32x128xf32>
    %c0_46 = arith.constant 0 : index
    %c0_47 = arith.constant 0 : index
    %124 = vector.load %arg15[%c0_46, %c0_47] : memref<1x128xf32, #tpu.memory_space<vmem>>, vector<1x128xf32>
    %125 = vector.broadcast %124 : vector<1x128xf32> to vector<32x128xf32>
    %126 = arith.addf %123, %125 : vector<32x128xf32>
    %cst_48 = arith.constant 0.000000e+00 : f32
    %127 = vector.broadcast %cst_48 : f32 to vector<32x128xf32>
    %128 = arith.maximumf %126, %127 : vector<32x128xf32>
    %129 = arith.truncf %128 : vector<32x128xf32> to vector<32x128xbf16>
    %c0_49 = arith.constant 0 : index
    %c0_50 = arith.constant 0 : index
    %130 = vector.load %arg16[%c0_49, %c0_50] : memref<128x128xbf16, #tpu.memory_space<vmem>>, vector<128x128xbf16>
    %cst_51 = arith.constant dense<0.000000e+00> : vector<32x128xf32>
    %131 = tpu.matmul %129, %130, %cst_51 {dimension_numbers = #tpu.dot_dimension_numbers<[1], [0], [0], [1], [0, 0, 1, 1], [], []>} : vector<32x128xbf16>, vector<128x128xbf16>, vector<32x128xf32> -> vector<32x128xf32>
    %c0_52 = arith.constant 0 : index
    %c0_53 = arith.constant 0 : index
    %132 = vector.load %arg17[%c0_52, %c0_53] : memref<1x128xf32, #tpu.memory_space<vmem>>, vector<1x128xf32>
    %133 = vector.broadcast %132 : vector<1x128xf32> to vector<32x128xf32>
    %134 = arith.addf %131, %133 : vector<32x128xf32>
    %135 = arith.addf %112, %134 : vector<32x128xf32>
    %136 = arith.truncf %135 : vector<32x128xf32> to vector<32x128xbf16>
    %c0_54 = arith.constant 0 : index
    %c0_55 = arith.constant 0 : index
    %c0_56 = arith.constant 0 : index
    %137 = vector.load %arg18[%c0_54, %c0_55, %c0_56] : memref<1x32x128xbf16, #tpu.memory_space<vmem>>, vector<1x32x128xbf16>
    %138 = vector.shape_cast %137 : vector<1x32x128xbf16> to vector<32x128xbf16>
    %139 = vector.shape_cast %136 : vector<32x128xbf16> to vector<1x32x128xbf16>
    tpu.vector_store %arg18[%c0_54, %c0_55, %c0_56], %139 {strides = array<i32>} : memref<1x32x128xbf16, #tpu.memory_space<vmem>>, vector<1x32x128xbf16>,
    return
  }
  func.func @transform_0(%arg0: i32) -> (i32, i32, i32) {
    %c0_i32 = arith.constant 0 : i32
    %c0_i32_0 = arith.constant 0 : i32
    %c0_i32_1 = arith.constant 0 : i32
    return %arg0, %c0_i32, %c0_i32_0 : i32, i32, i32
  }
  func.func @transform_1(%arg0: i32) -> (i32, i32) {
    %c0_i32 = arith.constant 0 : i32
    %c0_i32_0 = arith.constant 0 : i32
    %c0_i32_1 = arith.constant 0 : i32
    return %c0_i32, %c0_i32_0 : i32, i32
  }
  func.func @transform_2(%arg0: i32) -> (i32, i32) {
    %c0_i32 = arith.constant 0 : i32
    %c0_i32_0 = arith.constant 0 : i32
    %c0_i32_1 = arith.constant 0 : i32
    return %c0_i32, %c0_i32_0 : i32, i32
  }
  func.func @transform_3(%arg0: i32) -> (i32, i32) {
    %c0_i32 = arith.constant 0 : i32
    %c0_i32_0 = arith.constant 0 : i32
    %c0_i32_1 = arith.constant 0 : i32
    return %c0_i32, %c0_i32_0 : i32, i32
  }
  func.func @transform_4(%arg0: i32) -> (i32, i32) {
    %c0_i32 = arith.constant 0 : i32
    %c0_i32_0 = arith.constant 0 : i32
    %c0_i32_1 = arith.constant 0 : i32
    return %c0_i32, %c0_i32_0 : i32, i32
  }
  func.func @transform_5(%arg0: i32) -> (i32, i32) {
    %c0_i32 = arith.constant 0 : i32
    %c0_i32_0 = arith.constant 0 : i32
    %c0_i32_1 = arith.constant 0 : i32
    return %c0_i32, %c0_i32_0 : i32, i32
  }
  func.func @transform_6(%arg0: i32) -> (i32, i32) {
    %c0_i32 = arith.constant 0 : i32
    %c0_i32_0 = arith.constant 0 : i32
    %c0_i32_1 = arith.constant 0 : i32
    return %c0_i32, %c0_i32_0 : i32, i32
  }
  func.func @transform_7(%arg0: i32) -> (i32, i32) {
    %c0_i32 = arith.constant 0 : i32
    %c0_i32_0 = arith.constant 0 : i32
    %c0_i32_1 = arith.constant 0 : i32
    return %c0_i32, %c0_i32_0 : i32, i32
  }
  func.func @transform_8(%arg0: i32) -> (i32, i32) {
    %c0_i32 = arith.constant 0 : i32
    %c0_i32_0 = arith.constant 0 : i32
    %c0_i32_1 = arith.constant 0 : i32
    return %c0_i32, %c0_i32_0 : i32, i32
  }
  func.func @transform_9(%arg0: i32) -> (i32, i32) {
    %c0_i32 = arith.constant 0 : i32
    %c0_i32_0 = arith.constant 0 : i32
    %c0_i32_1 = arith.constant 0 : i32
    return %c0_i32, %c0_i32_0 : i32, i32
  }
  func.func @transform_10(%arg0: i32) -> (i32, i32) {
    %c0_i32 = arith.constant 0 : i32
    %c0_i32_0 = arith.constant 0 : i32
    %c0_i32_1 = arith.constant 0 : i32
    return %c0_i32, %c0_i32_0 : i32, i32
  }
  func.func @transform_11(%arg0: i32) -> (i32, i32) {
    %c0_i32 = arith.constant 0 : i32
    %c0_i32_0 = arith.constant 0 : i32
    %c0_i32_1 = arith.constant 0 : i32
    return %c0_i32, %c0_i32_0 : i32, i32
  }
  func.func @transform_12(%arg0: i32) -> (i32, i32) {
    %c0_i32 = arith.constant 0 : i32
    %c0_i32_0 = arith.constant 0 : i32
    %c0_i32_1 = arith.constant 0 : i32
    return %c0_i32, %c0_i32_0 : i32, i32
  }
  func.func @transform_13(%arg0: i32) -> (i32, i32) {
    %c0_i32 = arith.constant 0 : i32
    %c0_i32_0 = arith.constant 0 : i32
    %c0_i32_1 = arith.constant 0 : i32
    return %c0_i32, %c0_i32_0 : i32, i32
  }
  func.func @transform_14(%arg0: i32) -> (i32, i32) {
    %c0_i32 = arith.constant 0 : i32
    %c0_i32_0 = arith.constant 0 : i32
    %c0_i32_1 = arith.constant 0 : i32
    return %c0_i32, %c0_i32_0 : i32, i32
  }
  func.func @transform_15(%arg0: i32) -> (i32, i32) {
    %c0_i32 = arith.constant 0 : i32
    %c0_i32_0 = arith.constant 0 : i32
    %c0_i32_1 = arith.constant 0 : i32
    return %c0_i32, %c0_i32_0 : i32, i32
  }
  func.func @transform_16(%arg0: i32) -> (i32, i32) {
    %c0_i32 = arith.constant 0 : i32
    %c0_i32_0 = arith.constant 0 : i32
    %c0_i32_1 = arith.constant 0 : i32
    return %c0_i32, %c0_i32_0 : i32, i32
  }
  func.func @transform_17(%arg0: i32) -> (i32, i32, i32) {
    %c0_i32 = arith.constant 0 : i32
    %c0_i32_0 = arith.constant 0 : i32
    %c0_i32_1 = arith.constant 0 : i32
    return %arg0, %c0_i32, %c0_i32_0 : i32, i32, i32
  }
}

module attributes {stable_mosaic.version = 11 : i64} {
  func.func @_head_kernel(%arg0: i32, %arg1: i32, %arg2: memref<1x32x128xbf16, #tpu.memory_space<vmem>>, %arg3: memref<1x32x128xbf16, #tpu.memory_space<vmem>>, %arg4: memref<1x32x4xbf16, #tpu.memory_space<vmem>>, %arg5: memref<1x32x4xf32, #tpu.memory_space<vmem>>, %arg6: memref<128x128xbf16, #tpu.memory_space<vmem>>, %arg7: memref<1x128xf32, #tpu.memory_space<vmem>>, %arg8: memref<128x128xbf16, #tpu.memory_space<vmem>>, %arg9: memref<1x128xf32, #tpu.memory_space<vmem>>, %arg10: memref<128x128xbf16, #tpu.memory_space<vmem>>, %arg11: memref<1x128xf32, #tpu.memory_space<vmem>>, %arg12: memref<128x128xbf16, #tpu.memory_space<vmem>>, %arg13: memref<1x128xf32, #tpu.memory_space<vmem>>, %arg14: memref<128x512xbf16, #tpu.memory_space<vmem>>, %arg15: memref<1x512xf32, #tpu.memory_space<vmem>>, %arg16: memref<512x4xbf16, #tpu.memory_space<vmem>>, %arg17: memref<1x32x4xf32, #tpu.memory_space<vmem>>) attributes {dimension_semantics = [#tpu.dimension_semantics<parallel>, #tpu.dimension_semantics<parallel>], iteration_bounds = array<i64: 2, 1>, scalar_prefetch = 0 : i64, scratch_operands = 0 : i64, tpu.core_type = #tpu.core_type<tc>, window_params = [{transform_indices = @transform_0, window_bounds = array<i64: 1, 32, 128>}, {transform_indices = @transform_1, window_bounds = array<i64: 1, 32, 128>}, {transform_indices = @transform_2, window_bounds = array<i64: 1, 32, 4>}, {transform_indices = @transform_3, window_bounds = array<i64: 1, 32, 4>}, {pipeline_mode = #tpu.pipeline_mode<synchronous>, transform_indices = @transform_4, window_bounds = array<i64: 128, 128>}, {pipeline_mode = #tpu.pipeline_mode<synchronous>, transform_indices = @transform_5, window_bounds = array<i64: 1, 128>}, {pipeline_mode = #tpu.pipeline_mode<synchronous>, transform_indices = @transform_6, window_bounds = array<i64: 128, 128>}, {pipeline_mode = #tpu.pipeline_mode<synchronous>, transform_indices = @transform_7, window_bounds = array<i64: 1, 128>}, {pipeline_mode = #tpu.pipeline_mode<synchronous>, transform_indices = @transform_8, window_bounds = array<i64: 128, 128>}, {pipeline_mode = #tpu.pipeline_mode<synchronous>, transform_indices = @transform_9, window_bounds = array<i64: 1, 128>}, {pipeline_mode = #tpu.pipeline_mode<synchronous>, transform_indices = @transform_10, window_bounds = array<i64: 128, 128>}, {pipeline_mode = #tpu.pipeline_mode<synchronous>, transform_indices = @transform_11, window_bounds = array<i64: 1, 128>}, {pipeline_mode = #tpu.pipeline_mode<synchronous>, transform_indices = @transform_12, window_bounds = array<i64: 128, 512>}, {pipeline_mode = #tpu.pipeline_mode<synchronous>, transform_indices = @transform_13, window_bounds = array<i64: 1, 512>}, {pipeline_mode = #tpu.pipeline_mode<synchronous>, transform_indices = @transform_14, window_bounds = array<i64: 512, 4>}, {transform_indices = @transform_15, window_bounds = array<i64: 1, 32, 4>}]} {
    %c0 = arith.constant 0 : index
    %c0_0 = arith.constant 0 : index
    %c0_1 = arith.constant 0 : index
    %0 = vector.load %arg2[%c0, %c0_0, %c0_1] : memref<1x32x128xbf16, #tpu.memory_space<vmem>>, vector<1x32x128xbf16>
    %1 = vector.shape_cast %0 : vector<1x32x128xbf16> to vector<32x128xbf16>
    %c0_2 = arith.constant 0 : index
    %c0_3 = arith.constant 0 : index
    %c0_4 = arith.constant 0 : index
    %2 = vector.load %arg3[%c0_2, %c0_3, %c0_4] : memref<1x32x128xbf16, #tpu.memory_space<vmem>>, vector<1x32x128xbf16>
    %3 = vector.shape_cast %2 : vector<1x32x128xbf16> to vector<32x128xbf16>
    %4 = arith.extf %1 : vector<32x128xbf16> to vector<32x128xf32>
    %cst = arith.constant 0.0883883461 : f32
    %5 = vector.broadcast %cst : f32 to vector<32x128xf32>
    %6 = arith.mulf %4, %5 : vector<32x128xf32>
    %7 = arith.truncf %6 : vector<32x128xf32> to vector<32x128xbf16>
    %cst_5 = arith.constant dense<0.000000e+00> : vector<32x32xf32>
    %8 = tpu.matmul %7, %3, %cst_5 {dimension_numbers = #tpu.dot_dimension_numbers<[1], [1], [0], [0], [0, 0, 1, 0], [], []>} : vector<32x128xbf16>, vector<32x128xbf16>, vector<32x32xf32> -> vector<32x32xf32>
    %cst_6 = arith.constant dense<0xFF800000> : vector<32xf32>
    %9 = vector.multi_reduction <maximumf>, %8, %cst_6 [1] : vector<32x32xf32> to vector<32xf32>
    %10 = vector.shape_cast %9 : vector<32xf32> to vector<32x1xf32>
    %11 = vector.broadcast %10 : vector<32x1xf32> to vector<32x32xf32>
    %12 = arith.subf %8, %11 : vector<32x32xf32>
    %13 = math.exp %12 : vector<32x32xf32>
    %cst_7 = arith.constant dense<0.000000e+00> : vector<32xf32>
    %14 = vector.multi_reduction <add>, %13, %cst_7 [1] : vector<32x32xf32> to vector<32xf32>
    %15 = vector.shape_cast %14 : vector<32xf32> to vector<32x1xf32>
    %16 = tpu.reciprocal %15 {approx = true} : vector<32x1xf32> -> vector<32x1xf32>
    %17 = vector.broadcast %16 : vector<32x1xf32> to vector<32x32xf32>
    %18 = arith.mulf %13, %17 : vector<32x32xf32>
    %19 = arith.truncf %18 : vector<32x32xf32> to vector<32x32xbf16>
    %c0_8 = arith.constant 0 : index
    %c0_9 = arith.constant 0 : index
    %c0_10 = arith.constant 0 : index
    %20 = vector.load %arg4[%c0_8, %c0_9, %c0_10] : memref<1x32x4xbf16, #tpu.memory_space<vmem>>, vector<1x32x4xbf16>
    %21 = vector.shape_cast %20 : vector<1x32x4xbf16> to vector<32x4xbf16>
    %cst_11 = arith.constant dense<0.000000e+00> : vector<32x4xf32>
    %22 = tpu.matmul %19, %21, %cst_11 {dimension_numbers = #tpu.dot_dimension_numbers<[1], [0], [0], [1], [0, 0, 1, 1], [], []>} : vector<32x32xbf16>, vector<32x4xbf16>, vector<32x4xf32> -> vector<32x4xf32>
    %c0_12 = arith.constant 0 : index
    %c0_13 = arith.constant 0 : index
    %c0_14 = arith.constant 0 : index
    %23 = vector.load %arg5[%c0_12, %c0_13, %c0_14] : memref<1x32x4xf32, #tpu.memory_space<vmem>>, vector<1x32x4xf32>
    %24 = vector.shape_cast %23 : vector<1x32x4xf32> to vector<32x4xf32>
    %25 = arith.subf %22, %24 : vector<32x4xf32>
    %c0_15 = arith.constant 0 : index
    %c0_16 = arith.constant 0 : index
    %26 = vector.load %arg6[%c0_15, %c0_16] : memref<128x128xbf16, #tpu.memory_space<vmem>>, vector<128x128xbf16>
    %cst_17 = arith.constant dense<0.000000e+00> : vector<32x128xf32>
    %27 = tpu.matmul %1, %26, %cst_17 {dimension_numbers = #tpu.dot_dimension_numbers<[1], [0], [0], [1], [0, 0, 1, 1], [], []>} : vector<32x128xbf16>, vector<128x128xbf16>, vector<32x128xf32> -> vector<32x128xf32>
    %c0_18 = arith.constant 0 : index
    %c0_19 = arith.constant 0 : index
    %28 = vector.load %arg7[%c0_18, %c0_19] : memref<1x128xf32, #tpu.memory_space<vmem>>, vector<1x128xf32>
    %29 = vector.broadcast %28 : vector<1x128xf32> to vector<32x128xf32>
    %30 = arith.addf %27, %29 : vector<32x128xf32>
    %cst_20 = arith.constant 0.000000e+00 : f32
    %31 = vector.broadcast %cst_20 : f32 to vector<32x128xf32>
    %32 = arith.maximumf %30, %31 : vector<32x128xf32>
    %33 = arith.truncf %32 : vector<32x128xf32> to vector<32x128xbf16>
    %c0_21 = arith.constant 0 : index
    %c0_22 = arith.constant 0 : index
    %34 = vector.load %arg8[%c0_21, %c0_22] : memref<128x128xbf16, #tpu.memory_space<vmem>>, vector<128x128xbf16>
    %cst_23 = arith.constant dense<0.000000e+00> : vector<32x128xf32>
    %35 = tpu.matmul %33, %34, %cst_23 {dimension_numbers = #tpu.dot_dimension_numbers<[1], [0], [0], [1], [0, 0, 1, 1], [], []>} : vector<32x128xbf16>, vector<128x128xbf16>, vector<32x128xf32> -> vector<32x128xf32>
    %c0_24 = arith.constant 0 : index
    %c0_25 = arith.constant 0 : index
    %36 = vector.load %arg9[%c0_24, %c0_25] : memref<1x128xf32, #tpu.memory_space<vmem>>, vector<1x128xf32>
    %37 = vector.broadcast %36 : vector<1x128xf32> to vector<32x128xf32>
    %38 = arith.addf %35, %37 : vector<32x128xf32>
    %cst_26 = arith.constant 0.000000e+00 : f32
    %39 = vector.broadcast %cst_26 : f32 to vector<32x128xf32>
    %40 = arith.maximumf %38, %39 : vector<32x128xf32>
    %41 = arith.truncf %40 : vector<32x128xf32> to vector<32x128xbf16>
    %c0_27 = arith.constant 0 : index
    %c0_28 = arith.constant 0 : index
    %42 = vector.load %arg10[%c0_27, %c0_28] : memref<128x128xbf16, #tpu.memory_space<vmem>>, vector<128x128xbf16>
    %cst_29 = arith.constant dense<0.000000e+00> : vector<32x128xf32>
    %43 = tpu.matmul %41, %42, %cst_29 {dimension_numbers = #tpu.dot_dimension_numbers<[1], [0], [0], [1], [0, 0, 1, 1], [], []>} : vector<32x128xbf16>, vector<128x128xbf16>, vector<32x128xf32> -> vector<32x128xf32>
    %c0_30 = arith.constant 0 : index
    %c0_31 = arith.constant 0 : index
    %44 = vector.load %arg11[%c0_30, %c0_31] : memref<1x128xf32, #tpu.memory_space<vmem>>, vector<1x128xf32>
    %45 = vector.broadcast %44 : vector<1x128xf32> to vector<32x128xf32>
    %46 = arith.addf %43, %45 : vector<32x128xf32>
    %cst_32 = arith.constant 0.000000e+00 : f32
    %47 = vector.broadcast %cst_32 : f32 to vector<32x128xf32>
    %48 = arith.maximumf %46, %47 : vector<32x128xf32>
    %49 = arith.truncf %48 : vector<32x128xf32> to vector<32x128xbf16>
    %c0_33 = arith.constant 0 : index
    %c0_34 = arith.constant 0 : index
    %50 = vector.load %arg12[%c0_33, %c0_34] : memref<128x128xbf16, #tpu.memory_space<vmem>>, vector<128x128xbf16>
    %cst_35 = arith.constant dense<0.000000e+00> : vector<32x128xf32>
    %51 = tpu.matmul %49, %50, %cst_35 {dimension_numbers = #tpu.dot_dimension_numbers<[1], [0], [0], [1], [0, 0, 1, 1], [], []>} : vector<32x128xbf16>, vector<128x128xbf16>, vector<32x128xf32> -> vector<32x128xf32>
    %c0_36 = arith.constant 0 : index
    %c0_37 = arith.constant 0 : index
    %52 = vector.load %arg13[%c0_36, %c0_37] : memref<1x128xf32, #tpu.memory_space<vmem>>, vector<1x128xf32>
    %53 = vector.broadcast %52 : vector<1x128xf32> to vector<32x128xf32>
    %54 = arith.addf %51, %53 : vector<32x128xf32>
    %cst_38 = arith.constant 0.000000e+00 : f32
    %55 = vector.broadcast %cst_38 : f32 to vector<32x128xf32>
    %56 = arith.maximumf %54, %55 : vector<32x128xf32>
    %57 = arith.truncf %56 : vector<32x128xf32> to vector<32x128xbf16>
    %c0_39 = arith.constant 0 : index
    %c0_40 = arith.constant 0 : index
    %58 = vector.load %arg14[%c0_39, %c0_40] : memref<128x512xbf16, #tpu.memory_space<vmem>>, vector<128x512xbf16>
    %cst_41 = arith.constant dense<0.000000e+00> : vector<32x512xf32>
    %59 = tpu.matmul %57, %58, %cst_41 {dimension_numbers = #tpu.dot_dimension_numbers<[1], [0], [0], [1], [0, 0, 1, 1], [], []>} : vector<32x128xbf16>, vector<128x512xbf16>, vector<32x512xf32> -> vector<32x512xf32>
    %c0_42 = arith.constant 0 : index
    %c0_43 = arith.constant 0 : index
    %60 = vector.load %arg15[%c0_42, %c0_43] : memref<1x512xf32, #tpu.memory_space<vmem>>, vector<1x512xf32>
    %61 = vector.broadcast %60 : vector<1x512xf32> to vector<32x512xf32>
    %62 = arith.addf %59, %61 : vector<32x512xf32>
    %cst_44 = arith.constant 0.000000e+00 : f32
    %63 = vector.broadcast %cst_44 : f32 to vector<32x512xf32>
    %64 = arith.maximumf %62, %63 : vector<32x512xf32>
    %65 = arith.truncf %64 : vector<32x512xf32> to vector<32x512xbf16>
    %c0_45 = arith.constant 0 : index
    %c0_46 = arith.constant 0 : index
    %66 = vector.load %arg16[%c0_45, %c0_46] : memref<512x4xbf16, #tpu.memory_space<vmem>>, vector<512x4xbf16>
    %cst_47 = arith.constant dense<0.000000e+00> : vector<32x4xf32>
    %67 = tpu.matmul %65, %66, %cst_47 {dimension_numbers = #tpu.dot_dimension_numbers<[1], [0], [0], [1], [0, 0, 1, 1], [], []>} : vector<32x512xbf16>, vector<512x4xbf16>, vector<32x4xf32> -> vector<32x4xf32>
    %68 = arith.addf %25, %67 : vector<32x4xf32>
    %c0_48 = arith.constant 0 : index
    %c0_49 = arith.constant 0 : index
    %c0_50 = arith.constant 0 : index
    %69 = vector.load %arg17[%c0_48, %c0_49, %c0_50] : memref<1x32x4xf32, #tpu.memory_space<vmem>>, vector<1x32x4xf32>
    %70 = vector.shape_cast %69 : vector<1x32x4xf32> to vector<32x4xf32>
    %71 = vector.shape_cast %68 : vector<32x4xf32> to vector<1x32x4xf32>
    tpu.vector_store %arg17[%c0_48, %c0_49, %c0_50], %71 {strides = array<i32>} : memref<1x32x4xf32, #tpu.memory_space<vmem>>, vector<1x32x4xf32>,
    return
  }
  func.func @transform_0(%arg0: i32, %arg1: i32) -> (i32, i32, i32) {
    %c0_i32 = arith.constant 0 : i32
    %c0_i32_0 = arith.constant 0 : i32
    return %arg0, %arg1, %c0_i32 : i32, i32, i32
  }
  func.func @transform_1(%arg0: i32, %arg1: i32) -> (i32, i32, i32) {
    %c0_i32 = arith.constant 0 : i32
    %c0_i32_0 = arith.constant 0 : i32
    %c0_i32_1 = arith.constant 0 : i32
    return %arg0, %c0_i32, %c0_i32_0 : i32, i32, i32
  }
  func.func @transform_2(%arg0: i32, %arg1: i32) -> (i32, i32, i32) {
    %c0_i32 = arith.constant 0 : i32
    %c0_i32_0 = arith.constant 0 : i32
    %c0_i32_1 = arith.constant 0 : i32
    return %arg0, %c0_i32, %c0_i32_0 : i32, i32, i32
  }
  func.func @transform_3(%arg0: i32, %arg1: i32) -> (i32, i32, i32) {
    %c0_i32 = arith.constant 0 : i32
    %c0_i32_0 = arith.constant 0 : i32
    return %arg0, %arg1, %c0_i32 : i32, i32, i32
  }
  func.func @transform_4(%arg0: i32, %arg1: i32) -> (i32, i32) {
    %c0_i32 = arith.constant 0 : i32
    %c0_i32_0 = arith.constant 0 : i32
    %c0_i32_1 = arith.constant 0 : i32
    return %c0_i32, %c0_i32_0 : i32, i32
  }
  func.func @transform_5(%arg0: i32, %arg1: i32) -> (i32, i32) {
    %c0_i32 = arith.constant 0 : i32
    %c0_i32_0 = arith.constant 0 : i32
    %c0_i32_1 = arith.constant 0 : i32
    return %c0_i32, %c0_i32_0 : i32, i32
  }
  func.func @transform_6(%arg0: i32, %arg1: i32) -> (i32, i32) {
    %c0_i32 = arith.constant 0 : i32
    %c0_i32_0 = arith.constant 0 : i32
    %c0_i32_1 = arith.constant 0 : i32
    return %c0_i32, %c0_i32_0 : i32, i32
  }
  func.func @transform_7(%arg0: i32, %arg1: i32) -> (i32, i32) {
    %c0_i32 = arith.constant 0 : i32
    %c0_i32_0 = arith.constant 0 : i32
    %c0_i32_1 = arith.constant 0 : i32
    return %c0_i32, %c0_i32_0 : i32, i32
  }
  func.func @transform_8(%arg0: i32, %arg1: i32) -> (i32, i32) {
    %c0_i32 = arith.constant 0 : i32
    %c0_i32_0 = arith.constant 0 : i32
    %c0_i32_1 = arith.constant 0 : i32
    return %c0_i32, %c0_i32_0 : i32, i32
  }
  func.func @transform_9(%arg0: i32, %arg1: i32) -> (i32, i32) {
    %c0_i32 = arith.constant 0 : i32
    %c0_i32_0 = arith.constant 0 : i32
    %c0_i32_1 = arith.constant 0 : i32
    return %c0_i32, %c0_i32_0 : i32, i32
  }
  func.func @transform_10(%arg0: i32, %arg1: i32) -> (i32, i32) {
    %c0_i32 = arith.constant 0 : i32
    %c0_i32_0 = arith.constant 0 : i32
    %c0_i32_1 = arith.constant 0 : i32
    return %c0_i32, %c0_i32_0 : i32, i32
  }
  func.func @transform_11(%arg0: i32, %arg1: i32) -> (i32, i32) {
    %c0_i32 = arith.constant 0 : i32
    %c0_i32_0 = arith.constant 0 : i32
    %c0_i32_1 = arith.constant 0 : i32
    return %c0_i32, %c0_i32_0 : i32, i32
  }
  func.func @transform_12(%arg0: i32, %arg1: i32) -> (i32, i32) {
    %c0_i32 = arith.constant 0 : i32
    %c0_i32_0 = arith.constant 0 : i32
    %c0_i32_1 = arith.constant 0 : i32
    return %c0_i32, %c0_i32_0 : i32, i32
  }
  func.func @transform_13(%arg0: i32, %arg1: i32) -> (i32, i32) {
    %c0_i32 = arith.constant 0 : i32
    %c0_i32_0 = arith.constant 0 : i32
    %c0_i32_1 = arith.constant 0 : i32
    return %c0_i32, %c0_i32_0 : i32, i32
  }
  func.func @transform_14(%arg0: i32, %arg1: i32) -> (i32, i32) {
    %c0_i32 = arith.constant 0 : i32
    %c0_i32_0 = arith.constant 0 : i32
    %c0_i32_1 = arith.constant 0 : i32
    return %c0_i32, %c0_i32_0 : i32, i32
  }
  func.func @transform_15(%arg0: i32, %arg1: i32) -> (i32, i32, i32) {
    %c0_i32 = arith.constant 0 : i32
    %c0_i32_0 = arith.constant 0 : i32
    return %arg0, %arg1, %c0_i32 : i32, i32, i32
  }
}

</mosaic_0001>

<llo_original>
// kernel: correspondence_flow_diff_emb_mlp.7
$region0: #{correspondence_flow_diff_emb_mlp.7}
  #allocation0 [shape = 'u32[]', space=smem, size = 0x4, offset = 0x4, fixed_abs, tag = 'smem constant byte address 0x4 - core index']
  #allocation1 [shape = 'u32[144,128]{1,0:T(1,128)}', space=vmem, size = 0x12000, scoped, tag = 'internal scratch']
  %s0 = inlined_call_operand.vmem [shape: bf16[2,32,128], index: 0, kind: input, shape index: {}]
  %s1 = inlined_call_operand.vmem [shape: bf16[2,32,128], index: 1, kind: input, shape index: {}]
  %s2 = inlined_call_operand.vmem [shape: bf16[2,32,4], index: 2, kind: input, shape index: {}]
  %s3 = inlined_call_operand.vmem [shape: f32[2,32,4], index: 3, kind: input, shape index: {}]
  %s4 = inlined_call_operand.vmem [shape: bf16[128,128], index: 4, kind: input, shape index: {}]
  %s5 = inlined_call_operand.vmem [shape: f32[1,128], index: 5, kind: input, shape index: {}]
  %s6 = inlined_call_operand.vmem [shape: bf16[128,128], index: 6, kind: input, shape index: {}]
  %s7 = inlined_call_operand.vmem [shape: f32[1,128], index: 7, kind: input, shape index: {}]
  %s8 = inlined_call_operand.vmem [shape: bf16[128,128], index: 8, kind: input, shape index: {}]
  %s9 = inlined_call_operand.vmem [shape: f32[1,128], index: 9, kind: input, shape index: {}]
  %s10 = inlined_call_operand.vmem [shape: bf16[128,128], index: 10, kind: input, shape index: {}]
  %s11 = inlined_call_operand.vmem [shape: f32[1,128], index: 11, kind: input, shape index: {}]
  %s12 = inlined_call_operand.vmem [shape: bf16[128,512], index: 12, kind: input, shape index: {}]
  %s13 = inlined_call_operand.vmem [shape: f32[1,512], index: 13, kind: input, shape index: {}]
  %s14 = inlined_call_operand.vmem [shape: bf16[512,4], index: 14, kind: input, shape index: {}]
  %s15 = inlined_call_operand.vmem [shape: f32[2,32,4], index: 15, kind: output, shape index: {}]
  %s16 = sld [smem:[#allocation0]]
  $region93: #{correspondence_flow_diff_emb_mlp.7} parent=0
    _
  %s18 = ssub.s32 1, %s16
  %s19 = scalar_select 0, %s18, %s16
  loop: start=0, step=1, limit=4
  $region2: #{correspondence_flow_diff_emb_mlp.7} parent=0 // loop_pre_header
    _
  $region3: #{correspondence_flow_diff_emb_mlp.7} parent=0 // loop_header
    %s21 = sphi 0, %s25
    %p22 = scmp.ge.s32.totalorder %s21, 4
    %s28 = sphi 0, %s40
    %s29 = sphi 0, %s36
    %s30 = sphi 0, %s28
    %s31 = sphi 0, %s29
    %s32 = sphi 0, %s30
    %s33 = sphi 0, %s31
    %s45 = sphi 0, %s47
    %s48 = sphi 0, %s45
    %s49 = sphi 0, %s48
    %s65 = sphi 0, %s49
    %s71 = sphi 0, %s73
    %s74 = sphi 0, %s71
    %s75 = sphi 0, %s74
    %s91 = sphi 0, %s75
    %s97 = sphi 0, %s99
    %s100 = sphi 0, %s97
    %s101 = sphi 0, %s100
    %s117 = sphi 0, %s101
    %s125 = sphi 0, %s127
    %s128 = sphi 0, %s125
    %s129 = sphi 0, %s128
    %s145 = sphi 0, %s129
    %s149 = sphi 0, %s149
    %s151 = sphi 0, %s149
    %s152 = sphi 0, %s151
    %s166 = sphi 0, %s152
    %s170 = sphi 0, %s170
    %s172 = sphi 0, %s170
    %s173 = sphi 0, %s172
    %s187 = sphi 0, %s173
    %s191 = sphi 0, %s191
    %s193 = sphi 0, %s191
    %s194 = sphi 0, %s193
    %s208 = sphi 0, %s194
    %s212 = sphi 0, %s212
    %s214 = sphi 0, %s212
    %s215 = sphi 0, %s214
    %s229 = sphi 0, %s215
    %s233 = sphi 0, %s233
    %s235 = sphi 0, %s233
    %s236 = sphi 0, %s235
    %s250 = sphi 0, %s236
    %s254 = sphi 0, %s254
    %s256 = sphi 0, %s254
    %s257 = sphi 0, %s256
    %s271 = sphi 0, %s257
    %s275 = sphi 0, %s275
    %s277 = sphi 0, %s275
    %s278 = sphi 0, %s277
    %s292 = sphi 0, %s278
    %s296 = sphi 0, %s296
    %s298 = sphi 0, %s296
    %s299 = sphi 0, %s298
    %s313 = sphi 0, %s299
    %s317 = sphi 0, %s317
    %s319 = sphi 0, %s317
    %s320 = sphi 0, %s319
    %s334 = sphi 0, %s320
    %s338 = sphi 0, %s338
    %s340 = sphi 0, %s338
    %s341 = sphi 0, %s340
    %s355 = sphi 0, %s341
    %s359 = sphi 0, %s359
    %s361 = sphi 0, %s359
    %s362 = sphi 0, %s361
    %s376 = sphi 0, %s362
    %s384 = sphi 0, %s386
    %s387 = sphi 0, %s384
    %s388 = sphi 0, %s387
    %s404 = sphi 0, %s388
  $region4: #{correspondence_flow_diff_emb_mlp.7} parent=0 // loop_header_branch
    %24 = sbr.rel (%p22) target = $region8
  $region5: #{correspondence_flow_diff_emb_mlp.7} parent=0 // loop_body
    %s26 = ssub.s32 %s21, 1
    %s27 = ssub.s32 %s21, 2
    %s34 = sadd.s32 1, %s29
    %p35 = scmp.ge.s32.totalorder %s34, 1
    %s36 = scalar_select %p35, 0, %s34
    %s37 = sadd.s32 1, %s28
    %s38 = scalar_select %p35, %s37, %s28
    %p39 = scmp.ge.s32.totalorder %s38, 2
    %s40 = scalar_select %p39, 0, %s38
    %s41 = ssub.s32 %s28, %s40
    %s42 = ssub.s32 %s29, %s36
    %s43 = sor.u32 %s41, %s42
    %p44 = scmp.eq.s32.totalorder %s43, 0
    %s46 = sadd.s32 %s45, 1
    %s47 = scalar_select %p44, %s45, %s46
    %p50 = pneg %p44
    %p51 = scmp.eq.s32.totalorder %s21, 1
    %p52 = por %p50, %p51
    %p53 = scmp.ne.s32.totalorder %s45, %s48
    %p54 = scmp.eq.s32.totalorder %s21, 0
    %p55 = por %p53, %p54
    %p56 = scmp.ne.s32.totalorder %s45, %s48
    %p57 = scmp.eq.s32.totalorder %s26, 1
    %p58 = por %p56, %p57
    %p59 = scmp.ne.s32.totalorder %s48, %s49
    %p60 = scmp.eq.s32.totalorder %s26, 0
    %p61 = por %p59, %p60
    %p62 = scmp.ne.s32.totalorder %s48, %s49
    %p63 = scmp.eq.s32.totalorder %s27, 1
    %p64 = por %p62, %p63
    %p66 = scmp.ne.s32.totalorder %s49, %s65
    %p67 = scmp.eq.s32.totalorder %s27, 0
    %p68 = por %p66, %p67
    %s69 = ssub.s32 %s28, %s40
    %p70 = scmp.eq.s32.totalorder %s69, 0
    %s72 = sadd.s32 %s71, 1
    %s73 = scalar_select %p70, %s71, %s72
    %p76 = pneg %p70
    %p77 = scmp.eq.s32.totalorder %s21, 1
    %p78 = por %p76, %p77
    %p79 = scmp.ne.s32.totalorder %s71, %s74
    %p80 = scmp.eq.s32.totalorder %s21, 0
    %p81 = por %p79, %p80
    %p82 = scmp.ne.s32.totalorder %s71, %s74
    %p83 = scmp.eq.s32.totalorder %s26, 1
    %p84 = por %p82, %p83
    %p85 = scmp.ne.s32.totalorder %s74, %s75
    %p86 = scmp.eq.s32.totalorder %s26, 0
    %p87 = por %p85, %p86
    %p88 = scmp.ne.s32.totalorder %s74, %s75
    %p89 = scmp.eq.s32.totalorder %s27, 1
    %p90 = por %p88, %p89
    %p92 = scmp.ne.s32.totalorder %s75, %s91
    %p93 = scmp.eq.s32.totalorder %s27, 0
    %p94 = por %p92, %p93
    %s95 = ssub.s32 %s28, %s40
    %p96 = scmp.eq.s32.totalorder %s95, 0
    %s98 = sadd.s32 %s97, 1
    %s99 = scalar_select %p96, %s97, %s98
    %p102 = pneg %p96
    %p103 = scmp.eq.s32.totalorder %s21, 1
    %p104 = por %p102, %p103
    %p105 = scmp.ne.s32.totalorder %s97, %s100
    %p106 = scmp.eq.s32.totalorder %s21, 0
    %p107 = por %p105, %p106
    %p108 = scmp.ne.s32.totalorder %s97, %s100
    %p109 = scmp.eq.s32.totalorder %s26, 1
    %p110 = por %p108, %p109
    %p111 = scmp.ne.s32.totalorder %s100, %s101
    %p112 = scmp.eq.s32.totalorder %s26, 0
    %p113 = por %p111, %p112
    %p114 = scmp.ne.s32.totalorder %s100, %s101
    %p115 = scmp.eq.s32.totalorder %s27, 1
    %p116 = por %p114, %p115
    %p118 = scmp.ne.s32.totalorder %s101, %s117
    %p119 = scmp.eq.s32.totalorder %s27, 0
    %p120 = por %p118, %p119
    %s121 = ssub.s32 %s28, %s40
    %s122 = ssub.s32 %s29, %s36
    %s123 = sor.u32 %s121, %s122
    %p124 = scmp.eq.s32.totalorder %s123, 0
    %s126 = sadd.s32 %s125, 1
    %s127 = scalar_select %p124, %s125, %s126
    %p130 = pneg %p124
    %p131 = scmp.eq.s32.totalorder %s21, 1
    %p132 = por %p130, %p131
    %p133 = scmp.ne.s32.totalorder %s125, %s128
    %p134 = scmp.eq.s32.totalorder %s21, 0
    %p135 = por %p133, %p134
    %p136 = scmp.ne.s32.totalorder %s125, %s128
    %p137 = scmp.eq.s32.totalorder %s26, 1
    %p138 = por %p136, %p137
    %p139 = scmp.ne.s32.totalorder %s128, %s129
    %p140 = scmp.eq.s32.totalorder %s26, 0
    %p141 = por %p139, %p140
    %p142 = scmp.ne.s32.totalorder %s128, %s129
    %p143 = scmp.eq.s32.totalorder %s27, 1
    %p144 = por %p142, %p143
    %p146 = scmp.ne.s32.totalorder %s129, %s145
    %p147 = scmp.eq.s32.totalorder %s27, 0
    %p148 = por %p146, %p147
    %s150 = sadd.s32 %s149, 1
    %p153 = scmp.eq.s32.totalorder %s21, 1
    %p154 = scmp.ne.s32.totalorder %s149, %s151
    %p155 = scmp.eq.s32.totalorder %s21, 0
    %p156 = por %p154, %p155
    %p157 = scmp.ne.s32.totalorder %s149, %s151
    %p158 = scmp.eq.s32.totalorder %s26, 1
    %p159 = por %p157, %p158
    %p160 = scmp.ne.s32.totalorder %s151, %s152
    %p161 = scmp.eq.s32.totalorder %s26, 0
    %p162 = por %p160, %p161
    %p163 = scmp.ne.s32.totalorder %s151, %s152
    %p164 = scmp.eq.s32.totalorder %s27, 1
    %p165 = por %p163, %p164
    %p167 = scmp.ne.s32.totalorder %s152, %s166
    %p168 = scmp.eq.s32.totalorder %s27, 0
    %p169 = por %p167, %p168
    %s171 = sadd.s32 %s170, 1
    %p174 = scmp.eq.s32.totalorder %s21, 1
    %p175 = scmp.ne.s32.totalorder %s170, %s172
    %p176 = scmp.eq.s32.totalorder %s21, 0
    %p177 = por %p175, %p176
    %p178 = scmp.ne.s32.totalorder %s170, %s172
    %p179 = scmp.eq.s32.totalorder %s26, 1
    %p180 = por %p178, %p179
    %p181 = scmp.ne.s32.totalorder %s172, %s173
    %p182 = scmp.eq.s32.totalorder %s26, 0
    %p183 = por %p181, %p182
    %p184 = scmp.ne.s32.totalorder %s172, %s173
    %p185 = scmp.eq.s32.totalorder %s27, 1
    %p186 = por %p184, %p185
    %p188 = scmp.ne.s32.totalorder %s173, %s187
    %p189 = scmp.eq.s32.totalorder %s27, 0
    %p190 = por %p188, %p189
    %s192 = sadd.s32 %s191, 1
    %p195 = scmp.eq.s32.totalorder %s21, 1
    %p196 = scmp.ne.s32.totalorder %s191, %s193
    %p197 = scmp.eq.s32.totalorder %s21, 0
    %p198 = por %p196, %p197
    %p199 = scmp.ne.s32.totalorder %s191, %s193
    %p200 = scmp.eq.s32.totalorder %s26, 1
    %p201 = por %p199, %p200
    %p202 = scmp.ne.s32.totalorder %s193, %s194
    %p203 = scmp.eq.s32.totalorder %s26, 0
    %p204 = por %p202, %p203
    %p205 = scmp.ne.s32.totalorder %s193, %s194
    %p206 = scmp.eq.s32.totalorder %s27, 1
    %p207 = por %p205, %p206
    %p209 = scmp.ne.s32.totalorder %s194, %s208
    %p210 = scmp.eq.s32.totalorder %s27, 0
    %p211 = por %p209, %p210
    %s213 = sadd.s32 %s212, 1
    %p216 = scmp.eq.s32.totalorder %s21, 1
    %p217 = scmp.ne.s32.totalorder %s212, %s214
    %p218 = scmp.eq.s32.totalorder %s21, 0
    %p219 = por %p217, %p218
    %p220 = scmp.ne.s32.totalorder %s212, %s214
    %p221 = scmp.eq.s32.totalorder %s26, 1
    %p222 = por %p220, %p221
    %p223 = scmp.ne.s32.totalorder %s214, %s215
    %p224 = scmp.eq.s32.totalorder %s26, 0
    %p225 = por %p223, %p224
    %p226 = scmp.ne.s32.totalorder %s214, %s215
    %p227 = scmp.eq.s32.totalorder %s27, 1
    %p228 = por %p226, %p227
    %p230 = scmp.ne.s32.totalorder %s215, %s229
    %p231 = scmp.eq.s32.totalorder %s27, 0
    %p232 = por %p230, %p231
    %s234 = sadd.s32 %s233, 1
    %p237 = scmp.eq.s32.totalorder %s21, 1
    %p238 = scmp.ne.s32.totalorder %s233, %s235
    %p239 = scmp.eq.s32.totalorder %s21, 0
    %p240 = por %p238, %p239
    %p241 = scmp.ne.s32.totalorder %s233, %s235
    %p242 = scmp.eq.s32.totalorder %s26, 1
    %p243 = por %p241, %p242
    %p244 = scmp.ne.s32.totalorder %s235, %s236
    %p245 = scmp.eq.s32.totalorder %s26, 0
    %p246 = por %p244, %p245
    %p247 = scmp.ne.s32.totalorder %s235, %s236
    %p248 = scmp.eq.s32.totalorder %s27, 1
    %p249 = por %p247, %p248
    %p251 = scmp.ne.s32.totalorder %s236, %s250
    %p252 = scmp.eq.s32.totalorder %s27, 0
    %p253 = por %p251, %p252
    %s255 = sadd.s32 %s254, 1
    %p258 = scmp.eq.s32.totalorder %s21, 1
    %p259 = scmp.ne.s32.totalorder %s254, %s256
    %p260 = scmp.eq.s32.totalorder %s21, 0
    %p261 = por %p259, %p260
    %p262 = scmp.ne.s32.totalorder %s254, %s256
    %p263 = scmp.eq.s32.totalorder %s26, 1
    %p264 = por %p262, %p263
    %p265 = scmp.ne.s32.totalorder %s256, %s257
    %p266 = scmp.eq.s32.totalorder %s26, 0
    %p267 = por %p265, %p266
    %p268 = scmp.ne.s32.totalorder %s256, %s257
    %p269 = scmp.eq.s32.totalorder %s27, 1
    %p270 = por %p268, %p269
    %p272 = scmp.ne.s32.totalorder %s257, %s271
    %p273 = scmp.eq.s32.totalorder %s27, 0
    %p274 = por %p272, %p273
    %s276 = sadd.s32 %s275, 1
    %p279 = scmp.eq.s32.totalorder %s21, 1
    %p280 = scmp.ne.s32.totalorder %s275, %s277
    %p281 = scmp.eq.s32.totalorder %s21, 0
    %p282 = por %p280, %p281
    %p283 = scmp.ne.s32.totalorder %s275, %s277
    %p284 = scmp.eq.s32.totalorder %s26, 1
    %p285 = por %p283, %p284
    %p286 = scmp.ne.s32.totalorder %s277, %s278
    %p287 = scmp.eq.s32.totalorder %s26, 0
    %p288 = por %p286, %p287
    %p289 = scmp.ne.s32.totalorder %s277, %s278
    %p290 = scmp.eq.s32.totalorder %s27, 1
    %p291 = por %p289, %p290
    %p293 = scmp.ne.s32.totalorder %s278, %s292
    %p294 = scmp.eq.s32.totalorder %s27, 0
    %p295 = por %p293, %p294
    %s297 = sadd.s32 %s296, 1
    %p300 = scmp.eq.s32.totalorder %s21, 1
    %p301 = scmp.ne.s32.totalorder %s296, %s298
    %p302 = scmp.eq.s32.totalorder %s21, 0
    %p303 = por %p301, %p302
    %p304 = scmp.ne.s32.totalorder %s296, %s298
    %p305 = scmp.eq.s32.totalorder %s26, 1
    %p306 = por %p304, %p305
    %p307 = scmp.ne.s32.totalorder %s298, %s299
    %p308 = scmp.eq.s32.totalorder %s26, 0
    %p309 = por %p307, %p308
    %p310 = scmp.ne.s32.totalorder %s298, %s299
    %p311 = scmp.eq.s32.totalorder %s27, 1
    %p312 = por %p310, %p311
    %p314 = scmp.ne.s32.totalorder %s299, %s313
    %p315 = scmp.eq.s32.totalorder %s27, 0
    %p316 = por %p314, %p315
    %s318 = sadd.s32 %s317, 1
    %p321 = scmp.eq.s32.totalorder %s21, 1
    %p322 = scmp.ne.s32.totalorder %s317, %s319
    %p323 = scmp.eq.s32.totalorder %s21, 0
    %p324 = por %p322, %p323
    %p325 = scmp.ne.s32.totalorder %s317, %s319
    %p326 = scmp.eq.s32.totalorder %s26, 1
    %p327 = por %p325, %p326
    %p328 = scmp.ne.s32.totalorder %s319, %s320
    %p329 = scmp.eq.s32.totalorder %s26, 0
    %p330 = por %p328, %p329
    %p331 = scmp.ne.s32.totalorder %s319, %s320
    %p332 = scmp.eq.s32.totalorder %s27, 1
    %p333 = por %p331, %p332
    %p335 = scmp.ne.s32.totalorder %s320, %s334
    %p336 = scmp.eq.s32.totalorder %s27, 0
    %p337 = por %p335, %p336
    %s339 = sadd.s32 %s338, 1
    %p342 = scmp.eq.s32.totalorder %s21, 1
    %p343 = scmp.ne.s32.totalorder %s338, %s340
    %p344 = scmp.eq.s32.totalorder %s21, 0
    %p345 = por %p343, %p344
    %p346 = scmp.ne.s32.totalorder %s338, %s340
    %p347 = scmp.eq.s32.totalorder %s26, 1
    %p348 = por %p346, %p347
    %p349 = scmp.ne.s32.totalorder %s340, %s341
    %p350 = scmp.eq.s32.totalorder %s26, 0
    %p351 = por %p349, %p350
    %p352 = scmp.ne.s32.totalorder %s340, %s341
    %p353 = scmp.eq.s32.totalorder %s27, 1
    %p354 = por %p352, %p353
    %p356 = scmp.ne.s32.totalorder %s341, %s355
    %p357 = scmp.eq.s32.totalorder %s27, 0
    %p358 = por %p356, %p357
    %s360 = sadd.s32 %s359, 1
    %p363 = scmp.eq.s32.totalorder %s21, 1
    %p364 = scmp.ne.s32.totalorder %s359, %s361
    %p365 = scmp.eq.s32.totalorder %s21, 0
    %p366 = por %p364, %p365
    %p367 = scmp.ne.s32.totalorder %s359, %s361
    %p368 = scmp.eq.s32.totalorder %s26, 1
    %p369 = por %p367, %p368
    %p370 = scmp.ne.s32.totalorder %s361, %s362
    %p371 = scmp.eq.s32.totalorder %s26, 0
    %p372 = por %p370, %p371
    %p373 = scmp.ne.s32.totalorder %s361, %s362
    %p374 = scmp.eq.s32.totalorder %s27, 1
    %p375 = por %p373, %p374
    %p377 = scmp.ne.s32.totalorder %s362, %s376
    %p378 = scmp.eq.s32.totalorder %s27, 0
    %p379 = por %p377, %p378
    %s380 = ssub.s32 %s28, %s40
    %s381 = ssub.s32 %s29, %s36
    %s382 = sor.u32 %s380, %s381
    %p383 = scmp.eq.s32.totalorder %s382, 0
    %s385 = sadd.s32 %s384, 1
    %s386 = scalar_select %p383, %s384, %s385
    %p389 = pneg %p383
    %p390 = scmp.eq.s32.totalorder %s21, 1
    %p391 = por %p389, %p390
    %p392 = scmp.ne.s32.totalorder %s384, %s387
    %p393 = scmp.eq.s32.totalorder %s21, 0
    %p394 = por %p392, %p393
    %p395 = scmp.ne.s32.totalorder %s384, %s387
    %p396 = scmp.eq.s32.totalorder %s26, 1
    %p397 = por %p395, %p396
    %p398 = scmp.ne.s32.totalorder %s387, %s388
    %p399 = scmp.eq.s32.totalorder %s26, 0
    %p400 = por %p398, %p399
    %p401 = scmp.ne.s32.totalorder %s387, %s388
    %p402 = scmp.eq.s32.totalorder %s27, 1
    %p403 = por %p401, %p402
    %p405 = scmp.ne.s32.totalorder %s388, %s404
    %p406 = scmp.eq.s32.totalorder %s27, 0
    %p407 = por %p405, %p406
    %p408 = scmp.le.s32.totalorder 1, %s21
    %p409 = scmp.lt.s32.totalorder %s21, 3
    %p410 = pnand %p408, %p409
    %p411 = pneg %p410
    // Predicated region
    $region9: #{correspondence_flow_diff_emb_mlp.7} parent=5 // pred_check
      _
    $region10: #{correspondence_flow_diff_emb_mlp.7} parent=5 // pred_check_branch
      %413 = sbr.rel (%p410) target = $region12
    $region11: #{correspondence_flow_diff_emb_mlp.7} parent=5 // pred_region
      %s414 = ssub.s32 %s21, 1
      // Predicated region
      $region13: #{correspondence_flow_diff_emb_mlp.7} parent=11 // pred_check
        %p415 = pneg %p162
      $region14: #{correspondence_flow_diff_emb_mlp.7} parent=11 // pred_check_branch
        %417 = sbr.rel (%p415) target = $region16
      $region15: #{correspondence_flow_diff_emb_mlp.7} parent=11 // pred_region
        _
      $region16: #{correspondence_flow_diff_emb_mlp.7} parent=11 // pred_fallthru
        _
      // Predicated region
      $region17: #{correspondence_flow_diff_emb_mlp.7} parent=11 // pred_check
        %p418 = pneg %p183
      $region18: #{correspondence_flow_diff_emb_mlp.7} parent=11 // pred_check_branch
        %420 = sbr.rel (%p418) target = $region20
      $region19: #{correspondence_flow_diff_emb_mlp.7} parent=11 // pred_region
        _
      $region20: #{correspondence_flow_diff_emb_mlp.7} parent=11 // pred_fallthru
        _
      // Predicated region
      $region21: #{correspondence_flow_diff_emb_mlp.7} parent=11 // pred_check
        %p421 = pneg %p204
      $region22: #{correspondence_flow_diff_emb_mlp.7} parent=11 // pred_check_branch
        %423 = sbr.rel (%p421) target = $region24
      $region23: #{correspondence_flow_diff_emb_mlp.7} parent=11 // pred_region
        _
      $region24: #{correspondence_flow_diff_emb_mlp.7} parent=11 // pred_fallthru
        _
      // Predicated region
      $region25: #{correspondence_flow_diff_emb_mlp.7} parent=11 // pred_check
        %p424 = pneg %p225
      $region26: #{correspondence_flow_diff_emb_mlp.7} parent=11 // pred_check_branch
        %426 = sbr.rel (%p424) target = $region28
      $region27: #{correspondence_flow_diff_emb_mlp.7} parent=11 // pred_region
        _
      $region28: #{correspondence_flow_diff_emb_mlp.7} parent=11 // pred_fallthru
        _
      // Predicated region
      $region29: #{correspondence_flow_diff_emb_mlp.7} parent=11 // pred_check
        %p427 = pneg %p246
      $region30: #{correspondence_flow_diff_emb_mlp.7} parent=11 // pred_check_branch
        %429 = sbr.rel (%p427) target = $region32
      $region31: #{correspondence_flow_diff_emb_mlp.7} parent=11 // pred_region
        _
      $region32: #{correspondence_flow_diff_emb_mlp.7} parent=11 // pred_fallthru
        _
      // Predicated region
      $region33: #{correspondence_flow_diff_emb_mlp.7} parent=11 // pred_check
        %p430 = pneg %p267
      $region34: #{correspondence_flow_diff_emb_mlp.7} parent=11 // pred_check_branch
        %432 = sbr.rel (%p430) target = $region36
      $region35: #{correspondence_flow_diff_emb_mlp.7} parent=11 // pred_region
        _
      $region36: #{correspondence_flow_diff_emb_mlp.7} parent=11 // pred_fallthru
        _
      // Predicated region
      $region37: #{correspondence_flow_diff_emb_mlp.7} parent=11 // pred_check
        %p433 = pneg %p288
      $region38: #{correspondence_flow_diff_emb_mlp.7} parent=11 // pred_check_branch
        %435 = sbr.rel (%p433) target = $region40
      $region39: #{correspondence_flow_diff_emb_mlp.7} parent=11 // pred_region
        _
      $region40: #{correspondence_flow_diff_emb_mlp.7} parent=11 // pred_fallthru
        _
      // Predicated region
      $region41: #{correspondence_flow_diff_emb_mlp.7} parent=11 // pred_check
        %p436 = pneg %p309
      $region42: #{correspondence_flow_diff_emb_mlp.7} parent=11 // pred_check_branch
        %438 = sbr.rel (%p436) target = $region44
      $region43: #{correspondence_flow_diff_emb_mlp.7} parent=11 // pred_region
        _
      $region44: #{correspondence_flow_diff_emb_mlp.7} parent=11 // pred_fallthru
        _
      // Predicated region
      $region45: #{correspondence_flow_diff_emb_mlp.7} parent=11 // pred_check
        %p439 = pneg %p330
      $region46: #{correspondence_flow_diff_emb_mlp.7} parent=11 // pred_check_branch
        %441 = sbr.rel (%p439) target = $region48
      $region47: #{correspondence_flow_diff_emb_mlp.7} parent=11 // pred_region
        _
      $region48: #{correspondence_flow_diff_emb_mlp.7} parent=11 // pred_fallthru
        _
      // Predicated region
      $region49: #{correspondence_flow_diff_emb_mlp.7} parent=11 // pred_check
        %p442 = pneg %p351
      $region50: #{correspondence_flow_diff_emb_mlp.7} parent=11 // pred_check_branch
        %444 = sbr.rel (%p442) target = $region52
      $region51: #{correspondence_flow_diff_emb_mlp.7} parent=11 // pred_region
        _
      $region52: #{correspondence_flow_diff_emb_mlp.7} parent=11 // pred_fallthru
        _
      // Predicated region
      $region53: #{correspondence_flow_diff_emb_mlp.7} parent=11 // pred_check
        %p445 = pneg %p372
      $region54: #{correspondence_flow_diff_emb_mlp.7} parent=11 // pred_check_branch
        %447 = sbr.rel (%p445) target = $region56
      $region55: #{correspondence_flow_diff_emb_mlp.7} parent=11 // pred_region
        _
      $region56: #{correspondence_flow_diff_emb_mlp.7} parent=11 // pred_fallthru
        _
    $region12: #{correspondence_flow_diff_emb_mlp.7} parent=5 // pred_fallthru
      _
    %p448 = scmp.lt.s32.totalorder %s21, 2
    // Predicated region
    $region57: #{correspondence_flow_diff_emb_mlp.7} parent=5 // pred_check
      %p449 = pneg %p448
    $region58: #{correspondence_flow_diff_emb_mlp.7} parent=5 // pred_check_branch
      %451 = sbr.rel (%p449) target = $region60
    $region59: #{correspondence_flow_diff_emb_mlp.7} parent=5 // pred_region
      // Predicated region
      $region61: #{correspondence_flow_diff_emb_mlp.7} parent=59 // pred_check
        %p452 = pneg %p55
      $region62: #{correspondence_flow_diff_emb_mlp.7} parent=59 // pred_check_branch
        %454 = sbr.rel (%p452) target = $region64
      $region63: #{correspondence_flow_diff_emb_mlp.7} parent=59 // pred_region
        %s455 = smul.u32 4, %s29
        %p456 = scmp.lt.s32.totalorder %s28, 1
        %s457 = scalar_select %p456, %s28, 1
        %p458 = scmp.lt.s32.totalorder %s455, 3
        %s459 = scalar_select %p458, %s455, 3
        %s460 = smul.addr %s457, 4
        %s461 = sadd.s32 %s459, %s460
        %s462 = smul.addr %s461, 4
        %s463 = scalar_lea.vmem %s0, %s462
        %s464 = smul.u32 4, %s29
      $region64: #{correspondence_flow_diff_emb_mlp.7} parent=59 // pred_fallthru
        _
      // Predicated region
      $region65: #{correspondence_flow_diff_emb_mlp.7} parent=59 // pred_check
        %p465 = pneg %p81
      $region66: #{correspondence_flow_diff_emb_mlp.7} parent=59 // pred_check_branch
        %467 = sbr.rel (%p465) target = $region68
      $region67: #{correspondence_flow_diff_emb_mlp.7} parent=59 // pred_region
        %p468 = scmp.lt.s32.totalorder %s28, 1
        %s469 = scalar_select %p468, %s28, 1
        %s470 = smul.addr %s469, 4
        %s471 = smul.addr %s470, 4
        %s472 = scalar_lea.vmem %s1, %s471
      $region68: #{correspondence_flow_diff_emb_mlp.7} parent=59 // pred_fallthru
        _
      // Predicated region
      $region69: #{correspondence_flow_diff_emb_mlp.7} parent=59 // pred_check
        %p473 = pneg %p107
      $region70: #{correspondence_flow_diff_emb_mlp.7} parent=59 // pred_check_branch
        %475 = sbr.rel (%p473) target = $region72
      $region71: #{correspondence_flow_diff_emb_mlp.7} parent=59 // pred_region
        %p476 = scmp.lt.s32.totalorder %s28, 1
        %s477 = scalar_select %p476, %s28, 1
        %s478 = smul.addr %s477, 4
        %s479 = smul.addr %s478, 4
        %s480 = scalar_lea.vmem %s2, %s479
      $region72: #{correspondence_flow_diff_emb_mlp.7} parent=59 // pred_fallthru
        _
      // Predicated region
      $region73: #{correspondence_flow_diff_emb_mlp.7} parent=59 // pred_check
        %p481 = pneg %p135
      $region74: #{correspondence_flow_diff_emb_mlp.7} parent=59 // pred_check_branch
        %483 = sbr.rel (%p481) target = $region76
      $region75: #{correspondence_flow_diff_emb_mlp.7} parent=59 // pred_region
        %s484 = smul.u32 4, %s29
        %p485 = scmp.lt.s32.totalorder %s28, 1
        %s486 = scalar_select %p485, %s28, 1
        %p487 = scmp.lt.s32.totalorder %s484, 3
        %s488 = scalar_select %p487, %s484, 3
        %s489 = smul.addr %s486, 4
        %s490 = sadd.s32 %s488, %s489
        %s491 = smul.addr %s490, 8
        %s492 = scalar_lea.vmem %s3, %s491
        %s493 = smul.u32 4, %s29
      $region76: #{correspondence_flow_diff_emb_mlp.7} parent=59 // pred_fallthru
        _
    $region60: #{correspondence_flow_diff_emb_mlp.7} parent=5 // pred_fallthru
      _
    %p494 = scmp.le.s32.totalorder 1, %s21
    %p495 = scmp.lt.s32.totalorder %s21, 3
    %p496 = pnand %p494, %p495
    %p497 = pneg %p496
    // Predicated region
    $region77: #{correspondence_flow_diff_emb_mlp.7} parent=5 // pred_check
      _
    $region78: #{correspondence_flow_diff_emb_mlp.7} parent=5 // pred_check_branch
      %499 = sbr.rel (%p496) target = $region80
    $region79: #{correspondence_flow_diff_emb_mlp.7} parent=5 // pred_region
      %s500 = ssub.s32 %s21, 1
      %s501 = smul.u32 4, %s31
      %p502 = scmp.lt.s32.totalorder %s30, 1
      %s503 = scalar_select %p502, %s30, 1
      %p504 = scmp.lt.s32.totalorder %s501, 3
      %s505 = scalar_select %p504, %s501, 3
      %s506 = smul.addr %s503, 4
      %s507 = sadd.s32 %s505, %s506
      %s508 = smul.addr %s507, 4
      %s509 = scalar_lea.vmem %s0, %s508
      %p510 = pneg %p61
      %p511 = pneg %p58
      %p512 = scmp.lt.s32.totalorder %s30, 1
      %s513 = scalar_select %p512, %s30, 1
      %s514 = smul.addr %s513, 4
      %s515 = smul.addr %s514, 4
      %s516 = scalar_lea.vmem %s1, %s515
      %p517 = pneg %p87
      %p518 = pneg %p84
      %p519 = scmp.lt.s32.totalorder %s30, 1
      %s520 = scalar_select %p519, %s30, 1
      %s521 = smul.addr %s520, 4
      %s522 = smul.addr %s521, 4
      %s523 = scalar_lea.vmem %s2, %s522
      %p524 = pneg %p113
      %p525 = pneg %p110
      %s526 = smul.u32 4, %s31
      %p527 = scmp.lt.s32.totalorder %s30, 1
      %s528 = scalar_select %p527, %s30, 1
      %p529 = scmp.lt.s32.totalorder %s526, 3
      %s530 = scalar_select %p529, %s526, 3
      %s531 = smul.addr %s528, 4
      %s532 = sadd.s32 %s530, %s531
      %s533 = smul.addr %s532, 8
      %s534 = scalar_lea.vmem %s3, %s533
      %p535 = pneg %p141
      %p536 = pneg %p138
      %p537 = pneg %p162
      %p538 = pneg %p159
      %p539 = pneg %p183
      %p540 = pneg %p180
      %p541 = pneg %p204
      %p542 = pneg %p201
      %p543 = pneg %p225
      %p544 = pneg %p222
      %p545 = pneg %p246
      %p546 = pneg %p243
      %p547 = pneg %p267
      %p548 = pneg %p264
      %p549 = pneg %p288
      %p550 = pneg %p285
      %p551 = pneg %p309
      %p552 = pneg %p306
      %p553 = pneg %p330
      %p554 = pneg %p327
      %p555 = pneg %p351
      %p556 = pneg %p348
      %p557 = pneg %p372
      %p558 = pneg %p369
      %p559 = pneg %p400
      %p560 = pneg %p397
      %s561 = smul.u32 4, %s31
      %p562 = scmp.lt.s32.totalorder %s30, 1
      %s563 = scalar_select %p562, %s30, 1
      %p564 = scmp.lt.s32.totalorder %s561, 3
      %s565 = scalar_select %p564, %s561, 3
      %s566 = smul.addr %s563, 4
      %s567 = sadd.s32 %s565, %s566
      %s568 = smul.addr %s567, 8
      %s569 = scalar_lea.vmem %s15, %s568
      %s570 = smul.u32 4, %s31
      %p571 = scmp.lt.s32.totalorder %s30, 1
      %s572 = scalar_select %p571, %s30, 1
      %p573 = scmp.lt.s32.totalorder %s570, 3
      %s574 = scalar_select %p573, %s570, 3
      %s575 = smul.addr %s572, 4
      %s576 = sadd.s32 %s574, %s575
      %s577 = smul.addr %s576, 4
      %s578 = scalar_lea.vmem %s0, %s577
      %s579 = smul.u32 4, %s31
      %p580 = scmp.lt.s32.totalorder %s30, 1
      %s581 = scalar_select %p580, %s30, 1
      %s582 = smul.addr %s581, 4
      %s583 = smul.addr %s582, 4
      %s584 = scalar_lea.vmem %s1, %s583
      %p585 = scmp.lt.s32.totalorder %s30, 1
      %s586 = scalar_select %p585, %s30, 1
      %s587 = smul.addr %s586, 4
      %s588 = smul.addr %s587, 4
      %s589 = scalar_lea.vmem %s2, %s588
      %s590 = smul.u32 4, %s31
      %p591 = scmp.lt.s32.totalorder %s30, 1
      %s592 = scalar_select %p591, %s30, 1
      %p593 = scmp.lt.s32.totalorder %s590, 3
      %s594 = scalar_select %p593, %s590, 3
      %s595 = smul.addr %s592, 4
      %s596 = sadd.s32 %s594, %s595
      %s597 = smul.addr %s596, 8
      %s598 = scalar_lea.vmem %s3, %s597
      %s599 = smul.u32 4, %s31
      %s600 = smul.u32 4, %s31
      %p601 = scmp.lt.s32.totalorder %s30, 1
      %s602 = scalar_select %p601, %s30, 1
      %p603 = scmp.lt.s32.totalorder %s600, 3
      %s604 = scalar_select %p603, %s600, 3
      %s605 = smul.addr %s602, 4
      %s606 = sadd.s32 %s604, %s605
      %s607 = smul.addr %s606, 8
      %s608 = scalar_lea.vmem %s15, %s607
      %s609 = smul.u32 4, %s31
      %v611 = vld [vmem:[%s578] sm:$0xf]
      %v612 = vld [vmem:[%s578 + $0x4] sm:$0xf]
      %v613 = vld [vmem:[%s578 + $0x8] sm:$0xf]
      %v614 = vld [vmem:[%s578 + $0xc] sm:$0xf]
      %v615 = vld [vmem:[%s584] sm:$0xf]
      %v616 = vld [vmem:[%s584 + $0x4] sm:$0xf]
      %v617 = vld [vmem:[%s584 + $0x8] sm:$0xf]
      %v618 = vld [vmem:[%s584 + $0xc] sm:$0xf]
      %v619 = vunpack.c.l.bf16 %v611
      %v620 = vunpack.c.l.bf16 %v612
      %v621 = vunpack.c.l.bf16 %v613
      %v622 = vunpack.c.l.bf16 %v614
      %v623 = vmul.f32 %v619, 0.088388346
      %v624 = vmul.f32 %v620, 0.088388346
      %v625 = vmul.f32 %v621, 0.088388346
      %v626 = vmul.f32 %v622, 0.088388346
      %v627 = vpack.c.bf16 %v624, %v623
      %v628 = vpack.c.bf16 %v626, %v625
      %v633 = vunpack.c.l.b16 %v615
      %v634 = vunpack.c.l.b16 %v616
      %v635 = vunpack.c.l.b16 %v617
      %v636 = vunpack.c.l.b16 %v618
      %v637 = vpack.c.b16 %v634, %v633
      %v638 = vpack.c.b16 %v636, %v635
      %641 = vmatprep.subr.bf16.mxu0 0
      %642 = vmatpush1.bf16.xpose.msra.mxu0 %v637
      %643 = vmatprep.subr.bf16.mxu0 0
      %644 = vmatpush1.bf16.xpose.msra.mxu0 %v638
      %645 = vmatprep.subr.bf16.mxu0 0
      %646 = vmatpush1.bf16.xpose.msra.mxu0 0
      %647 = vmatprep.subr.bf16.mxu0 0
      %648 = vmatpush1.bf16.xpose.msra.mxu0 0
      %649 = vmatprep.subr.bf16.mxu0 0
      %650 = vmatpush1.bf16.xpose.msra.mxu0 0
      %651 = vmatprep.subr.bf16.mxu0 0
      %652 = vmatpush1.bf16.xpose.msra.mxu0 0
      %653 = vmatprep.subr.bf16.mxu0 0
      %654 = vmatpush1.bf16.xpose.msra.mxu0 0
      %655 = vmatprep.subr.bf16.mxu0 0
      %656 = vmatpush1.bf16.xpose.msra.mxu0 0
      %657 = vmatprep.subr.bf16.mxu0 0
      %658 = vmatpush1.bf16.xpose.msra.mxu0 0
      %659 = vmatprep.subr.bf16.mxu0 0
      %660 = vmatpush1.bf16.xpose.msra.mxu0 0
      %661 = vmatprep.subr.bf16.mxu0 0
      %662 = vmatpush1.bf16.xpose.msra.mxu0 0
      %663 = vmatprep.subr.bf16.mxu0 0
      %664 = vmatpush1.bf16.xpose.msra.mxu0 0
      %665 = vmatprep.subr.bf16.mxu0 0
      %666 = vmatpush1.bf16.xpose.msra.mxu0 0
      %667 = vmatprep.subr.bf16.mxu0 0
      %668 = vmatpush1.bf16.xpose.msra.mxu0 0
      %669 = vmatprep.subr.bf16.mxu0 0
      %670 = vmatpush1.bf16.xpose.msra.mxu0 0
      %671 = vmatprep.subr.bf16.mxu0 0
      %672 = vmatpush1.bf16.xpose.msra.mxu0 0
      %673 = vmatprep.mubr.bf16.mxu0 0
      %674 = vmatmul.mubr.bf16.gmra.mrb[0].mxu0 %v627
      %v675 = vpop.f32.mrb[0].mxu0
      %v676 = vadd.f32 0.0, %v675
      %v677 = vpop.f32.mrb[0].mxu0
      %v678 = vpop.f32.mrb[0].mxu0
      %v679 = vadd.f32 0.0, %v678
      %v680 = vpop.f32.mrb[0].mxu0
      %681 = vmatprep.mubr.bf16.mxu0 0
      %682 = vmatmul.mubr.bf16.gmra.mrb[0].mxu0 %v628
      %v683 = vpop.f32.mrb[0].mxu0
      %v684 = vadd.f32 0.0, %v683
      %v685 = vpop.f32.mrb[0].mxu0
      %v686 = vpop.f32.mrb[0].mxu0
      %v687 = vadd.f32 0.0, %v686
      %v688 = vpop.f32.mrb[0].mxu0
      %689 = vdwg.mxu0
      %vm690 = vcmask 261120
      %v691 = vsel %vm690, %v676, -inf
      %692 = vmax.xlane.f32.xlu0 %v691
      %v693 = vpop.xlane.xlu0 %692
      %v694 = vsel %vm690, %v679, -inf
      %695 = vmax.xlane.f32.xlu0 %v694
      %v696 = vpop.xlane.xlu0 %695
      %v697 = vsel %vm690, %v684, -inf
      %698 = vmax.xlane.f32.xlu0 %v697
      %v699 = vpop.xlane.xlu0 %698
      %v700 = vsel %vm690, %v687, -inf
      %701 = vmax.xlane.f32.xlu0 %v700
      %v702 = vpop.xlane.xlu0 %701
      %v703 = vsub.f32 %v676, %v693
      %v704 = vsub.f32 %v679, %v696
      %v705 = vsub.f32 %v684, %v699
      %v706 = vsub.f32 %v687, %v702
      %v707 = vmul.f32 %v703, 1.442695
      %v708 = vpow.pop %v707
      %v709 = vmul.f32 %v704, 1.442695
      %v710 = vpow.pop %v709
      %v711 = vmul.f32 %v705, 1.442695
      %v712 = vpow.pop %v711
      %v713 = vmul.f32 %v706, 1.442695
      %v714 = vpow.pop %v713
      %v715 = vsel %vm690, %v708, 0.0
      %716 = vadd.xlane.f32.xlu0 %v715
      %v717 = vpop.xlane.xlu0 %716
      %v718 = vsel %vm690, %v710, 0.0
      %719 = vadd.xlane.f32.xlu0 %v718
      %v720 = vpop.xlane.xlu0 %719
      %v721 = vsel %vm690, %v712, 0.0
      %722 = vadd.xlane.f32.xlu0 %v721
      %v723 = vpop.xlane.xlu0 %722
      %v724 = vsel %vm690, %v714, 0.0
      %725 = vadd.xlane.f32.xlu0 %v724
      %v726 = vpop.xlane.xlu0 %725
      %v727 = vrcp.pop %v717
      %v728 = vrcp.pop %v720
      %v729 = vrcp.pop %v723
      %v730 = vrcp.pop %v726
      %v731 = vmul.f32 %v708, %v727
      %v732 = vmul.f32 %v710, %v728
      %v733 = vmul.f32 %v712, %v729
      %v734 = vmul.f32 %v714, %v730
      %v735 = vpack.c.bf16 %v732, %v731
      %v736 = vpack.c.bf16 %v734, %v733
      %v737 = vld [vmem:[%s589] sm:$0xf]
      %v738 = vld [vmem:[%s589 + $0x4] sm:$0xf]
      %v739 = vld [vmem:[%s589 + $0x8] sm:$0xf]
      %v740 = vld [vmem:[%s589 + $0xc] sm:$0xf]
      %v745 = vunpack.c.l.b16 %v737
      %v746 = vunpack.c.l.b16 %v738
      %v747 = vunpack.c.l.b16 %v739
      %v748 = vunpack.c.l.b16 %v740
      %v749 = vpack.c.b16 %v746, %v745
      %v750 = vpack.c.b16 %v748, %v747
      %v754 = vsel %vm690, %v735, 0
      %v757 = vsel %vm690, %v736, 0
      %759 = vmatprep.subr.bf16.mxu0 0
      %760 = vmatpush1.bf16.msra.mxu0 %v749
      %761 = vmatprep.subr.bf16.mxu0 0
      %762 = vmatpush1.bf16.msra.mxu0 %v750
      %763 = vmatprep.subr.bf16.mxu0 0
      %764 = vmatpush1.bf16.msra.mxu0 0
      %765 = vmatprep.subr.bf16.mxu0 0
      %766 = vmatpush1.bf16.msra.mxu0 0
      %767 = vmatprep.subr.bf16.mxu0 0
      %768 = vmatpush1.bf16.msra.mxu0 0
      %769 = vmatprep.subr.bf16.mxu0 0
      %770 = vmatpush1.bf16.msra.mxu0 0
      %771 = vmatprep.subr.bf16.mxu0 0
      %772 = vmatpush1.bf16.msra.mxu0 0
      %773 = vmatprep.subr.bf16.mxu0 0
      %774 = vmatpush1.bf16.msra.mxu0 0
      %775 = vmatprep.subr.bf16.mxu0 0
      %776 = vmatpush1.bf16.msra.mxu0 0
      %777 = vmatprep.subr.bf16.mxu0 0
      %778 = vmatpush1.bf16.msra.mxu0 0
      %779 = vmatprep.subr.bf16.mxu0 0
      %780 = vmatpush1.bf16.msra.mxu0 0
      %781 = vmatprep.subr.bf16.mxu0 0
      %782 = vmatpush1.bf16.msra.mxu0 0
      %783 = vmatprep.subr.bf16.mxu0 0
      %784 = vmatpush1.bf16.msra.mxu0 0
      %785 = vmatprep.subr.bf16.mxu0 0
      %786 = vmatpush1.bf16.msra.mxu0 0
      %787 = vmatprep.subr.bf16.mxu0 0
      %788 = vmatpush1.bf16.msra.mxu0 0
      %789 = vmatprep.subr.bf16.mxu0 0
      %790 = vmatpush1.bf16.msra.mxu0 0
      %791 = vmatprep.mubr.bf16.mxu0 0
      %792 = vmatmul.mubr.bf16.gmra.mrb[0].mxu0 %v754
      %v793 = vpop.f32.mrb[0].mxu0
      %v794 = vadd.f32 0.0, %v793
      %v795 = vpop.f32.mrb[0].mxu0
      %v796 = vpop.f32.mrb[0].mxu0
      %v797 = vadd.f32 0.0, %v796
      %v798 = vpop.f32.mrb[0].mxu0
      %799 = vmatprep.mubr.bf16.mxu0 0
      %800 = vmatmul.mubr.bf16.gmra.mrb[0].mxu0 %v757
      %v801 = vpop.f32.mrb[0].mxu0
      %v802 = vadd.f32 0.0, %v801
      %v803 = vpop.f32.mrb[0].mxu0
      %v804 = vpop.f32.mrb[0].mxu0
      %v805 = vadd.f32 0.0, %v804
      %v806 = vpop.f32.mrb[0].mxu0
      %807 = vdwg.mxu0
      %v808 = vld [vmem:[%s598] sm:$0xff]
      %v809 = vld [vmem:[%s598 + $0x8] sm:$0xff]
      %v810 = vld [vmem:[%s598 + $0x10] sm:$0xff]
      %v811 = vld [vmem:[%s598 + $0x18] sm:$0xff]
      %v812 = vsub.f32 %v794, %v808
      %v813 = vsub.f32 %v797, %v809
      %v814 = vsub.f32 %v802, %v810
      %v815 = vsub.f32 %v805, %v811
      %v816 = vld [vmem:[%s4] sm:$0xf]
      %v817 = vld [vmem:[%s4 + $0x4] sm:$0xf]
      %v818 = vld [vmem:[%s4 + $0x8] sm:$0xf]
      %v819 = vld [vmem:[%s4 + $0xc] sm:$0xf]
      %v820 = vld [vmem:[%s4 + $0x10] sm:$0xf]
      %v821 = vld [vmem:[%s4 + $0x14] sm:$0xf]
      %v822 = vld [vmem:[%s4 + $0x18] sm:$0xf]
      %v823 = vld [vmem:[%s4 + $0x1c] sm:$0xf]
      %v824 = vld [vmem:[%s4 + $0x20] sm:$0xf]
      %v825 = vld [vmem:[%s4 + $0x24] sm:$0xf]
      %v826 = vld [vmem:[%s4 + $0x28] sm:$0xf]
      %v827 = vld [vmem:[%s4 + $0x2c] sm:$0xf]
      %v828 = vld [vmem:[%s4 + $0x30] sm:$0xf]
      %v829 = vld [vmem:[%s4 + $0x34] sm:$0xf]
      %v830 = vld [vmem:[%s4 + $0x38] sm:$0xf]
      %v831 = vld [vmem:[%s4 + $0x3c] sm:$0xf]
      %v832 = vld [vmem:[%s5] sm:$0x1]
      %v834 = vlaneseq
      %v835 = vshrl.u32 %v834, 7
      %v836 = vsub.s32 0, %v835
      %v837 = vrot.slane %v832, %v836
      %v843 = vunpack.c.l.b16 %v611
      %v844 = vunpack.c.l.b16 %v612
      %v845 = vunpack.c.l.b16 %v613
      %v846 = vunpack.c.l.b16 %v614
      %v847 = vpack.c.b16 %v844, %v843
      %v848 = vpack.c.b16 %v846, %v845
      %v867 = vunpack.c.l.b16 %v816
      %v868 = vunpack.c.l.b16 %v817
      %v869 = vunpack.c.l.b16 %v818
      %v870 = vunpack.c.l.b16 %v819
      %v871 = vunpack.c.l.b16 %v820
      %v872 = vunpack.c.l.b16 %v821
      %v873 = vunpack.c.l.b16 %v822
      %v874 = vunpack.c.l.b16 %v823
      %v875 = vunpack.c.l.b16 %v824
      %v876 = vunpack.c.l.b16 %v825
      %v877 = vunpack.c.l.b16 %v826
      %v878 = vunpack.c.l.b16 %v827
      %v879 = vunpack.c.l.b16 %v828
      %v880 = vunpack.c.l.b16 %v829
      %v881 = vunpack.c.l.b16 %v830
      %v882 = vunpack.c.l.b16 %v831
      %v883 = vpack.c.b16 %v868, %v867
      %v884 = vpack.c.b16 %v870, %v869
      %v885 = vpack.c.b16 %v872, %v871
      %v886 = vpack.c.b16 %v874, %v873
      %v887 = vpack.c.b16 %v876, %v875
      %v888 = vpack.c.b16 %v878, %v877
      %v889 = vpack.c.b16 %v880, %v879
      %v890 = vpack.c.b16 %v882, %v881
      %899 = vmatprep.subr.bf16.mxu0 0
      %900 = vmatpush1.bf16.msra.mxu0 %v883
      %901 = vmatprep.subr.bf16.mxu0 0
      %902 = vmatpush1.bf16.msra.mxu0 %v884
      %903 = vmatprep.subr.bf16.mxu0 0
      %904 = vmatpush1.bf16.msra.mxu0 %v885
      %905 = vmatprep.subr.bf16.mxu0 0
      %906 = vmatpush1.bf16.msra.mxu0 %v886
      %907 = vmatprep.subr.bf16.mxu0 0
      %908 = vmatpush1.bf16.msra.mxu0 %v887
      %909 = vmatprep.subr.bf16.mxu0 0
      %910 = vmatpush1.bf16.msra.mxu0 %v888
      %911 = vmatprep.subr.bf16.mxu0 0
      %912 = vmatpush1.bf16.msra.mxu0 %v889
      %913 = vmatprep.subr.bf16.mxu0 0
      %914 = vmatpush1.bf16.msra.mxu0 %v890
      %915 = vmatprep.subr.bf16.mxu0 0
      %916 = vmatpush1.bf16.msra.mxu0 0
      %917 = vmatprep.subr.bf16.mxu0 0
      %918 = vmatpush1.bf16.msra.mxu0 0
      %919 = vmatprep.subr.bf16.mxu0 0
      %920 = vmatpush1.bf16.msra.mxu0 0
      %921 = vmatprep.subr.bf16.mxu0 0
      %922 = vmatpush1.bf16.msra.mxu0 0
      %923 = vmatprep.subr.bf16.mxu0 0
      %924 = vmatpush1.bf16.msra.mxu0 0
      %925 = vmatprep.subr.bf16.mxu0 0
      %926 = vmatpush1.bf16.msra.mxu0 0
      %927 = vmatprep.subr.bf16.mxu0 0
      %928 = vmatpush1.bf16.msra.mxu0 0
      %929 = vmatprep.subr.bf16.mxu0 0
      %930 = vmatpush1.bf16.msra.mxu0 0
      %931 = vmatprep.mubr.bf16.mxu0 0
      %932 = vmatmul.mubr.bf16.gmra.mrb[0].mxu0 %v847
      %v933 = vpop.f32.mrb[0].mxu0
      %v934 = vadd.f32 %v837, %v933
      %v935 = vpop.f32.mrb[0].mxu0
      %v936 = vpop.f32.mrb[0].mxu0
      %v937 = vadd.f32 %v837, %v936
      %v938 = vpop.f32.mrb[0].mxu0
      %939 = vmatprep.mubr.bf16.mxu0 0
      %940 = vmatmul.mubr.bf16.gmra.mrb[0].mxu0 %v848
      %v941 = vpop.f32.mrb[0].mxu0
      %v942 = vadd.f32 %v837, %v941
      %v943 = vpop.f32.mrb[0].mxu0
      %v944 = vpop.f32.mrb[0].mxu0
      %v945 = vadd.f32 %v837, %v944
      %v946 = vpop.f32.mrb[0].mxu0
      %947 = vdwg.mxu0
      %v948 = vmax.f32 %v934, 0.0
      %v949 = vmax.f32 %v937, 0.0
      %v950 = vmax.f32 %v942, 0.0
      %v951 = vmax.f32 %v945, 0.0
      %v952 = vpack.c.bf16 %v949, %v948
      %v953 = vpack.c.bf16 %v951, %v950
      %v954 = vld [vmem:[%s6] sm:$0xf]
      %v955 = vld [vmem:[%s6 + $0x4] sm:$0xf]
      %v956 = vld [vmem:[%s6 + $0x8] sm:$0xf]
      %v957 = vld [vmem:[%s6 + $0xc] sm:$0xf]
      %v958 = vld [vmem:[%s6 + $0x10] sm:$0xf]
      %v959 = vld [vmem:[%s6 + $0x14] sm:$0xf]
      %v960 = vld [vmem:[%s6 + $0x18] sm:$0xf]
      %v961 = vld [vmem:[%s6 + $0x1c] sm:$0xf]
      %v962 = vld [vmem:[%s6 + $0x20] sm:$0xf]
      %v963 = vld [vmem:[%s6 + $0x24] sm:$0xf]
      %v964 = vld [vmem:[%s6 + $0x28] sm:$0xf]
      %v965 = vld [vmem:[%s6 + $0x2c] sm:$0xf]
      %v966 = vld [vmem:[%s6 + $0x30] sm:$0xf]
      %v967 = vld [vmem:[%s6 + $0x34] sm:$0xf]
      %v968 = vld [vmem:[%s6 + $0x38] sm:$0xf]
      %v969 = vld [vmem:[%s6 + $0x3c] sm:$0xf]
      %v970 = vld [vmem:[%s7] sm:$0x1]
      %v972 = vlaneseq
      %v973 = vshrl.u32 %v972, 7
      %v974 = vsub.s32 0, %v973
      %v975 = vrot.slane %v970, %v974
      %v993 = vunpack.c.l.b16 %v954
      %v994 = vunpack.c.l.b16 %v955
      %v995 = vunpack.c.l.b16 %v956
      %v996 = vunpack.c.l.b16 %v957
      %v997 = vunpack.c.l.b16 %v958
      %v998 = vunpack.c.l.b16 %v959
      %v999 = vunpack.c.l.b16 %v960
      %v1000 = vunpack.c.l.b16 %v961
      %v1001 = vunpack.c.l.b16 %v962
      %v1002 = vunpack.c.l.b16 %v963
      %v1003 = vunpack.c.l.b16 %v964
      %v1004 = vunpack.c.l.b16 %v965
      %v1005 = vunpack.c.l.b16 %v966
      %v1006 = vunpack.c.l.b16 %v967
      %v1007 = vunpack.c.l.b16 %v968
      %v1008 = vunpack.c.l.b16 %v969
      %v1009 = vpack.c.b16 %v994, %v993
      %v1010 = vpack.c.b16 %v996, %v995
      %v1011 = vpack.c.b16 %v998, %v997
      %v1012 = vpack.c.b16 %v1000, %v999
      %v1013 = vpack.c.b16 %v1002, %v1001
      %v1014 = vpack.c.b16 %v1004, %v1003
      %v1015 = vpack.c.b16 %v1006, %v1005
      %v1016 = vpack.c.b16 %v1008, %v1007
      %1025 = vmatprep.subr.bf16.mxu0 0
      %1026 = vmatpush1.bf16.msra.mxu0 %v1009
      %1027 = vmatprep.subr.bf16.mxu0 0
      %1028 = vmatpush1.bf16.msra.mxu0 %v1010
      %1029 = vmatprep.subr.bf16.mxu0 0
      %1030 = vmatpush1.bf16.msra.mxu0 %v1011
      %1031 = vmatprep.subr.bf16.mxu0 0
      %1032 = vmatpush1.bf16.msra.mxu0 %v1012
      %1033 = vmatprep.subr.bf16.mxu0 0
      %1034 = vmatpush1.bf16.msra.mxu0 %v1013
      %1035 = vmatprep.subr.bf16.mxu0 0
      %1036 = vmatpush1.bf16.msra.mxu0 %v1014
      %1037 = vmatprep.subr.bf16.mxu0 0
      %1038 = vmatpush1.bf16.msra.mxu0 %v1015
      %1039 = vmatprep.subr.bf16.mxu0 0
      %1040 = vmatpush1.bf16.msra.mxu0 %v1016
      %1041 = vmatprep.subr.bf16.mxu0 0
      %1042 = vmatpush1.bf16.msra.mxu0 0
      %1043 = vmatprep.subr.bf16.mxu0 0
      %1044 = vmatpush1.bf16.msra.mxu0 0
      %1045 = vmatprep.subr.bf16.mxu0 0
      %1046 = vmatpush1.bf16.msra.mxu0 0
      %1047 = vmatprep.subr.bf16.mxu0 0
      %1048 = vmatpush1.bf16.msra.mxu0 0
      %1049 = vmatprep.subr.bf16.mxu0 0
      %1050 = vmatpush1.bf16.msra.mxu0 0
      %1051 = vmatprep.subr.bf16.mxu0 0
      %1052 = vmatpush1.bf16.msra.mxu0 0
      %1053 = vmatprep.subr.bf16.mxu0 0
      %1054 = vmatpush1.bf16.msra.mxu0 0
      %1055 = vmatprep.subr.bf16.mxu0 0
      %1056 = vmatpush1.bf16.msra.mxu0 0
      %1057 = vmatprep.mubr.bf16.mxu0 0
      %1058 = vmatmul.mubr.bf16.gmra.mrb[0].mxu0 %v952
      %v1059 = vpop.f32.mrb[0].mxu0
      %v1060 = vadd.f32 %v975, %v1059
      %v1061 = vpop.f32.mrb[0].mxu0
      %v1062 = vpop.f32.mrb[0].mxu0
      %v1063 = vadd.f32 %v975, %v1062
      %v1064 = vpop.f32.mrb[0].mxu0
      %1065 = vmatprep.mubr.bf16.mxu0 0
      %1066 = vmatmul.mubr.bf16.gmra.mrb[0].mxu0 %v953
      %v1067 = vpop.f32.mrb[0].mxu0
      %v1068 = vadd.f32 %v975, %v1067
      %v1069 = vpop.f32.mrb[0].mxu0
      %v1070 = vpop.f32.mrb[0].mxu0
      %v1071 = vadd.f32 %v975, %v1070
      %v1072 = vpop.f32.mrb[0].mxu0
      %1073 = vdwg.mxu0
      %v1074 = vmax.f32 %v1060, 0.0
      %v1075 = vmax.f32 %v1063, 0.0
      %v1076 = vmax.f32 %v1068, 0.0
      %v1077 = vmax.f32 %v1071, 0.0
      %v1078 = vpack.c.bf16 %v1075, %v1074
      %v1079 = vpack.c.bf16 %v1077, %v1076
      %v1080 = vld [vmem:[%s8] sm:$0xf]
      %v1081 = vld [vmem:[%s8 + $0x4] sm:$0xf]
      %v1082 = vld [vmem:[%s8 + $0x8] sm:$0xf]
      %v1083 = vld [vmem:[%s8 + $0xc] sm:$0xf]
      %v1084 = vld [vmem:[%s8 + $0x10] sm:$0xf]
      %v1085 = vld [vmem:[%s8 + $0x14] sm:$0xf]
      %v1086 = vld [vmem:[%s8 + $0x18] sm:$0xf]
      %v1087 = vld [vmem:[%s8 + $0x1c] sm:$0xf]
      %v1088 = vld [vmem:[%s8 + $0x20] sm:$0xf]
      %v1089 = vld [vmem:[%s8 + $0x24] sm:$0xf]
      %v1090 = vld [vmem:[%s8 + $0x28] sm:$0xf]
      %v1091 = vld [vmem:[%s8 + $0x2c] sm:$0xf]
      %v1092 = vld [vmem:[%s8 + $0x30] sm:$0xf]
      %v1093 = vld [vmem:[%s8 + $0x34] sm:$0xf]
      %v1094 = vld [vmem:[%s8 + $0x38] sm:$0xf]
      %v1095 = vld [vmem:[%s8 + $0x3c] sm:$0xf]
      %v1096 = vld [vmem:[%s9] sm:$0x1]
      %v1098 = vlaneseq
      %v1099 = vshrl.u32 %v1098, 7
      %v1100 = vsub.s32 0, %v1099
      %v1101 = vrot.slane %v1096, %v1100
      %v1119 = vunpack.c.l.b16 %v1080
      %v1120 = vunpack.c.l.b16 %v1081
      %v1121 = vunpack.c.l.b16 %v1082
      %v1122 = vunpack.c.l.b16 %v1083
      %v1123 = vunpack.c.l.b16 %v1084
      %v1124 = vunpack.c.l.b16 %v1085
      %v1125 = vunpack.c.l.b16 %v1086
      %v1126 = vunpack.c.l.b16 %v1087
      %v1127 = vunpack.c.l.b16 %v1088
      %v1128 = vunpack.c.l.b16 %v1089
      %v1129 = vunpack.c.l.b16 %v1090
      %v1130 = vunpack.c.l.b16 %v1091
      %v1131 = vunpack.c.l.b16 %v1092
      %v1132 = vunpack.c.l.b16 %v1093
      %v1133 = vunpack.c.l.b16 %v1094
      %v1134 = vunpack.c.l.b16 %v1095
      %v1135 = vpack.c.b16 %v1120, %v1119
      %v1136 = vpack.c.b16 %v1122, %v1121
      %v1137 = vpack.c.b16 %v1124, %v1123
      %v1138 = vpack.c.b16 %v1126, %v1125
      %v1139 = vpack.c.b16 %v1128, %v1127
      %v1140 = vpack.c.b16 %v1130, %v1129
      %v1141 = vpack.c.b16 %v1132, %v1131
      %v1142 = vpack.c.b16 %v1134, %v1133
      %1151 = vmatprep.subr.bf16.mxu0 0
      %1152 = vmatpush1.bf16.msra.mxu0 %v1135
      %1153 = vmatprep.subr.bf16.mxu0 0
      %1154 = vmatpush1.bf16.msra.mxu0 %v1136
      %1155 = vmatprep.subr.bf16.mxu0 0
      %1156 = vmatpush1.bf16.msra.mxu0 %v1137
      %1157 = vmatprep.subr.bf16.mxu0 0
      %1158 = vmatpush1.bf16.msra.mxu0 %v1138
      %1159 = vmatprep.subr.bf16.mxu0 0
      %1160 = vmatpush1.bf16.msra.mxu0 %v1139
      %1161 = vmatprep.subr.bf16.mxu0 0
      %1162 = vmatpush1.bf16.msra.mxu0 %v1140
      %1163 = vmatprep.subr.bf16.mxu0 0
      %1164 = vmatpush1.bf16.msra.mxu0 %v1141
      %1165 = vmatprep.subr.bf16.mxu0 0
      %1166 = vmatpush1.bf16.msra.mxu0 %v1142
      %1167 = vmatprep.subr.bf16.mxu0 0
      %1168 = vmatpush1.bf16.msra.mxu0 0
      %1169 = vmatprep.subr.bf16.mxu0 0
      %1170 = vmatpush1.bf16.msra.mxu0 0
      %1171 = vmatprep.subr.bf16.mxu0 0
      %1172 = vmatpush1.bf16.msra.mxu0 0
      %1173 = vmatprep.subr.bf16.mxu0 0
      %1174 = vmatpush1.bf16.msra.mxu0 0
      %1175 = vmatprep.subr.bf16.mxu0 0
      %1176 = vmatpush1.bf16.msra.mxu0 0
      %1177 = vmatprep.subr.bf16.mxu0 0
      %1178 = vmatpush1.bf16.msra.mxu0 0
      %1179 = vmatprep.subr.bf16.mxu0 0
      %1180 = vmatpush1.bf16.msra.mxu0 0
      %1181 = vmatprep.subr.bf16.mxu0 0
      %1182 = vmatpush1.bf16.msra.mxu0 0
      %1183 = vmatprep.mubr.bf16.mxu0 0
      %1184 = vmatmul.mubr.bf16.gmra.mrb[0].mxu0 %v1078
      %v1185 = vpop.f32.mrb[0].mxu0
      %v1186 = vadd.f32 %v1101, %v1185
      %v1187 = vpop.f32.mrb[0].mxu0
      %v1188 = vpop.f32.mrb[0].mxu0
      %v1189 = vadd.f32 %v1101, %v1188
      %v1190 = vpop.f32.mrb[0].mxu0
      %1191 = vmatprep.mubr.bf16.mxu0 0
      %1192 = vmatmul.mubr.bf16.gmra.mrb[0].mxu0 %v1079
      %v1193 = vpop.f32.mrb[0].mxu0
      %v1194 = vadd.f32 %v1101, %v1193
      %v1195 = vpop.f32.mrb[0].mxu0
      %v1196 = vpop.f32.mrb[0].mxu0
      %v1197 = vadd.f32 %v1101, %v1196
      %v1198 = vpop.f32.mrb[0].mxu0
      %1199 = vdwg.mxu0
      %v1200 = vmax.f32 %v1186, 0.0
      %v1201 = vmax.f32 %v1189, 0.0
      %v1202 = vmax.f32 %v1194, 0.0
      %v1203 = vmax.f32 %v1197, 0.0
      %v1204 = vpack.c.bf16 %v1201, %v1200
      %v1205 = vpack.c.bf16 %v1203, %v1202
      %v1206 = vld [vmem:[%s10] sm:$0xf]
      %v1207 = vld [vmem:[%s10 + $0x4] sm:$0xf]
      %v1208 = vld [vmem:[%s10 + $0x8] sm:$0xf]
      %v1209 = vld [vmem:[%s10 + $0xc] sm:$0xf]
      %v1210 = vld [vmem:[%s10 + $0x10] sm:$0xf]
      %v1211 = vld [vmem:[%s10 + $0x14] sm:$0xf]
      %v1212 = vld [vmem:[%s10 + $0x18] sm:$0xf]
      %v1213 = vld [vmem:[%s10 + $0x1c] sm:$0xf]
      %v1214 = vld [vmem:[%s10 + $0x20] sm:$0xf]
      %v1215 = vld [vmem:[%s10 + $0x24] sm:$0xf]
      %v1216 = vld [vmem:[%s10 + $0x28] sm:$0xf]
      %v1217 = vld [vmem:[%s10 + $0x2c] sm:$0xf]
      %v1218 = vld [vmem:[%s10 + $0x30] sm:$0xf]
      %v1219 = vld [vmem:[%s10 + $0x34] sm:$0xf]
      %v1220 = vld [vmem:[%s10 + $0x38] sm:$0xf]
      %v1221 = vld [vmem:[%s10 + $0x3c] sm:$0xf]
      %v1222 = vld [vmem:[%s11] sm:$0x1]
      %v1224 = vlaneseq
      %v1225 = vshrl.u32 %v1224, 7
      %v1226 = vsub.s32 0, %v1225
      %v1227 = vrot.slane %v1222, %v1226
      %v1245 = vunpack.c.l.b16 %v1206
      %v1246 = vunpack.c.l.b16 %v1207
      %v1247 = vunpack.c.l.b16 %v1208
      %v1248 = vunpack.c.l.b16 %v1209
      %v1249 = vunpack.c.l.b16 %v1210
      %v1250 = vunpack.c.l.b16 %v1211
      %v1251 = vunpack.c.l.b16 %v1212
      %v1252 = vunpack.c.l.b16 %v1213
      %v1253 = vunpack.c.l.b16 %v1214
      %v1254 = vunpack.c.l.b16 %v1215
      %v1255 = vunpack.c.l.b16 %v1216
      %v1256 = vunpack.c.l.b16 %v1217
      %v1257 = vunpack.c.l.b16 %v1218
      %v1258 = vunpack.c.l.b16 %v1219
      %v1259 = vunpack.c.l.b16 %v1220
      %v1260 = vunpack.c.l.b16 %v1221
      %v1261 = vpack.c.b16 %v1246, %v1245
      %v1262 = vpack.c.b16 %v1248, %v1247
      %v1263 = vpack.c.b16 %v1250, %v1249
      %v1264 = vpack.c.b16 %v1252, %v1251
      %v1265 = vpack.c.b16 %v1254, %v1253
      %v1266 = vpack.c.b16 %v1256, %v1255
      %v1267 = vpack.c.b16 %v1258, %v1257
      %v1268 = vpack.c.b16 %v1260, %v1259
      %1277 = vmatprep.subr.bf16.mxu0 0
      %1278 = vmatpush1.bf16.msra.mxu0 %v1261
      %1279 = vmatprep.subr.bf16.mxu0 0
      %1280 = vmatpush1.bf16.msra.mxu0 %v1262
      %1281 = vmatprep.subr.bf16.mxu0 0
      %1282 = vmatpush1.bf16.msra.mxu0 %v1263
      %1283 = vmatprep.subr.bf16.mxu0 0
      %1284 = vmatpush1.bf16.msra.mxu0 %v1264
      %1285 = vmatprep.subr.bf16.mxu0 0
      %1286 = vmatpush1.bf16.msra.mxu0 %v1265
      %1287 = vmatprep.subr.bf16.mxu0 0
      %1288 = vmatpush1.bf16.msra.mxu0 %v1266
      %1289 = vmatprep.subr.bf16.mxu0 0
      %1290 = vmatpush1.bf16.msra.mxu0 %v1267
      %1291 = vmatprep.subr.bf16.mxu0 0
      %1292 = vmatpush1.bf16.msra.mxu0 %v1268
      %1293 = vmatprep.subr.bf16.mxu0 0
      %1294 = vmatpush1.bf16.msra.mxu0 0
      %1295 = vmatprep.subr.bf16.mxu0 0
      %1296 = vmatpush1.bf16.msra.mxu0 0
      %1297 = vmatprep.subr.bf16.mxu0 0
      %1298 = vmatpush1.bf16.msra.mxu0 0
      %1299 = vmatprep.subr.bf16.mxu0 0
      %1300 = vmatpush1.bf16.msra.mxu0 0
      %1301 = vmatprep.subr.bf16.mxu0 0
      %1302 = vmatpush1.bf16.msra.mxu0 0
      %1303 = vmatprep.subr.bf16.mxu0 0
      %1304 = vmatpush1.bf16.msra.mxu0 0
      %1305 = vmatprep.subr.bf16.mxu0 0
      %1306 = vmatpush1.bf16.msra.mxu0 0
      %1307 = vmatprep.subr.bf16.mxu0 0
      %1308 = vmatpush1.bf16.msra.mxu0 0
      %1309 = vmatprep.mubr.bf16.mxu0 0
      %1310 = vmatmul.mubr.bf16.gmra.mrb[0].mxu0 %v1204
      %v1311 = vpop.f32.mrb[0].mxu0
      %v1312 = vadd.f32 %v1227, %v1311
      %v1313 = vpop.f32.mrb[0].mxu0
      %v1314 = vpop.f32.mrb[0].mxu0
      %v1315 = vadd.f32 %v1227, %v1314
      %v1316 = vpop.f32.mrb[0].mxu0
      %1317 = vmatprep.mubr.bf16.mxu0 0
      %1318 = vmatmul.mubr.bf16.gmra.mrb[0].mxu0 %v1205
      %v1319 = vpop.f32.mrb[0].mxu0
      %v1320 = vadd.f32 %v1227, %v1319
      %v1321 = vpop.f32.mrb[0].mxu0
      %v1322 = vpop.f32.mrb[0].mxu0
      %v1323 = vadd.f32 %v1227, %v1322
      %v1324 = vpop.f32.mrb[0].mxu0
      %1325 = vdwg.mxu0
      %v1326 = vmax.f32 %v1312, 0.0
      %v1327 = vmax.f32 %v1315, 0.0
      %v1328 = vmax.f32 %v1320, 0.0
      %v1329 = vmax.f32 %v1323, 0.0
      %v1330 = vpack.c.bf16 %v1327, %v1326
      %v1331 = vpack.c.bf16 %v1329, %v1328
      %v1332 = vld [vmem:[%s12] sm:$0xff]
      %v1333 = vld [vmem:[%s12 + $0x8] sm:$0xff]
      %v1334 = vld [vmem:[%s12 + $0x10] sm:$0xff]
      %v1335 = vld [vmem:[%s12 + $0x18] sm:$0xff]
      %v1336 = vld [vmem:[%s12 + $0x20] sm:$0xff]
      %v1337 = vld [vmem:[%s12 + $0x28] sm:$0xff]
      %v1338 = vld [vmem:[%s12 + $0x30] sm:$0xff]
      %v1339 = vld [vmem:[%s12 + $0x38] sm:$0xff]
      %v1340 = vld [vmem:[%s12 + $0x40] sm:$0xff]
      %v1341 = vld [vmem:[%s12 + $0x48] sm:$0xff]
      %v1342 = vld [vmem:[%s12 + $0x50] sm:$0xff]
      %v1343 = vld [vmem:[%s12 + $0x58] sm:$0xff]
      %v1344 = vld [vmem:[%s12 + $0x60] sm:$0xff]
      %v1345 = vld [vmem:[%s12 + $0x68] sm:$0xff]
      %v1346 = vld [vmem:[%s12 + $0x70] sm:$0xff]
      %v1347 = vld [vmem:[%s12 + $0x78] sm:$0xff]
      %v1348 = vld [vmem:[%s12 + $0x80] sm:$0xff]
      %v1349 = vld [vmem:[%s12 + $0x88] sm:$0xff]
      %v1350 = vld [vmem:[%s12 + $0x90] sm:$0xff]
      %v1351 = vld [vmem:[%s12 + $0x98] sm:$0xff]
      %v1352 = vld [vmem:[%s12 + $0xa0] sm:$0xff]
      %v1353 = vld [vmem:[%s12 + $0xa8] sm:$0xff]
      %v1354 = vld [vmem:[%s12 + $0xb0] sm:$0xff]
      %v1355 = vld [vmem:[%s12 + $0xb8] sm:$0xff]
      %v1356 = vld [vmem:[%s12 + $0xc0] sm:$0xff]
      %v1357 = vld [vmem:[%s12 + $0xc8] sm:$0xff]
      %v1358 = vld [vmem:[%s12 + $0xd0] sm:$0xff]
      %v1359 = vld [vmem:[%s12 + $0xd8] sm:$0xff]
      %v1360 = vld [vmem:[%s12 + $0xe0] sm:$0xff]
      %v1361 = vld [vmem:[%s12 + $0xe8] sm:$0xff]
      %v1362 = vld [vmem:[%s12 + $0xf0] sm:$0xff]
      %v1363 = vld [vmem:[%s12 + $0xf8] sm:$0xff]
      %v1364 = vld [vmem:[%s13] sm:$0xf]
      %v1366 = vlaneseq
      %v1367 = vshrl.u32 %v1366, 7
      %v1368 = vsub.s32 0, %v1367
      %v1369 = vrot.slane %v1364, %v1368
      %v1370 = vlaneseq
      %v1371 = vshrl.u32 %v1370, 7
      %v1372 = vsub.s32 1, %v1371
      %v1373 = vrot.slane %v1364, %v1372
      %v1374 = vlaneseq
      %v1375 = vshrl.u32 %v1374, 7
      %v1376 = vsub.s32 2, %v1375
      %v1377 = vrot.slane %v1364, %v1376
      %v1378 = vlaneseq
      %v1379 = vshrl.u32 %v1378, 7
      %v1380 = vsub.s32 3, %v1379
      %v1381 = vrot.slane %v1364, %v1380
      %v1418 = vunpack.c.l.b16 %v1332
      %v1419 = vunpack.c.h.b16 %v1332
      %v1420 = vunpack.c.l.b16 %v1333
      %v1421 = vunpack.c.h.b16 %v1333
      %v1422 = vunpack.c.l.b16 %v1334
      %v1423 = vunpack.c.h.b16 %v1334
      %v1424 = vunpack.c.l.b16 %v1335
      %v1425 = vunpack.c.h.b16 %v1335
      %v1426 = vunpack.c.l.b16 %v1336
      %v1427 = vunpack.c.h.b16 %v1336
      %v1428 = vunpack.c.l.b16 %v1337
      %v1429 = vunpack.c.h.b16 %v1337
      %v1430 = vunpack.c.l.b16 %v1338
      %v1431 = vunpack.c.h.b16 %v1338
      %v1432 = vunpack.c.l.b16 %v1339
      %v1433 = vunpack.c.h.b16 %v1339
      %v1434 = vunpack.c.l.b16 %v1340
      %v1435 = vunpack.c.h.b16 %v1340
      %v1436 = vunpack.c.l.b16 %v1341
      %v1437 = vunpack.c.h.b16 %v1341
      %v1438 = vunpack.c.l.b16 %v1342
      %v1439 = vunpack.c.h.b16 %v1342
      %v1440 = vunpack.c.l.b16 %v1343
      %v1441 = vunpack.c.h.b16 %v1343
      %v1442 = vunpack.c.l.b16 %v1344
      %v1443 = vunpack.c.h.b16 %v1344
      %v1444 = vunpack.c.l.b16 %v1345
      %v1445 = vunpack.c.h.b16 %v1345
      %v1446 = vunpack.c.l.b16 %v1346
      %v1447 = vunpack.c.h.b16 %v1346
      %v1448 = vunpack.c.l.b16 %v1347
      %v1449 = vunpack.c.h.b16 %v1347
      %v1450 = vunpack.c.l.b16 %v1348
      %v1451 = vunpack.c.h.b16 %v1348
      %v1452 = vunpack.c.l.b16 %v1349
      %v1453 = vunpack.c.h.b16 %v1349
      %v1454 = vunpack.c.l.b16 %v1350
      %v1455 = vunpack.c.h.b16 %v1350
      %v1456 = vunpack.c.l.b16 %v1351
      %v1457 = vunpack.c.h.b16 %v1351
      %v1458 = vunpack.c.l.b16 %v1352
      %v1459 = vunpack.c.h.b16 %v1352
      %v1460 = vunpack.c.l.b16 %v1353
      %v1461 = vunpack.c.h.b16 %v1353
      %v1462 = vunpack.c.l.b16 %v1354
      %v1463 = vunpack.c.h.b16 %v1354
      %v1464 = vunpack.c.l.b16 %v1355
      %v1465 = vunpack.c.h.b16 %v1355
      %v1466 = vunpack.c.l.b16 %v1356
      %v1467 = vunpack.c.h.b16 %v1356
      %v1468 = vunpack.c.l.b16 %v1357
      %v1469 = vunpack.c.h.b16 %v1357
      %v1470 = vunpack.c.l.b16 %v1358
      %v1471 = vunpack.c.h.b16 %v1358
      %v1472 = vunpack.c.l.b16 %v1359
      %v1473 = vunpack.c.h.b16 %v1359
      %v1474 = vunpack.c.l.b16 %v1360
      %v1475 = vunpack.c.h.b16 %v1360
      %v1476 = vunpack.c.l.b16 %v1361
      %v1477 = vunpack.c.h.b16 %v1361
      %v1478 = vunpack.c.l.b16 %v1362
      %v1479 = vunpack.c.h.b16 %v1362
      %v1480 = vunpack.c.l.b16 %v1363
      %v1481 = vunpack.c.h.b16 %v1363
      %v1482 = vpack.c.b16 %v1422, %v1418
      %v1483 = vpack.c.b16 %v1423, %v1419
      %v1484 = vpack.c.b16 %v1424, %v1420
      %v1485 = vpack.c.b16 %v1425, %v1421
      %v1486 = vpack.c.b16 %v1430, %v1426
      %v1487 = vpack.c.b16 %v1431, %v1427
      %v1488 = vpack.c.b16 %v1432, %v1428
      %v1489 = vpack.c.b16 %v1433, %v1429
      %v1490 = vpack.c.b16 %v1438, %v1434
      %v1491 = vpack.c.b16 %v1439, %v1435
      %v1492 = vpack.c.b16 %v1440, %v1436
      %v1493 = vpack.c.b16 %v1441, %v1437
      %v1494 = vpack.c.b16 %v1446, %v1442
      %v1495 = vpack.c.b16 %v1447, %v1443
      %v1496 = vpack.c.b16 %v1448, %v1444
      %v1497 = vpack.c.b16 %v1449, %v1445
      %v1498 = vpack.c.b16 %v1454, %v1450
      %v1499 = vpack.c.b16 %v1455, %v1451
      %v1500 = vpack.c.b16 %v1456, %v1452
      %v1501 = vpack.c.b16 %v1457, %v1453
      %v1502 = vpack.c.b16 %v1462, %v1458
      %v1503 = vpack.c.b16 %v1463, %v1459
      %v1504 = vpack.c.b16 %v1464, %v1460
      %v1505 = vpack.c.b16 %v1465, %v1461
      %v1506 = vpack.c.b16 %v1470, %v1466
      %v1507 = vpack.c.b16 %v1471, %v1467
      %v1508 = vpack.c.b16 %v1472, %v1468
      %v1509 = vpack.c.b16 %v1473, %v1469
      %v1510 = vpack.c.b16 %v1478, %v1474
      %v1511 = vpack.c.b16 %v1479, %v1475
      %v1512 = vpack.c.b16 %v1480, %v1476
      %v1513 = vpack.c.b16 %v1481, %v1477
      %1546 = vmatprep.subr.bf16.mxu0 %v1483
      %1547 = vmatpush1.bf16.msra.mxu0 %v1482
      %1548 = vmatprep.subr.bf16.mxu0 %v1487
      %1549 = vmatpush1.bf16.msra.mxu0 %v1486
      %1550 = vmatprep.subr.bf16.mxu0 %v1491
      %1551 = vmatpush1.bf16.msra.mxu0 %v1490
      %1552 = vmatprep.subr.bf16.mxu0 %v1495
      %1553 = vmatpush1.bf16.msra.mxu0 %v1494
      %1554 = vmatprep.subr.bf16.mxu0 %v1499
      %1555 = vmatpush1.bf16.msra.mxu0 %v1498
      %1556 = vmatprep.subr.bf16.mxu0 %v1503
      %1557 = vmatpush1.bf16.msra.mxu0 %v1502
      %1558 = vmatprep.subr.bf16.mxu0 %v1507
      %1559 = vmatpush1.bf16.msra.mxu0 %v1506
      %1560 = vmatprep.subr.bf16.mxu0 %v1511
      %1561 = vmatpush1.bf16.msra.mxu0 %v1510
      %1562 = vmatprep.subr.bf16.mxu0 0
      %1563 = vmatpush1.bf16.msra.mxu0 0
      %1564 = vmatprep.subr.bf16.mxu0 0
      %1565 = vmatpush1.bf16.msra.mxu0 0
      %1566 = vmatprep.subr.bf16.mxu0 0
      %1567 = vmatpush1.bf16.msra.mxu0 0
      %1568 = vmatprep.subr.bf16.mxu0 0
      %1569 = vmatpush1.bf16.msra.mxu0 0
      %1570 = vmatprep.subr.bf16.mxu0 0
      %1571 = vmatpush1.bf16.msra.mxu0 0
      %1572 = vmatprep.subr.bf16.mxu0 0
      %1573 = vmatpush1.bf16.msra.mxu0 0
      %1574 = vmatprep.subr.bf16.mxu0 0
      %1575 = vmatpush1.bf16.msra.mxu0 0
      %1576 = vmatprep.subr.bf16.mxu0 0
      %1577 = vmatpush1.bf16.msra.mxu0 0
      %1578 = vmatprep.mubr.bf16.mxu0 0
      %1579 = vmatmul.mubr.bf16.gmra.mrb[0].mxu0 %v1330
      %v1580 = vpop.f32.mrb[0].mxu0
      %v1581 = vadd.f32 %v1369, %v1580
      %v1582 = vpop.f32.mrb[0].mxu0
      %v1583 = vadd.f32 %v1373, %v1582
      %v1584 = vpop.f32.mrb[0].mxu0
      %v1585 = vadd.f32 %v1369, %v1584
      %v1586 = vpop.f32.mrb[0].mxu0
      %v1587 = vadd.f32 %v1373, %v1586
      %1588 = vmatprep.mubr.bf16.mxu0 0
      %1589 = vmatmul.mubr.bf16.gmra.mrb[0].mxu0 %v1331
      %v1590 = vpop.f32.mrb[0].mxu0
      %v1591 = vadd.f32 %v1369, %v1590
      %v1592 = vpop.f32.mrb[0].mxu0
      %v1593 = vadd.f32 %v1373, %v1592
      %v1594 = vpop.f32.mrb[0].mxu0
      %v1595 = vadd.f32 %v1369, %v1594
      %v1596 = vpop.f32.mrb[0].mxu0
      %v1597 = vadd.f32 %v1373, %v1596
      %1598 = vdwg.mxu0
      %1599 = vmatprep.subr.bf16.mxu0 %v1485
      %1600 = vmatpush1.bf16.msra.mxu0 %v1484
      %1601 = vmatprep.subr.bf16.mxu0 %v1489
      %1602 = vmatpush1.bf16.msra.mxu0 %v1488
      %1603 = vmatprep.subr.bf16.mxu0 %v1493
      %1604 = vmatpush1.bf16.msra.mxu0 %v1492
      %1605 = vmatprep.subr.bf16.mxu0 %v1497
      %1606 = vmatpush1.bf16.msra.mxu0 %v1496
      %1607 = vmatprep.subr.bf16.mxu0 %v1501
      %1608 = vmatpush1.bf16.msra.mxu0 %v1500
      %1609 = vmatprep.subr.bf16.mxu0 %v1505
      %1610 = vmatpush1.bf16.msra.mxu0 %v1504
      %1611 = vmatprep.subr.bf16.mxu0 %v1509
      %1612 = vmatpush1.bf16.msra.mxu0 %v1508
      %1613 = vmatprep.subr.bf16.mxu0 %v1513
      %1614 = vmatpush1.bf16.msra.mxu0 %v1512
      %1615 = vmatprep.subr.bf16.mxu0 0
      %1616 = vmatpush1.bf16.msra.mxu0 0
      %1617 = vmatprep.subr.bf16.mxu0 0
      %1618 = vmatpush1.bf16.msra.mxu0 0
      %1619 = vmatprep.subr.bf16.mxu0 0
      %1620 = vmatpush1.bf16.msra.mxu0 0
      %1621 = vmatprep.subr.bf16.mxu0 0
      %1622 = vmatpush1.bf16.msra.mxu0 0
      %1623 = vmatprep.subr.bf16.mxu0 0
      %1624 = vmatpush1.bf16.msra.mxu0 0
      %1625 = vmatprep.subr.bf16.mxu0 0
      %1626 = vmatpush1.bf16.msra.mxu0 0
      %1627 = vmatprep.subr.bf16.mxu0 0
      %1628 = vmatpush1.bf16.msra.mxu0 0
      %1629 = vmatprep.subr.bf16.mxu0 0
      %1630 = vmatpush1.bf16.msra.mxu0 0
      %1631 = vmatprep.mubr.bf16.mxu0 0
      %1632 = vmatmul.mubr.bf16.gmra.mrb[0].mxu0 %v1330
      %v1633 = vpop.f32.mrb[0].mxu0
      %v1634 = vadd.f32 %v1377, %v1633
      %v1635 = vpop.f32.mrb[0].mxu0
      %v1636 = vadd.f32 %v1381, %v1635
      %v1637 = vpop.f32.mrb[0].mxu0
      %v1638 = vadd.f32 %v1377, %v1637
      %v1639 = vpop.f32.mrb[0].mxu0
      %v1640 = vadd.f32 %v1381, %v1639
      %1641 = vmatprep.mubr.bf16.mxu0 0
      %1642 = vmatmul.mubr.bf16.gmra.mrb[0].mxu0 %v1331
      %v1643 = vpop.f32.mrb[0].mxu0
      %v1644 = vadd.f32 %v1377, %v1643
      %v1645 = vpop.f32.mrb[0].mxu0
      %v1646 = vadd.f32 %v1381, %v1645
      %v1647 = vpop.f32.mrb[0].mxu0
      %v1648 = vadd.f32 %v1377, %v1647
      %v1649 = vpop.f32.mrb[0].mxu0
      %v1650 = vadd.f32 %v1381, %v1649
      %1651 = vdwg.mxu0
      %v1652 = vmax.f32 %v1581, 0.0
      %v1653 = vmax.f32 %v1583, 0.0
      %v1654 = vmax.f32 %v1634, 0.0
      %v1655 = vmax.f32 %v1636, 0.0
      %v1656 = vmax.f32 %v1585, 0.0
      %v1657 = vmax.f32 %v1587, 0.0
      %v1658 = vmax.f32 %v1638, 0.0
      %v1659 = vmax.f32 %v1640, 0.0
      %v1660 = vmax.f32 %v1591, 0.0
      %v1661 = vmax.f32 %v1593, 0.0
      %v1662 = vmax.f32 %v1644, 0.0
      %v1663 = vmax.f32 %v1646, 0.0
      %v1664 = vmax.f32 %v1595, 0.0
      %v1665 = vmax.f32 %v1597, 0.0
      %v1666 = vmax.f32 %v1648, 0.0
      %v1667 = vmax.f32 %v1650, 0.0
      %v1668 = vpack.c.bf16 %v1656, %v1652
      %v1669 = vpack.c.bf16 %v1657, %v1653
      %v1670 = vpack.c.bf16 %v1658, %v1654
      %v1671 = vpack.c.bf16 %v1659, %v1655
      %v1672 = vpack.c.bf16 %v1664, %v1660
      %v1673 = vpack.c.bf16 %v1665, %v1661
      %v1674 = vpack.c.bf16 %v1666, %v1662
      %v1675 = vpack.c.bf16 %v1667, %v1663
      %v1676 = vld [vmem:[%s14] sm:$0xf]
      %v1677 = vld [vmem:[%s14 + $0x4] sm:$0xf]
      %v1678 = vld [vmem:[%s14 + $0x8] sm:$0xf]
      %v1679 = vld [vmem:[%s14 + $0xc] sm:$0xf]
      %v1680 = vld [vmem:[%s14 + $0x10] sm:$0xf]
      %v1681 = vld [vmem:[%s14 + $0x14] sm:$0xf]
      %v1682 = vld [vmem:[%s14 + $0x18] sm:$0xf]
      %v1683 = vld [vmem:[%s14 + $0x1c] sm:$0xf]
      %v1684 = vld [vmem:[%s14 + $0x20] sm:$0xf]
      %v1685 = vld [vmem:[%s14 + $0x24] sm:$0xf]
      %v1686 = vld [vmem:[%s14 + $0x28] sm:$0xf]
      %v1687 = vld [vmem:[%s14 + $0x2c] sm:$0xf]
      %v1688 = vld [vmem:[%s14 + $0x30] sm:$0xf]
      %v1689 = vld [vmem:[%s14 + $0x34] sm:$0xf]
      %v1690 = vld [vmem:[%s14 + $0x38] sm:$0xf]
      %v1691 = vld [vmem:[%s14 + $0x3c] sm:$0xf]
      %v1692 = vld [vmem:[%s14 + $0x40] sm:$0xf]
      %v1693 = vld [vmem:[%s14 + $0x44] sm:$0xf]
      %v1694 = vld [vmem:[%s14 + $0x48] sm:$0xf]
      %v1695 = vld [vmem:[%s14 + $0x4c] sm:$0xf]
      %v1696 = vld [vmem:[%s14 + $0x50] sm:$0xf]
      %v1697 = vld [vmem:[%s14 + $0x54] sm:$0xf]
      %v1698 = vld [vmem:[%s14 + $0x58] sm:$0xf]
      %v1699 = vld [vmem:[%s14 + $0x5c] sm:$0xf]
      %v1700 = vld [vmem:[%s14 + $0x60] sm:$0xf]
      %v1701 = vld [vmem:[%s14 + $0x64] sm:$0xf]
      %v1702 = vld [vmem:[%s14 + $0x68] sm:$0xf]
      %v1703 = vld [vmem:[%s14 + $0x6c] sm:$0xf]
      %v1704 = vld [vmem:[%s14 + $0x70] sm:$0xf]
      %v1705 = vld [vmem:[%s14 + $0x74] sm:$0xf]
      %v1706 = vld [vmem:[%s14 + $0x78] sm:$0xf]
      %v1707 = vld [vmem:[%s14 + $0x7c] sm:$0xf]
      %v1708 = vld [vmem:[%s14 + $0x80] sm:$0xf]
      %v1709 = vld [vmem:[%s14 + $0x84] sm:$0xf]
      %v1710 = vld [vmem:[%s14 + $0x88] sm:$0xf]
      %v1711 = vld [vmem:[%s14 + $0x8c] sm:$0xf]
      %v1712 = vld [vmem:[%s14 + $0x90] sm:$0xf]
      %v1713 = vld [vmem:[%s14 + $0x94] sm:$0xf]
      %v1714 = vld [vmem:[%s14 + $0x98] sm:$0xf]
      %v1715 = vld [vmem:[%s14 + $0x9c] sm:$0xf]
      %v1716 = vld [vmem:[%s14 + $0xa0] sm:$0xf]
      %v1717 = vld [vmem:[%s14 + $0xa4] sm:$0xf]
      %v1718 = vld [vmem:[%s14 + $0xa8] sm:$0xf]
      %v1719 = vld [vmem:[%s14 + $0xac] sm:$0xf]
      %v1720 = vld [vmem:[%s14 + $0xb0] sm:$0xf]
      %v1721 = vld [vmem:[%s14 + $0xb4] sm:$0xf]
      %v1722 = vld [vmem:[%s14 + $0xb8] sm:$0xf]
      %v1723 = vld [vmem:[%s14 + $0xbc] sm:$0xf]
      %v1724 = vld [vmem:[%s14 + $0xc0] sm:$0xf]
      %v1725 = vld [vmem:[%s14 + $0xc4] sm:$0xf]
      %v1726 = vld [vmem:[%s14 + $0xc8] sm:$0xf]
      %v1727 = vld [vmem:[%s14 + $0xcc] sm:$0xf]
      %v1728 = vld [vmem:[%s14 + $0xd0] sm:$0xf]
      %v1729 = vld [vmem:[%s14 + $0xd4] sm:$0xf]
      %v1730 = vld [vmem:[%s14 + $0xd8] sm:$0xf]
      %v1731 = vld [vmem:[%s14 + $0xdc] sm:$0xf]
      %v1732 = vld [vmem:[%s14 + $0xe0] sm:$0xf]
      %v1733 = vld [vmem:[%s14 + $0xe4] sm:$0xf]
      %v1734 = vld [vmem:[%s14 + $0xe8] sm:$0xf]
      %v1735 = vld [vmem:[%s14 + $0xec] sm:$0xf]
      %v1736 = vld [vmem:[%s14 + $0xf0] sm:$0xf]
      %v1737 = vld [vmem:[%s14 + $0xf4] sm:$0xf]
      %v1738 = vld [vmem:[%s14 + $0xf8] sm:$0xf]
      %v1739 = vld [vmem:[%s14 + $0xfc] sm:$0xf]
      %v1804 = vunpack.c.l.b16 %v1676
      %v1805 = vunpack.c.l.b16 %v1677
      %v1806 = vunpack.c.l.b16 %v1678
      %v1807 = vunpack.c.l.b16 %v1679
      %v1808 = vunpack.c.l.b16 %v1680
      %v1809 = vunpack.c.l.b16 %v1681
      %v1810 = vunpack.c.l.b16 %v1682
      %v1811 = vunpack.c.l.b16 %v1683
      %v1812 = vunpack.c.l.b16 %v1684
      %v1813 = vunpack.c.l.b16 %v1685
      %v1814 = vunpack.c.l.b16 %v1686
      %v1815 = vunpack.c.l.b16 %v1687
      %v1816 = vunpack.c.l.b16 %v1688
      %v1817 = vunpack.c.l.b16 %v1689
      %v1818 = vunpack.c.l.b16 %v1690
      %v1819 = vunpack.c.l.b16 %v1691
      %v1820 = vunpack.c.l.b16 %v1692
      %v1821 = vunpack.c.l.b16 %v1693
      %v1822 = vunpack.c.l.b16 %v1694
      %v1823 = vunpack.c.l.b16 %v1695
      %v1824 = vunpack.c.l.b16 %v1696
      %v1825 = vunpack.c.l.b16 %v1697
      %v1826 = vunpack.c.l.b16 %v1698
      %v1827 = vunpack.c.l.b16 %v1699
      %v1828 = vunpack.c.l.b16 %v1700
      %v1829 = vunpack.c.l.b16 %v1701
      %v1830 = vunpack.c.l.b16 %v1702
      %v1831 = vunpack.c.l.b16 %v1703
      %v1832 = vunpack.c.l.b16 %v1704
      %v1833 = vunpack.c.l.b16 %v1705
      %v1834 = vunpack.c.l.b16 %v1706
      %v1835 = vunpack.c.l.b16 %v1707
      %v1836 = vunpack.c.l.b16 %v1708
      %v1837 = vunpack.c.l.b16 %v1709
      %v1838 = vunpack.c.l.b16 %v1710
      %v1839 = vunpack.c.l.b16 %v1711
      %v1840 = vunpack.c.l.b16 %v1712
      %v1841 = vunpack.c.l.b16 %v1713
      %v1842 = vunpack.c.l.b16 %v1714
      %v1843 = vunpack.c.l.b16 %v1715
      %v1844 = vunpack.c.l.b16 %v1716
      %v1845 = vunpack.c.l.b16 %v1717
      %v1846 = vunpack.c.l.b16 %v1718
      %v1847 = vunpack.c.l.b16 %v1719
      %v1848 = vunpack.c.l.b16 %v1720
      %v1849 = vunpack.c.l.b16 %v1721
      %v1850 = vunpack.c.l.b16 %v1722
      %v1851 = vunpack.c.l.b16 %v1723
      %v1852 = vunpack.c.l.b16 %v1724
      %v1853 = vunpack.c.l.b16 %v1725
      %v1854 = vunpack.c.l.b16 %v1726
      %v1855 = vunpack.c.l.b16 %v1727
      %v1856 = vunpack.c.l.b16 %v1728
      %v1857 = vunpack.c.l.b16 %v1729
      %v1858 = vunpack.c.l.b16 %v1730
      %v1859 = vunpack.c.l.b16 %v1731
      %v1860 = vunpack.c.l.b16 %v1732
      %v1861 = vunpack.c.l.b16 %v1733
      %v1862 = vunpack.c.l.b16 %v1734
      %v1863 = vunpack.c.l.b16 %v1735
      %v1864 = vunpack.c.l.b16 %v1736
      %v1865 = vunpack.c.l.b16 %v1737
      %v1866 = vunpack.c.l.b16 %v1738
      %v1867 = vunpack.c.l.b16 %v1739
      %v1868 = vpack.c.b16 %v1805, %v1804
      %v1869 = vpack.c.b16 %v1807, %v1806
      %v1870 = vpack.c.b16 %v1809, %v1808
      %v1871 = vpack.c.b16 %v1811, %v1810
      %v1872 = vpack.c.b16 %v1813, %v1812
      %v1873 = vpack.c.b16 %v1815, %v1814
      %v1874 = vpack.c.b16 %v1817, %v1816
      %v1875 = vpack.c.b16 %v1819, %v1818
      %v1876 = vpack.c.b16 %v1821, %v1820
      %v1877 = vpack.c.b16 %v1823, %v1822
      %v1878 = vpack.c.b16 %v1825, %v1824
      %v1879 = vpack.c.b16 %v1827, %v1826
      %v1880 = vpack.c.b16 %v1829, %v1828
      %v1881 = vpack.c.b16 %v1831, %v1830
      %v1882 = vpack.c.b16 %v1833, %v1832
      %v1883 = vpack.c.b16 %v1835, %v1834
      %v1884 = vpack.c.b16 %v1837, %v1836
      %v1885 = vpack.c.b16 %v1839, %v1838
      %v1886 = vpack.c.b16 %v1841, %v1840
      %v1887 = vpack.c.b16 %v1843, %v1842
      %v1888 = vpack.c.b16 %v1845, %v1844
      %v1889 = vpack.c.b16 %v1847, %v1846
      %v1890 = vpack.c.b16 %v1849, %v1848
      %v1891 = vpack.c.b16 %v1851, %v1850
      %v1892 = vpack.c.b16 %v1853, %v1852
      %v1893 = vpack.c.b16 %v1855, %v1854
      %v1894 = vpack.c.b16 %v1857, %v1856
      %v1895 = vpack.c.b16 %v1859, %v1858
      %v1896 = vpack.c.b16 %v1861, %v1860
      %v1897 = vpack.c.b16 %v1863, %v1862
      %v1898 = vpack.c.b16 %v1865, %v1864
      %v1899 = vpack.c.b16 %v1867, %v1866
      %1932 = vmatprep.subr.bf16.mxu0 0
      %1933 = vmatpush1.bf16.msra.mxu0 %v1868
      %1934 = vmatprep.subr.bf16.mxu0 0
      %1935 = vmatpush1.bf16.msra.mxu0 %v1869
      %1936 = vmatprep.subr.bf16.mxu0 0
      %1937 = vmatpush1.bf16.msra.mxu0 %v1870
      %1938 = vmatprep.subr.bf16.mxu0 0
      %1939 = vmatpush1.bf16.msra.mxu0 %v1871
      %1940 = vmatprep.subr.bf16.mxu0 0
      %1941 = vmatpush1.bf16.msra.mxu0 %v1872
      %1942 = vmatprep.subr.bf16.mxu0 0
      %1943 = vmatpush1.bf16.msra.mxu0 %v1873
      %1944 = vmatprep.subr.bf16.mxu0 0
      %1945 = vmatpush1.bf16.msra.mxu0 %v1874
      %1946 = vmatprep.subr.bf16.mxu0 0
      %1947 = vmatpush1.bf16.msra.mxu0 %v1875
      %1948 = vmatprep.subr.bf16.mxu0 0
      %1949 = vmatpush1.bf16.msra.mxu0 %v1876
      %1950 = vmatprep.subr.bf16.mxu0 0
      %1951 = vmatpush1.bf16.msra.mxu0 %v1877
      %1952 = vmatprep.subr.bf16.mxu0 0
      %1953 = vmatpush1.bf16.msra.mxu0 %v1878
      %1954 = vmatprep.subr.bf16.mxu0 0
      %1955 = vmatpush1.bf16.msra.mxu0 %v1879
      %1956 = vmatprep.subr.bf16.mxu0 0
      %1957 = vmatpush1.bf16.msra.mxu0 %v1880
      %1958 = vmatprep.subr.bf16.mxu0 0
      %1959 = vmatpush1.bf16.msra.mxu0 %v1881
      %1960 = vmatprep.subr.bf16.mxu0 0
      %1961 = vmatpush1.bf16.msra.mxu0 %v1882
      %1962 = vmatprep.subr.bf16.mxu0 0
      %1963 = vmatpush1.bf16.msra.mxu0 %v1883
      %1964 = vmatprep.mubr.bf16.mxu0 %v1669
      %1965 = vmatmul.mubr.bf16.gmra.mrb[0].mxu0 %v1668
      %v1966 = vpop.f32.mrb[0].mxu0
      %v1967 = vadd.f32 0.0, %v1966
      %v1968 = vpop.f32.mrb[0].mxu0
      %v1969 = vpop.f32.mrb[0].mxu0
      %v1970 = vadd.f32 0.0, %v1969
      %v1971 = vpop.f32.mrb[0].mxu0
      %1972 = vmatprep.mubr.bf16.mxu0 %v1673
      %1973 = vmatmul.mubr.bf16.gmra.mrb[0].mxu0 %v1672
      %v1974 = vpop.f32.mrb[0].mxu0
      %v1975 = vadd.f32 0.0, %v1974
      %v1976 = vpop.f32.mrb[0].mxu0
      %v1977 = vpop.f32.mrb[0].mxu0
      %v1978 = vadd.f32 0.0, %v1977
      %v1979 = vpop.f32.mrb[0].mxu0
      %1980 = vdwg.mxu0
      %1981 = vmatprep.subr.bf16.mxu0 0
      %1982 = vmatpush1.bf16.msra.mxu0 %v1884
      %1983 = vmatprep.subr.bf16.mxu0 0
      %1984 = vmatpush1.bf16.msra.mxu0 %v1885
      %1985 = vmatprep.subr.bf16.mxu0 0
      %1986 = vmatpush1.bf16.msra.mxu0 %v1886
      %1987 = vmatprep.subr.bf16.mxu0 0
      %1988 = vmatpush1.bf16.msra.mxu0 %v1887
      %1989 = vmatprep.subr.bf16.mxu0 0
      %1990 = vmatpush1.bf16.msra.mxu0 %v1888
      %1991 = vmatprep.subr.bf16.mxu0 0
      %1992 = vmatpush1.bf16.msra.mxu0 %v1889
      %1993 = vmatprep.subr.bf16.mxu0 0
      %1994 = vmatpush1.bf16.msra.mxu0 %v1890
      %1995 = vmatprep.subr.bf16.mxu0 0
      %1996 = vmatpush1.bf16.msra.mxu0 %v1891
      %1997 = vmatprep.subr.bf16.mxu0 0
      %1998 = vmatpush1.bf16.msra.mxu0 %v1892
      %1999 = vmatprep.subr.bf16.mxu0 0
      %2000 = vmatpush1.bf16.msra.mxu0 %v1893
      %2001 = vmatprep.subr.bf16.mxu0 0
      %2002 = vmatpush1.bf16.msra.mxu0 %v1894
      %2003 = vmatprep.subr.bf16.mxu0 0
      %2004 = vmatpush1.bf16.msra.mxu0 %v1895
      %2005 = vmatprep.subr.bf16.mxu0 0
      %2006 = vmatpush1.bf16.msra.mxu0 %v1896
      %2007 = vmatprep.subr.bf16.mxu0 0
      %2008 = vmatpush1.bf16.msra.mxu0 %v1897
      %2009 = vmatprep.subr.bf16.mxu0 0
      %2010 = vmatpush1.bf16.msra.mxu0 %v1898
      %2011 = vmatprep.subr.bf16.mxu0 0
      %2012 = vmatpush1.bf16.msra.mxu0 %v1899
      %2013 = vmatprep.mubr.bf16.mxu0 %v1671
      %2014 = vmatmul.mubr.bf16.gmra.mrb[0].mxu0 %v1670
      %v2015 = vpop.f32.mrb[0].mxu0
      %v2016 = vadd.f32 %v1967, %v2015
      %v2017 = vpop.f32.mrb[0].mxu0
      %v2018 = vpop.f32.mrb[0].mxu0
      %v2019 = vadd.f32 %v1970, %v2018
      %v2020 = vpop.f32.mrb[0].mxu0
      %2021 = vmatprep.mubr.bf16.mxu0 %v1675
      %2022 = vmatmul.mubr.bf16.gmra.mrb[0].mxu0 %v1674
      %v2023 = vpop.f32.mrb[0].mxu0
      %v2024 = vadd.f32 %v1975, %v2023
      %v2025 = vpop.f32.mrb[0].mxu0
      %v2026 = vpop.f32.mrb[0].mxu0
      %v2027 = vadd.f32 %v1978, %v2026
      %v2028 = vpop.f32.mrb[0].mxu0
      %2029 = vdwg.mxu0
      %v2030 = vadd.f32 %v812, %v2016
      %v2031 = vadd.f32 %v813, %v2019
      %v2032 = vadd.f32 %v814, %v2024
      %v2033 = vadd.f32 %v815, %v2027
      %vm2034 = vcmask 31744
      %2035 = vst.msk [vmem:[%s608] sm:$0xff] %vm2034, %v2030
      %2036 = vst.msk [vmem:[%s608 + $0x8] sm:$0xff] %vm2034, %v2031
      %2037 = vst.msk [vmem:[%s608 + $0x10] sm:$0xff] %vm2034, %v2032
      %2038 = vst.msk [vmem:[%s608 + $0x18] sm:$0xff] %vm2034, %v2033
      %s2039 = smul.u32 4, %s31
      %p2040 = scmp.lt.s32.totalorder %s30, 1
      %s2041 = scalar_select %p2040, %s30, 1
      %p2042 = scmp.lt.s32.totalorder %s2039, 3
      %s2043 = scalar_select %p2042, %s2039, 3
      %s2044 = smul.addr %s2041, 4
      %s2045 = sadd.s32 %s2043, %s2044
      %s2046 = smul.addr %s2045, 8
      %s2047 = scalar_lea.vmem %s15, %s2046
      // Predicated region
      $region81: #{correspondence_flow_diff_emb_mlp.7} parent=79 // pred_check
        %p2048 = pneg %p397
      $region82: #{correspondence_flow_diff_emb_mlp.7} parent=79 // pred_check_branch
        %2050 = sbr.rel (%p2048) target = $region84
      $region83: #{correspondence_flow_diff_emb_mlp.7} parent=79 // pred_region
        %s2051 = smul.u32 4, %s31
      $region84: #{correspondence_flow_diff_emb_mlp.7} parent=79 // pred_fallthru
        _
    $region80: #{correspondence_flow_diff_emb_mlp.7} parent=5 // pred_fallthru
      _
    %p2052 = scmp.le.s32.totalorder 2, %s21
    // Predicated region
    $region85: #{correspondence_flow_diff_emb_mlp.7} parent=5 // pred_check
      %p2053 = pneg %p2052
    $region86: #{correspondence_flow_diff_emb_mlp.7} parent=5 // pred_check_branch
      %2055 = sbr.rel (%p2053) target = $region88
    $region87: #{correspondence_flow_diff_emb_mlp.7} parent=5 // pred_region
      %s2056 = ssub.s32 %s21, 2
      // Predicated region
      $region89: #{correspondence_flow_diff_emb_mlp.7} parent=87 // pred_check
        %p2057 = pneg %p403
      $region90: #{correspondence_flow_diff_emb_mlp.7} parent=87 // pred_check_branch
        %2059 = sbr.rel (%p2057) target = $region92
      $region91: #{correspondence_flow_diff_emb_mlp.7} parent=87 // pred_region
        %s2060 = smul.u32 4, %s33
        %p2061 = scmp.lt.s32.totalorder %s32, 1
        %s2062 = scalar_select %p2061, %s32, 1
        %p2063 = scmp.lt.s32.totalorder %s2060, 3
        %s2064 = scalar_select %p2063, %s2060, 3
        %s2065 = smul.addr %s2062, 4
        %s2066 = sadd.s32 %s2064, %s2065
        %s2067 = smul.addr %s2066, 8
        %s2068 = scalar_lea.vmem %s15, %s2067
      $region92: #{correspondence_flow_diff_emb_mlp.7} parent=87 // pred_fallthru
        _
    $region88: #{correspondence_flow_diff_emb_mlp.7} parent=5 // pred_fallthru
      _
  $region6: #{correspondence_flow_diff_emb_mlp.7} parent=0 // loop_footer
    %s25 = sadd.s32 1, %s21
  $region7: #{correspondence_flow_diff_emb_mlp.7} parent=0 // loop_footer_branch
    %20 = sbr.rel target = $region3
  $region8: #{correspondence_flow_diff_emb_mlp.7} parent=0 // loop_exit
    _

// kernel: correspondence_flow_diff_emb_mlp.5
$region0: #{correspondence_flow_diff_emb_mlp.5}
  #allocation0 [shape = 'u32[]', space=smem, size = 0x4, offset = 0x4, fixed_abs, tag = 'smem constant byte address 0x4 - core index']
  #allocation1 [shape = 'u32[144,128]{1,0:T(1,128)}', space=vmem, size = 0x12000, scoped, tag = 'internal scratch']
  %s0 = inlined_call_operand.vmem [shape: bf16[2,256,6], index: 0, kind: input, shape index: {}]
  %s1 = inlined_call_operand.vmem [shape: bf16[6,64], index: 1, kind: input, shape index: {}]
  %s2 = inlined_call_operand.vmem [shape: f32[1,64], index: 2, kind: input, shape index: {}]
  %s3 = inlined_call_operand.vmem [shape: bf16[64,64], index: 3, kind: input, shape index: {}]
  %s4 = inlined_call_operand.vmem [shape: f32[1,64], index: 4, kind: input, shape index: {}]
  %s5 = inlined_call_operand.vmem [shape: bf16[64,128], index: 5, kind: input, shape index: {}]
  %s6 = inlined_call_operand.vmem [shape: f32[1,128], index: 6, kind: input, shape index: {}]
  %s7 = inlined_call_operand.vmem [shape: bf16[128,256], index: 7, kind: input, shape index: {}]
  %s8 = inlined_call_operand.vmem [shape: f32[1,256], index: 8, kind: input, shape index: {}]
  %s9 = inlined_call_operand.vmem [shape: bf16[512,128], index: 9, kind: input, shape index: {}]
  %s10 = inlined_call_operand.vmem [shape: f32[1,128], index: 10, kind: input, shape index: {}]
  %s11 = inlined_call_operand.vmem [shape: bf16[128,256], index: 11, kind: input, shape index: {}]
  %s12 = inlined_call_operand.vmem [shape: f32[1,256], index: 12, kind: input, shape index: {}]
  %s13 = inlined_call_operand.vmem [shape: bf16[256,128], index: 13, kind: input, shape index: {}]
  %s14 = inlined_call_operand.vmem [shape: f32[1,128], index: 14, kind: input, shape index: {}]
  %s15 = inlined_call_operand.vmem [shape: bf16[128,128], index: 15, kind: input, shape index: {}]
  %s16 = inlined_call_operand.vmem [shape: f32[1,128], index: 16, kind: input, shape index: {}]
  %s17 = inlined_call_operand.vmem [shape: bf16[2,32,128], index: 17, kind: output, shape index: {}]
  %s18 = sld [smem:[#allocation0]]
  $region101: #{correspondence_flow_diff_emb_mlp.5} parent=0
    _
  %s20 = ssub.s32 1, %s18
  %s21 = scalar_select 0, %s20, %s18
  loop: start=0, step=1, limit=4
  $region2: #{correspondence_flow_diff_emb_mlp.5} parent=0 // loop_pre_header
    _
  $region3: #{correspondence_flow_diff_emb_mlp.5} parent=0 // loop_header
    %s23 = sphi 0, %s27
    %p24 = scmp.ge.s32.totalorder %s23, 4
    %s33 = sphi 0, %s35
    %s36 = sphi 0, %s33
    %s37 = sphi 0, %s36
    %s53 = sphi 0, %s37
    %s57 = sphi 0, %s57
    %s59 = sphi 0, %s57
    %s60 = sphi 0, %s59
    %s74 = sphi 0, %s60
    %s78 = sphi 0, %s78
    %s80 = sphi 0, %s78
    %s81 = sphi 0, %s80
    %s95 = sphi 0, %s81
    %s99 = sphi 0, %s99
    %s101 = sphi 0, %s99
    %s102 = sphi 0, %s101
    %s116 = sphi 0, %s102
    %s120 = sphi 0, %s120
    %s122 = sphi 0, %s120
    %s123 = sphi 0, %s122
    %s137 = sphi 0, %s123
    %s141 = sphi 0, %s141
    %s143 = sphi 0, %s141
    %s144 = sphi 0, %s143
    %s158 = sphi 0, %s144
    %s162 = sphi 0, %s162
    %s164 = sphi 0, %s162
    %s165 = sphi 0, %s164
    %s179 = sphi 0, %s165
    %s183 = sphi 0, %s183
    %s185 = sphi 0, %s183
    %s186 = sphi 0, %s185
    %s200 = sphi 0, %s186
    %s204 = sphi 0, %s204
    %s206 = sphi 0, %s204
    %s207 = sphi 0, %s206
    %s221 = sphi 0, %s207
    %s225 = sphi 0, %s225
    %s227 = sphi 0, %s225
    %s228 = sphi 0, %s227
    %s242 = sphi 0, %s228
    %s246 = sphi 0, %s246
    %s248 = sphi 0, %s246
    %s249 = sphi 0, %s248
    %s263 = sphi 0, %s249
    %s267 = sphi 0, %s267
    %s269 = sphi 0, %s267
    %s270 = sphi 0, %s269
    %s284 = sphi 0, %s270
    %s288 = sphi 0, %s288
    %s290 = sphi 0, %s288
    %s291 = sphi 0, %s290
    %s305 = sphi 0, %s291
    %s309 = sphi 0, %s309
    %s311 = sphi 0, %s309
    %s312 = sphi 0, %s311
    %s326 = sphi 0, %s312
    %s330 = sphi 0, %s330
    %s332 = sphi 0, %s330
    %s333 = sphi 0, %s332
    %s347 = sphi 0, %s333
    %s351 = sphi 0, %s351
    %s353 = sphi 0, %s351
    %s354 = sphi 0, %s353
    %s368 = sphi 0, %s354
    %s372 = sphi 0, %s372
    %s374 = sphi 0, %s372
    %s375 = sphi 0, %s374
    %s389 = sphi 0, %s375
    %s395 = sphi 0, %s397
    %s398 = sphi 0, %s395
    %s399 = sphi 0, %s398
    %s415 = sphi 0, %s399
  $region4: #{correspondence_flow_diff_emb_mlp.5} parent=0 // loop_header_branch
    %26 = sbr.rel (%p24) target = $region8
  $region5: #{correspondence_flow_diff_emb_mlp.5} parent=0 // loop_body
    %s28 = ssub.s32 %s23, 1
    %s29 = ssub.s32 %s23, 2
    %s30 = sadd.s32 %s23, 1
    %s31 = ssub.s32 %s23, %s30
    %p32 = scmp.eq.s32.totalorder %s31, 0
    %s34 = sadd.s32 %s33, 1
    %s35 = scalar_select %p32, %s33, %s34
    %p38 = pneg %p32
    %p39 = scmp.eq.s32.totalorder %s23, 1
    %p40 = por %p38, %p39
    %p41 = scmp.ne.s32.totalorder %s33, %s36
    %p42 = scmp.eq.s32.totalorder %s23, 0
    %p43 = por %p41, %p42
    %p44 = scmp.ne.s32.totalorder %s33, %s36
    %p45 = scmp.eq.s32.totalorder %s28, 1
    %p46 = por %p44, %p45
    %p47 = scmp.ne.s32.totalorder %s36, %s37
    %p48 = scmp.eq.s32.totalorder %s28, 0
    %p49 = por %p47, %p48
    %p50 = scmp.ne.s32.totalorder %s36, %s37
    %p51 = scmp.eq.s32.totalorder %s29, 1
    %p52 = por %p50, %p51
    %p54 = scmp.ne.s32.totalorder %s37, %s53
    %p55 = scmp.eq.s32.totalorder %s29, 0
    %p56 = por %p54, %p55
    %s58 = sadd.s32 %s57, 1
    %p61 = scmp.eq.s32.totalorder %s23, 1
    %p62 = scmp.ne.s32.totalorder %s57, %s59
    %p63 = scmp.eq.s32.totalorder %s23, 0
    %p64 = por %p62, %p63
    %p65 = scmp.ne.s32.totalorder %s57, %s59
    %p66 = scmp.eq.s32.totalorder %s28, 1
    %p67 = por %p65, %p66
    %p68 = scmp.ne.s32.totalorder %s59, %s60
    %p69 = scmp.eq.s32.totalorder %s28, 0
    %p70 = por %p68, %p69
    %p71 = scmp.ne.s32.totalorder %s59, %s60
    %p72 = scmp.eq.s32.totalorder %s29, 1
    %p73 = por %p71, %p72
    %p75 = scmp.ne.s32.totalorder %s60, %s74
    %p76 = scmp.eq.s32.totalorder %s29, 0
    %p77 = por %p75, %p76
    %s79 = sadd.s32 %s78, 1
    %p82 = scmp.eq.s32.totalorder %s23, 1
    %p83 = scmp.ne.s32.totalorder %s78, %s80
    %p84 = scmp.eq.s32.totalorder %s23, 0
    %p85 = por %p83, %p84
    %p86 = scmp.ne.s32.totalorder %s78, %s80
    %p87 = scmp.eq.s32.totalorder %s28, 1
    %p88 = por %p86, %p87
    %p89 = scmp.ne.s32.totalorder %s80, %s81
    %p90 = scmp.eq.s32.totalorder %s28, 0
    %p91 = por %p89, %p90
    %p92 = scmp.ne.s32.totalorder %s80, %s81
    %p93 = scmp.eq.s32.totalorder %s29, 1
    %p94 = por %p92, %p93
    %p96 = scmp.ne.s32.totalorder %s81, %s95
    %p97 = scmp.eq.s32.totalorder %s29, 0
    %p98 = por %p96, %p97
    %s100 = sadd.s32 %s99, 1
    %p103 = scmp.eq.s32.totalorder %s23, 1
    %p104 = scmp.ne.s32.totalorder %s99, %s101
    %p105 = scmp.eq.s32.totalorder %s23, 0
    %p106 = por %p104, %p105
    %p107 = scmp.ne.s32.totalorder %s99, %s101
    %p108 = scmp.eq.s32.totalorder %s28, 1
    %p109 = por %p107, %p108
    %p110 = scmp.ne.s32.totalorder %s101, %s102
    %p111 = scmp.eq.s32.totalorder %s28, 0
    %p112 = por %p110, %p111
    %p113 = scmp.ne.s32.totalorder %s101, %s102
    %p114 = scmp.eq.s32.totalorder %s29, 1
    %p115 = por %p113, %p114
    %p117 = scmp.ne.s32.totalorder %s102, %s116
    %p118 = scmp.eq.s32.totalorder %s29, 0
    %p119 = por %p117, %p118
    %s121 = sadd.s32 %s120, 1
    %p124 = scmp.eq.s32.totalorder %s23, 1
    %p125 = scmp.ne.s32.totalorder %s120, %s122
    %p126 = scmp.eq.s32.totalorder %s23, 0
    %p127 = por %p125, %p126
    %p128 = scmp.ne.s32.totalorder %s120, %s122
    %p129 = scmp.eq.s32.totalorder %s28, 1
    %p130 = por %p128, %p129
    %p131 = scmp.ne.s32.totalorder %s122, %s123
    %p132 = scmp.eq.s32.totalorder %s28, 0
    %p133 = por %p131, %p132
    %p134 = scmp.ne.s32.totalorder %s122, %s123
    %p135 = scmp.eq.s32.totalorder %s29, 1
    %p136 = por %p134, %p135
    %p138 = scmp.ne.s32.totalorder %s123, %s137
    %p139 = scmp.eq.s32.totalorder %s29, 0
    %p140 = por %p138, %p139
    %s142 = sadd.s32 %s141, 1
    %p145 = scmp.eq.s32.totalorder %s23, 1
    %p146 = scmp.ne.s32.totalorder %s141, %s143
    %p147 = scmp.eq.s32.totalorder %s23, 0
    %p148 = por %p146, %p147
    %p149 = scmp.ne.s32.totalorder %s141, %s143
    %p150 = scmp.eq.s32.totalorder %s28, 1
    %p151 = por %p149, %p150
    %p152 = scmp.ne.s32.totalorder %s143, %s144
    %p153 = scmp.eq.s32.totalorder %s28, 0
    %p154 = por %p152, %p153
    %p155 = scmp.ne.s32.totalorder %s143, %s144
    %p156 = scmp.eq.s32.totalorder %s29, 1
    %p157 = por %p155, %p156
    %p159 = scmp.ne.s32.totalorder %s144, %s158
    %p160 = scmp.eq.s32.totalorder %s29, 0
    %p161 = por %p159, %p160
    %s163 = sadd.s32 %s162, 1
    %p166 = scmp.eq.s32.totalorder %s23, 1
    %p167 = scmp.ne.s32.totalorder %s162, %s164
    %p168 = scmp.eq.s32.totalorder %s23, 0
    %p169 = por %p167, %p168
    %p170 = scmp.ne.s32.totalorder %s162, %s164
    %p171 = scmp.eq.s32.totalorder %s28, 1
    %p172 = por %p170, %p171
    %p173 = scmp.ne.s32.totalorder %s164, %s165
    %p174 = scmp.eq.s32.totalorder %s28, 0
    %p175 = por %p173, %p174
    %p176 = scmp.ne.s32.totalorder %s164, %s165
    %p177 = scmp.eq.s32.totalorder %s29, 1
    %p178 = por %p176, %p177
    %p180 = scmp.ne.s32.totalorder %s165, %s179
    %p181 = scmp.eq.s32.totalorder %s29, 0
    %p182 = por %p180, %p181
    %s184 = sadd.s32 %s183, 1
    %p187 = scmp.eq.s32.totalorder %s23, 1
    %p188 = scmp.ne.s32.totalorder %s183, %s185
    %p189 = scmp.eq.s32.totalorder %s23, 0
    %p190 = por %p188, %p189
    %p191 = scmp.ne.s32.totalorder %s183, %s185
    %p192 = scmp.eq.s32.totalorder %s28, 1
    %p193 = por %p191, %p192
    %p194 = scmp.ne.s32.totalorder %s185, %s186
    %p195 = scmp.eq.s32.totalorder %s28, 0
    %p196 = por %p194, %p195
    %p197 = scmp.ne.s32.totalorder %s185, %s186
    %p198 = scmp.eq.s32.totalorder %s29, 1
    %p199 = por %p197, %p198
    %p201 = scmp.ne.s32.totalorder %s186, %s200
    %p202 = scmp.eq.s32.totalorder %s29, 0
    %p203 = por %p201, %p202
    %s205 = sadd.s32 %s204, 1
    %p208 = scmp.eq.s32.totalorder %s23, 1
    %p209 = scmp.ne.s32.totalorder %s204, %s206
    %p210 = scmp.eq.s32.totalorder %s23, 0
    %p211 = por %p209, %p210
    %p212 = scmp.ne.s32.totalorder %s204, %s206
    %p213 = scmp.eq.s32.totalorder %s28, 1
    %p214 = por %p212, %p213
    %p215 = scmp.ne.s32.totalorder %s206, %s207
    %p216 = scmp.eq.s32.totalorder %s28, 0
    %p217 = por %p215, %p216
    %p218 = scmp.ne.s32.totalorder %s206, %s207
    %p219 = scmp.eq.s32.totalorder %s29, 1
    %p220 = por %p218, %p219
    %p222 = scmp.ne.s32.totalorder %s207, %s221
    %p223 = scmp.eq.s32.totalorder %s29, 0
    %p224 = por %p222, %p223
    %s226 = sadd.s32 %s225, 1
    %p229 = scmp.eq.s32.totalorder %s23, 1
    %p230 = scmp.ne.s32.totalorder %s225, %s227
    %p231 = scmp.eq.s32.totalorder %s23, 0
    %p232 = por %p230, %p231
    %p233 = scmp.ne.s32.totalorder %s225, %s227
    %p234 = scmp.eq.s32.totalorder %s28, 1
    %p235 = por %p233, %p234
    %p236 = scmp.ne.s32.totalorder %s227, %s228
    %p237 = scmp.eq.s32.totalorder %s28, 0
    %p238 = por %p236, %p237
    %p239 = scmp.ne.s32.totalorder %s227, %s228
    %p240 = scmp.eq.s32.totalorder %s29, 1
    %p241 = por %p239, %p240
    %p243 = scmp.ne.s32.totalorder %s228, %s242
    %p244 = scmp.eq.s32.totalorder %s29, 0
    %p245 = por %p243, %p244
    %s247 = sadd.s32 %s246, 1
    %p250 = scmp.eq.s32.totalorder %s23, 1
    %p251 = scmp.ne.s32.totalorder %s246, %s248
    %p252 = scmp.eq.s32.totalorder %s23, 0
    %p253 = por %p251, %p252
    %p254 = scmp.ne.s32.totalorder %s246, %s248
    %p255 = scmp.eq.s32.totalorder %s28, 1
    %p256 = por %p254, %p255
    %p257 = scmp.ne.s32.totalorder %s248, %s249
    %p258 = scmp.eq.s32.totalorder %s28, 0
    %p259 = por %p257, %p258
    %p260 = scmp.ne.s32.totalorder %s248, %s249
    %p261 = scmp.eq.s32.totalorder %s29, 1
    %p262 = por %p260, %p261
    %p264 = scmp.ne.s32.totalorder %s249, %s263
    %p265 = scmp.eq.s32.totalorder %s29, 0
    %p266 = por %p264, %p265
    %s268 = sadd.s32 %s267, 1
    %p271 = scmp.eq.s32.totalorder %s23, 1
    %p272 = scmp.ne.s32.totalorder %s267, %s269
    %p273 = scmp.eq.s32.totalorder %s23, 0
    %p274 = por %p272, %p273
    %p275 = scmp.ne.s32.totalorder %s267, %s269
    %p276 = scmp.eq.s32.totalorder %s28, 1
    %p277 = por %p275, %p276
    %p278 = scmp.ne.s32.totalorder %s269, %s270
    %p279 = scmp.eq.s32.totalorder %s28, 0
    %p280 = por %p278, %p279
    %p281 = scmp.ne.s32.totalorder %s269, %s270
    %p282 = scmp.eq.s32.totalorder %s29, 1
    %p283 = por %p281, %p282
    %p285 = scmp.ne.s32.totalorder %s270, %s284
    %p286 = scmp.eq.s32.totalorder %s29, 0
    %p287 = por %p285, %p286
    %s289 = sadd.s32 %s288, 1
    %p292 = scmp.eq.s32.totalorder %s23, 1
    %p293 = scmp.ne.s32.totalorder %s288, %s290
    %p294 = scmp.eq.s32.totalorder %s23, 0
    %p295 = por %p293, %p294
    %p296 = scmp.ne.s32.totalorder %s288, %s290
    %p297 = scmp.eq.s32.totalorder %s28, 1
    %p298 = por %p296, %p297
    %p299 = scmp.ne.s32.totalorder %s290, %s291
    %p300 = scmp.eq.s32.totalorder %s28, 0
    %p301 = por %p299, %p300
    %p302 = scmp.ne.s32.totalorder %s290, %s291
    %p303 = scmp.eq.s32.totalorder %s29, 1
    %p304 = por %p302, %p303
    %p306 = scmp.ne.s32.totalorder %s291, %s305
    %p307 = scmp.eq.s32.totalorder %s29, 0
    %p308 = por %p306, %p307
    %s310 = sadd.s32 %s309, 1
    %p313 = scmp.eq.s32.totalorder %s23, 1
    %p314 = scmp.ne.s32.totalorder %s309, %s311
    %p315 = scmp.eq.s32.totalorder %s23, 0
    %p316 = por %p314, %p315
    %p317 = scmp.ne.s32.totalorder %s309, %s311
    %p318 = scmp.eq.s32.totalorder %s28, 1
    %p319 = por %p317, %p318
    %p320 = scmp.ne.s32.totalorder %s311, %s312
    %p321 = scmp.eq.s32.totalorder %s28, 0
    %p322 = por %p320, %p321
    %p323 = scmp.ne.s32.totalorder %s311, %s312
    %p324 = scmp.eq.s32.totalorder %s29, 1
    %p325 = por %p323, %p324
    %p327 = scmp.ne.s32.totalorder %s312, %s326
    %p328 = scmp.eq.s32.totalorder %s29, 0
    %p329 = por %p327, %p328
    %s331 = sadd.s32 %s330, 1
    %p334 = scmp.eq.s32.totalorder %s23, 1
    %p335 = scmp.ne.s32.totalorder %s330, %s332
    %p336 = scmp.eq.s32.totalorder %s23, 0
    %p337 = por %p335, %p336
    %p338 = scmp.ne.s32.totalorder %s330, %s332
    %p339 = scmp.eq.s32.totalorder %s28, 1
    %p340 = por %p338, %p339
    %p341 = scmp.ne.s32.totalorder %s332, %s333
    %p342 = scmp.eq.s32.totalorder %s28, 0
    %p343 = por %p341, %p342
    %p344 = scmp.ne.s32.totalorder %s332, %s333
    %p345 = scmp.eq.s32.totalorder %s29, 1
    %p346 = por %p344, %p345
    %p348 = scmp.ne.s32.totalorder %s333, %s347
    %p349 = scmp.eq.s32.totalorder %s29, 0
    %p350 = por %p348, %p349
    %s352 = sadd.s32 %s351, 1
    %p355 = scmp.eq.s32.totalorder %s23, 1
    %p356 = scmp.ne.s32.totalorder %s351, %s353
    %p357 = scmp.eq.s32.totalorder %s23, 0
    %p358 = por %p356, %p357
    %p359 = scmp.ne.s32.totalorder %s351, %s353
    %p360 = scmp.eq.s32.totalorder %s28, 1
    %p361 = por %p359, %p360
    %p362 = scmp.ne.s32.totalorder %s353, %s354
    %p363 = scmp.eq.s32.totalorder %s28, 0
    %p364 = por %p362, %p363
    %p365 = scmp.ne.s32.totalorder %s353, %s354
    %p366 = scmp.eq.s32.totalorder %s29, 1
    %p367 = por %p365, %p366
    %p369 = scmp.ne.s32.totalorder %s354, %s368
    %p370 = scmp.eq.s32.totalorder %s29, 0
    %p371 = por %p369, %p370
    %s373 = sadd.s32 %s372, 1
    %p376 = scmp.eq.s32.totalorder %s23, 1
    %p377 = scmp.ne.s32.totalorder %s372, %s374
    %p378 = scmp.eq.s32.totalorder %s23, 0
    %p379 = por %p377, %p378
    %p380 = scmp.ne.s32.totalorder %s372, %s374
    %p381 = scmp.eq.s32.totalorder %s28, 1
    %p382 = por %p380, %p381
    %p383 = scmp.ne.s32.totalorder %s374, %s375
    %p384 = scmp.eq.s32.totalorder %s28, 0
    %p385 = por %p383, %p384
    %p386 = scmp.ne.s32.totalorder %s374, %s375
    %p387 = scmp.eq.s32.totalorder %s29, 1
    %p388 = por %p386, %p387
    %p390 = scmp.ne.s32.totalorder %s375, %s389
    %p391 = scmp.eq.s32.totalorder %s29, 0
    %p392 = por %p390, %p391
    %s393 = ssub.s32 %s23, %s30
    %p394 = scmp.eq.s32.totalorder %s393, 0
    %s396 = sadd.s32 %s395, 1
    %s397 = scalar_select %p394, %s395, %s396
    %p400 = pneg %p394
    %p401 = scmp.eq.s32.totalorder %s23, 1
    %p402 = por %p400, %p401
    %p403 = scmp.ne.s32.totalorder %s395, %s398
    %p404 = scmp.eq.s32.totalorder %s23, 0
    %p405 = por %p403, %p404
    %p406 = scmp.ne.s32.totalorder %s395, %s398
    %p407 = scmp.eq.s32.totalorder %s28, 1
    %p408 = por %p406, %p407
    %p409 = scmp.ne.s32.totalorder %s398, %s399
    %p410 = scmp.eq.s32.totalorder %s28, 0
    %p411 = por %p409, %p410
    %p412 = scmp.ne.s32.totalorder %s398, %s399
    %p413 = scmp.eq.s32.totalorder %s29, 1
    %p414 = por %p412, %p413
    %p416 = scmp.ne.s32.totalorder %s399, %s415
    %p417 = scmp.eq.s32.totalorder %s29, 0
    %p418 = por %p416, %p417
    %p419 = scmp.le.s32.totalorder 1, %s23
    %p420 = scmp.lt.s32.totalorder %s23, 3
    %p421 = pnand %p419, %p420
    %p422 = pneg %p421
    // Predicated region
    $region9: #{correspondence_flow_diff_emb_mlp.5} parent=5 // pred_check
      _
    $region10: #{correspondence_flow_diff_emb_mlp.5} parent=5 // pred_check_branch
      %424 = sbr.rel (%p421) target = $region12
    $region11: #{correspondence_flow_diff_emb_mlp.5} parent=5 // pred_region
      %s425 = ssub.s32 %s23, 1
      // Predicated region
      $region13: #{correspondence_flow_diff_emb_mlp.5} parent=11 // pred_check
        %p426 = pneg %p70
      $region14: #{correspondence_flow_diff_emb_mlp.5} parent=11 // pred_check_branch
        %428 = sbr.rel (%p426) target = $region16
      $region15: #{correspondence_flow_diff_emb_mlp.5} parent=11 // pred_region
        _
      $region16: #{correspondence_flow_diff_emb_mlp.5} parent=11 // pred_fallthru
        _
      // Predicated region
      $region17: #{correspondence_flow_diff_emb_mlp.5} parent=11 // pred_check
        %p429 = pneg %p91
      $region18: #{correspondence_flow_diff_emb_mlp.5} parent=11 // pred_check_branch
        %431 = sbr.rel (%p429) target = $region20
      $region19: #{correspondence_flow_diff_emb_mlp.5} parent=11 // pred_region
        _
      $region20: #{correspondence_flow_diff_emb_mlp.5} parent=11 // pred_fallthru
        _
      // Predicated region
      $region21: #{correspondence_flow_diff_emb_mlp.5} parent=11 // pred_check
        %p432 = pneg %p112
      $region22: #{correspondence_flow_diff_emb_mlp.5} parent=11 // pred_check_branch
        %434 = sbr.rel (%p432) target = $region24
      $region23: #{correspondence_flow_diff_emb_mlp.5} parent=11 // pred_region
        _
      $region24: #{correspondence_flow_diff_emb_mlp.5} parent=11 // pred_fallthru
        _
      // Predicated region
      $region25: #{correspondence_flow_diff_emb_mlp.5} parent=11 // pred_check
        %p435 = pneg %p133
      $region26: #{correspondence_flow_diff_emb_mlp.5} parent=11 // pred_check_branch
        %437 = sbr.rel (%p435) target = $region28
      $region27: #{correspondence_flow_diff_emb_mlp.5} parent=11 // pred_region
        _
      $region28: #{correspondence_flow_diff_emb_mlp.5} parent=11 // pred_fallthru
        _
      // Predicated region
      $region29: #{correspondence_flow_diff_emb_mlp.5} parent=11 // pred_check
        %p438 = pneg %p154
      $region30: #{correspondence_flow_diff_emb_mlp.5} parent=11 // pred_check_branch
        %440 = sbr.rel (%p438) target = $region32
      $region31: #{correspondence_flow_diff_emb_mlp.5} parent=11 // pred_region
        _
      $region32: #{correspondence_flow_diff_emb_mlp.5} parent=11 // pred_fallthru
        _
      // Predicated region
      $region33: #{correspondence_flow_diff_emb_mlp.5} parent=11 // pred_check
        %p441 = pneg %p175
      $region34: #{correspondence_flow_diff_emb_mlp.5} parent=11 // pred_check_branch
        %443 = sbr.rel (%p441) target = $region36
      $region35: #{correspondence_flow_diff_emb_mlp.5} parent=11 // pred_region
        _
      $region36: #{correspondence_flow_diff_emb_mlp.5} parent=11 // pred_fallthru
        _
      // Predicated region
      $region37: #{correspondence_flow_diff_emb_mlp.5} parent=11 // pred_check
        %p444 = pneg %p196
      $region38: #{correspondence_flow_diff_emb_mlp.5} parent=11 // pred_check_branch
        %446 = sbr.rel (%p444) target = $region40
      $region39: #{correspondence_flow_diff_emb_mlp.5} parent=11 // pred_region
        _
      $region40: #{correspondence_flow_diff_emb_mlp.5} parent=11 // pred_fallthru
        _
      // Predicated region
      $region41: #{correspondence_flow_diff_emb_mlp.5} parent=11 // pred_check
        %p447 = pneg %p217
      $region42: #{correspondence_flow_diff_emb_mlp.5} parent=11 // pred_check_branch
        %449 = sbr.rel (%p447) target = $region44
      $region43: #{correspondence_flow_diff_emb_mlp.5} parent=11 // pred_region
        _
      $region44: #{correspondence_flow_diff_emb_mlp.5} parent=11 // pred_fallthru
        _
      // Predicated region
      $region45: #{correspondence_flow_diff_emb_mlp.5} parent=11 // pred_check
        %p450 = pneg %p238
      $region46: #{correspondence_flow_diff_emb_mlp.5} parent=11 // pred_check_branch
        %452 = sbr.rel (%p450) target = $region48
      $region47: #{correspondence_flow_diff_emb_mlp.5} parent=11 // pred_region
        _
      $region48: #{correspondence_flow_diff_emb_mlp.5} parent=11 // pred_fallthru
        _
      // Predicated region
      $region49: #{correspondence_flow_diff_emb_mlp.5} parent=11 // pred_check
        %p453 = pneg %p259
      $region50: #{correspondence_flow_diff_emb_mlp.5} parent=11 // pred_check_branch
        %455 = sbr.rel (%p453) target = $region52
      $region51: #{correspondence_flow_diff_emb_mlp.5} parent=11 // pred_region
        _
      $region52: #{correspondence_flow_diff_emb_mlp.5} parent=11 // pred_fallthru
        _
      // Predicated region
      $region53: #{correspondence_flow_diff_emb_mlp.5} parent=11 // pred_check
        %p456 = pneg %p280
      $region54: #{correspondence_flow_diff_emb_mlp.5} parent=11 // pred_check_branch
        %458 = sbr.rel (%p456) target = $region56
      $region55: #{correspondence_flow_diff_emb_mlp.5} parent=11 // pred_region
        _
      $region56: #{correspondence_flow_diff_emb_mlp.5} parent=11 // pred_fallthru
        _
      // Predicated region
      $region57: #{correspondence_flow_diff_emb_mlp.5} parent=11 // pred_check
        %p459 = pneg %p301
      $region58: #{correspondence_flow_diff_emb_mlp.5} parent=11 // pred_check_branch
        %461 = sbr.rel (%p459) target = $region60
      $region59: #{correspondence_flow_diff_emb_mlp.5} parent=11 // pred_region
        _
      $region60: #{correspondence_flow_diff_emb_mlp.5} parent=11 // pred_fallthru
        _
      // Predicated region
      $region61: #{correspondence_flow_diff_emb_mlp.5} parent=11 // pred_check
        %p462 = pneg %p322
      $region62: #{correspondence_flow_diff_emb_mlp.5} parent=11 // pred_check_branch
        %464 = sbr.rel (%p462) target = $region64
      $region63: #{correspondence_flow_diff_emb_mlp.5} parent=11 // pred_region
        _
      $region64: #{correspondence_flow_diff_emb_mlp.5} parent=11 // pred_fallthru
        _
      // Predicated region
      $region65: #{correspondence_flow_diff_emb_mlp.5} parent=11 // pred_check
        %p465 = pneg %p343
      $region66: #{correspondence_flow_diff_emb_mlp.5} parent=11 // pred_check_branch
        %467 = sbr.rel (%p465) target = $region68
      $region67: #{correspondence_flow_diff_emb_mlp.5} parent=11 // pred_region
        _
      $region68: #{correspondence_flow_diff_emb_mlp.5} parent=11 // pred_fallthru
        _
      // Predicated region
      $region69: #{correspondence_flow_diff_emb_mlp.5} parent=11 // pred_check
        %p468 = pneg %p364
      $region70: #{correspondence_flow_diff_emb_mlp.5} parent=11 // pred_check_branch
        %470 = sbr.rel (%p468) target = $region72
      $region71: #{correspondence_flow_diff_emb_mlp.5} parent=11 // pred_region
        _
      $region72: #{correspondence_flow_diff_emb_mlp.5} parent=11 // pred_fallthru
        _
      // Predicated region
      $region73: #{correspondence_flow_diff_emb_mlp.5} parent=11 // pred_check
        %p471 = pneg %p385
      $region74: #{correspondence_flow_diff_emb_mlp.5} parent=11 // pred_check_branch
        %473 = sbr.rel (%p471) target = $region76
      $region75: #{correspondence_flow_diff_emb_mlp.5} parent=11 // pred_region
        _
      $region76: #{correspondence_flow_diff_emb_mlp.5} parent=11 // pred_fallthru
        _
    $region12: #{correspondence_flow_diff_emb_mlp.5} parent=5 // pred_fallthru
      _
    %p474 = scmp.lt.s32.totalorder %s23, 2
    // Predicated region
    $region77: #{correspondence_flow_diff_emb_mlp.5} parent=5 // pred_check
      %p475 = pneg %p474
    $region78: #{correspondence_flow_diff_emb_mlp.5} parent=5 // pred_check_branch
      %477 = sbr.rel (%p475) target = $region80
    $region79: #{correspondence_flow_diff_emb_mlp.5} parent=5 // pred_region
      // Predicated region
      $region81: #{correspondence_flow_diff_emb_mlp.5} parent=79 // pred_check
        %p478 = pneg %p43
      $region82: #{correspondence_flow_diff_emb_mlp.5} parent=79 // pred_check_branch
        %480 = sbr.rel (%p478) target = $region84
      $region83: #{correspondence_flow_diff_emb_mlp.5} parent=79 // pred_region
        %p481 = scmp.lt.s32.totalorder %s23, 1
        %s482 = scalar_select %p481, %s23, 1
        %s483 = smul.addr %s482, 32
        %s484 = smul.addr %s483, 4
        %s485 = scalar_lea.vmem %s0, %s484
      $region84: #{correspondence_flow_diff_emb_mlp.5} parent=79 // pred_fallthru
        _
    $region80: #{correspondence_flow_diff_emb_mlp.5} parent=5 // pred_fallthru
      _
    %p486 = scmp.le.s32.totalorder 1, %s23
    %p487 = scmp.lt.s32.totalorder %s23, 3
    %p488 = pnand %p486, %p487
    %p489 = pneg %p488
    // Predicated region
    $region85: #{correspondence_flow_diff_emb_mlp.5} parent=5 // pred_check
      _
    $region86: #{correspondence_flow_diff_emb_mlp.5} parent=5 // pred_check_branch
      %491 = sbr.rel (%p488) target = $region88
    $region87: #{correspondence_flow_diff_emb_mlp.5} parent=5 // pred_region
      %s492 = ssub.s32 %s23, 1
      %p493 = scmp.lt.s32.totalorder %s28, 1
      %s494 = scalar_select %p493, %s28, 1
      %s495 = smul.addr %s494, 32
      %s496 = smul.addr %s495, 4
      %s497 = scalar_lea.vmem %s0, %s496
      %p498 = pneg %p49
      %p499 = pneg %p46
      %p500 = pneg %p70
      %p501 = pneg %p67
      %p502 = pneg %p91
      %p503 = pneg %p88
      %p504 = pneg %p112
      %p505 = pneg %p109
      %p506 = pneg %p133
      %p507 = pneg %p130
      %p508 = pneg %p154
      %p509 = pneg %p151
      %p510 = pneg %p175
      %p511 = pneg %p172
      %p512 = pneg %p196
      %p513 = pneg %p193
      %p514 = pneg %p217
      %p515 = pneg %p214
      %p516 = pneg %p238
      %p517 = pneg %p235
      %p518 = pneg %p259
      %p519 = pneg %p256
      %p520 = pneg %p280
      %p521 = pneg %p277
      %p522 = pneg %p301
      %p523 = pneg %p298
      %p524 = pneg %p322
      %p525 = pneg %p319
      %p526 = pneg %p343
      %p527 = pneg %p340
      %p528 = pneg %p364
      %p529 = pneg %p361
      %p530 = pneg %p385
      %p531 = pneg %p382
      %p532 = pneg %p411
      %p533 = pneg %p408
      %p534 = scmp.lt.s32.totalorder %s28, 1
      %s535 = scalar_select %p534, %s28, 1
      %s536 = smul.addr %s535, 4
      %s537 = smul.addr %s536, 4
      %s538 = scalar_lea.vmem %s17, %s537
      %p539 = scmp.lt.s32.totalorder %s28, 1
      %s540 = scalar_select %p539, %s28, 1
      %s541 = smul.addr %s540, 32
      %s542 = smul.addr %s541, 4
      %s543 = scalar_lea.vmem %s0, %s542
      %p544 = scmp.lt.s32.totalorder %s28, 1
      %s545 = scalar_select %p544, %s28, 1
      %s546 = smul.addr %s545, 4
      %s547 = smul.addr %s546, 4
      %s548 = scalar_lea.vmem %s17, %s547
      %v550 = vld [vmem:[%s543] sm:$0xf]
      %v551 = vld [vmem:[%s543 + $0x4] sm:$0xf]
      %v552 = vld [vmem:[%s543 + $0x8] sm:$0xf]
      %v553 = vld [vmem:[%s543 + $0xc] sm:$0xf]
      %v554 = vld [vmem:[%s543 + $0x10] sm:$0xf]
      %v555 = vld [vmem:[%s543 + $0x14] sm:$0xf]
      %v556 = vld [vmem:[%s543 + $0x18] sm:$0xf]
      %v557 = vld [vmem:[%s543 + $0x1c] sm:$0xf]
      %v558 = vld [vmem:[%s543 + $0x20] sm:$0xf]
      %v559 = vld [vmem:[%s543 + $0x24] sm:$0xf]
      %v560 = vld [vmem:[%s543 + $0x28] sm:$0xf]
      %v561 = vld [vmem:[%s543 + $0x2c] sm:$0xf]
      %v562 = vld [vmem:[%s543 + $0x30] sm:$0xf]
      %v563 = vld [vmem:[%s543 + $0x34] sm:$0xf]
      %v564 = vld [vmem:[%s543 + $0x38] sm:$0xf]
      %v565 = vld [vmem:[%s543 + $0x3c] sm:$0xf]
      %v566 = vld [vmem:[%s543 + $0x40] sm:$0xf]
      %v567 = vld [vmem:[%s543 + $0x44] sm:$0xf]
      %v568 = vld [vmem:[%s543 + $0x48] sm:$0xf]
      %v569 = vld [vmem:[%s543 + $0x4c] sm:$0xf]
      %v570 = vld [vmem:[%s543 + $0x50] sm:$0xf]
      %v571 = vld [vmem:[%s543 + $0x54] sm:$0xf]
      %v572 = vld [vmem:[%s543 + $0x58] sm:$0xf]
      %v573 = vld [vmem:[%s543 + $0x5c] sm:$0xf]
      %v574 = vld [vmem:[%s543 + $0x60] sm:$0xf]
      %v575 = vld [vmem:[%s543 + $0x64] sm:$0xf]
      %v576 = vld [vmem:[%s543 + $0x68] sm:$0xf]
      %v577 = vld [vmem:[%s543 + $0x6c] sm:$0xf]
      %v578 = vld [vmem:[%s543 + $0x70] sm:$0xf]
      %v579 = vld [vmem:[%s543 + $0x74] sm:$0xf]
      %v580 = vld [vmem:[%s543 + $0x78] sm:$0xf]
      %v581 = vld [vmem:[%s543 + $0x7c] sm:$0xf]
      %v582 = vld [vmem:[%s1] sm:$0x7]
      %v583 = vld [vmem:[%s2] sm:$0x1]
      %v585 = vlaneseq
      %v586 = vshrl.u32 %v585, 7
      %v587 = vsub.s32 0, %v586
      %v588 = vrot.slane %v583, %v587
      %v622 = vunpack.c.l.b16 %v550
      %v623 = vunpack.c.l.b16 %v551
      %v624 = vunpack.c.l.b16 %v552
      %v625 = vunpack.c.l.b16 %v553
      %v626 = vunpack.c.l.b16 %v554
      %v627 = vunpack.c.l.b16 %v555
      %v628 = vunpack.c.l.b16 %v556
      %v629 = vunpack.c.l.b16 %v557
      %v630 = vunpack.c.l.b16 %v558
      %v631 = vunpack.c.l.b16 %v559
      %v632 = vunpack.c.l.b16 %v560
      %v633 = vunpack.c.l.b16 %v561
      %v634 = vunpack.c.l.b16 %v562
      %v635 = vunpack.c.l.b16 %v563
      %v636 = vunpack.c.l.b16 %v564
      %v637 = vunpack.c.l.b16 %v565
      %v638 = vunpack.c.l.b16 %v566
      %v639 = vunpack.c.l.b16 %v567
      %v640 = vunpack.c.l.b16 %v568
      %v641 = vunpack.c.l.b16 %v569
      %v642 = vunpack.c.l.b16 %v570
      %v643 = vunpack.c.l.b16 %v571
      %v644 = vunpack.c.l.b16 %v572
      %v645 = vunpack.c.l.b16 %v573
      %v646 = vunpack.c.l.b16 %v574
      %v647 = vunpack.c.l.b16 %v575
      %v648 = vunpack.c.l.b16 %v576
      %v649 = vunpack.c.l.b16 %v577
      %v650 = vunpack.c.l.b16 %v578
      %v651 = vunpack.c.l.b16 %v579
      %v652 = vunpack.c.l.b16 %v580
      %v653 = vunpack.c.l.b16 %v581
      %v654 = vpack.c.b16 %v623, %v622
      %v655 = vpack.c.b16 %v625, %v624
      %v656 = vpack.c.b16 %v627, %v626
      %v657 = vpack.c.b16 %v629, %v628
      %v658 = vpack.c.b16 %v631, %v630
      %v659 = vpack.c.b16 %v633, %v632
      %v660 = vpack.c.b16 %v635, %v634
      %v661 = vpack.c.b16 %v637, %v636
      %v662 = vpack.c.b16 %v639, %v638
      %v663 = vpack.c.b16 %v641, %v640
      %v664 = vpack.c.b16 %v643, %v642
      %v665 = vpack.c.b16 %v645, %v644
      %v666 = vpack.c.b16 %v647, %v646
      %v667 = vpack.c.b16 %v649, %v648
      %v668 = vpack.c.b16 %v651, %v650
      %v669 = vpack.c.b16 %v653, %v652
      %vm670 = vcmask 48128
      %v672 = vsel %vm670, %v654, 0
      %v675 = vsel %vm670, %v655, 0
      %v678 = vsel %vm670, %v656, 0
      %v681 = vsel %vm670, %v657, 0
      %v684 = vsel %vm670, %v658, 0
      %v687 = vsel %vm670, %v659, 0
      %v690 = vsel %vm670, %v660, 0
      %v693 = vsel %vm670, %v661, 0
      %v696 = vsel %vm670, %v662, 0
      %v699 = vsel %vm670, %v663, 0
      %v702 = vsel %vm670, %v664, 0
      %v705 = vsel %vm670, %v665, 0
      %v708 = vsel %vm670, %v666, 0
      %v711 = vsel %vm670, %v667, 0
      %v714 = vsel %vm670, %v668, 0
      %v717 = vsel %vm670, %v669, 0
      %vm719 = vcmask 1042432
      %v721 = vsel %vm719, %v582, 0
      %723 = vmatprep.subr.bf16.mxu0 0
      %724 = vmatpush1.bf16.msra.mxu0 %v721
      %725 = vmatprep.subr.bf16.mxu0 0
      %726 = vmatpush1.bf16.msra.mxu0 0
      %727 = vmatprep.subr.bf16.mxu0 0
      %728 = vmatpush1.bf16.msra.mxu0 0
      %729 = vmatprep.subr.bf16.mxu0 0
      %730 = vmatpush1.bf16.msra.mxu0 0
      %731 = vmatprep.subr.bf16.mxu0 0
      %732 = vmatpush1.bf16.msra.mxu0 0
      %733 = vmatprep.subr.bf16.mxu0 0
      %734 = vmatpush1.bf16.msra.mxu0 0
      %735 = vmatprep.subr.bf16.mxu0 0
      %736 = vmatpush1.bf16.msra.mxu0 0
      %737 = vmatprep.subr.bf16.mxu0 0
      %738 = vmatpush1.bf16.msra.mxu0 0
      %739 = vmatprep.subr.bf16.mxu0 0
      %740 = vmatpush1.bf16.msra.mxu0 0
      %741 = vmatprep.subr.bf16.mxu0 0
      %742 = vmatpush1.bf16.msra.mxu0 0
      %743 = vmatprep.subr.bf16.mxu0 0
      %744 = vmatpush1.bf16.msra.mxu0 0
      %745 = vmatprep.subr.bf16.mxu0 0
      %746 = vmatpush1.bf16.msra.mxu0 0
      %747 = vmatprep.subr.bf16.mxu0 0
      %748 = vmatpush1.bf16.msra.mxu0 0
      %749 = vmatprep.subr.bf16.mxu0 0
      %750 = vmatpush1.bf16.msra.mxu0 0
      %751 = vmatprep.subr.bf16.mxu0 0
      %752 = vmatpush1.bf16.msra.mxu0 0
      %753 = vmatprep.subr.bf16.mxu0 0
      %754 = vmatpush1.bf16.msra.mxu0 0
      %755 = vmatprep.mubr.bf16.mxu0 0
      %756 = vmatmul.mubr.bf16.gmra.mrb[0].mxu0 %v672
      %v757 = vpop.f32.mrb[0].mxu0
      %v758 = vadd.f32 %v588, %v757
      %v759 = vpop.f32.mrb[0].mxu0
      %v760 = vpop.f32.mrb[0].mxu0
      %v761 = vadd.f32 %v588, %v760
      %v762 = vpop.f32.mrb[0].mxu0
      %763 = vmatprep.mubr.bf16.mxu0 0
      %764 = vmatmul.mubr.bf16.gmra.mrb[0].mxu0 %v675
      %v765 = vpop.f32.mrb[0].mxu0
      %v766 = vadd.f32 %v588, %v765
      %v767 = vpop.f32.mrb[0].mxu0
      %v768 = vpop.f32.mrb[0].mxu0
      %v769 = vadd.f32 %v588, %v768
      %v770 = vpop.f32.mrb[0].mxu0
      %771 = vmatprep.mubr.bf16.mxu0 0
      %772 = vmatmul.mubr.bf16.gmra.mrb[0].mxu0 %v678
      %v773 = vpop.f32.mrb[0].mxu0
      %v774 = vadd.f32 %v588, %v773
      %v775 = vpop.f32.mrb[0].mxu0
      %v776 = vpop.f32.mrb[0].mxu0
      %v777 = vadd.f32 %v588, %v776
      %v778 = vpop.f32.mrb[0].mxu0
      %779 = vmatprep.mubr.bf16.mxu0 0
      %780 = vmatmul.mubr.bf16.gmra.mrb[0].mxu0 %v681
      %v781 = vpop.f32.mrb[0].mxu0
      %v782 = vadd.f32 %v588, %v781
      %v783 = vpop.f32.mrb[0].mxu0
      %v784 = vpop.f32.mrb[0].mxu0
      %v785 = vadd.f32 %v588, %v784
      %v786 = vpop.f32.mrb[0].mxu0
      %787 = vmatprep.mubr.bf16.mxu0 0
      %788 = vmatmul.mubr.bf16.gmra.mrb[0].mxu0 %v684
      %v789 = vpop.f32.mrb[0].mxu0
      %v790 = vadd.f32 %v588, %v789
      %v791 = vpop.f32.mrb[0].mxu0
      %v792 = vpop.f32.mrb[0].mxu0
      %v793 = vadd.f32 %v588, %v792
      %v794 = vpop.f32.mrb[0].mxu0
      %795 = vmatprep.mubr.bf16.mxu0 0
      %796 = vmatmul.mubr.bf16.gmra.mrb[0].mxu0 %v687
      %v797 = vpop.f32.mrb[0].mxu0
      %v798 = vadd.f32 %v588, %v797
      %v799 = vpop.f32.mrb[0].mxu0
      %v800 = vpop.f32.mrb[0].mxu0
      %v801 = vadd.f32 %v588, %v800
      %v802 = vpop.f32.mrb[0].mxu0
      %803 = vmatprep.mubr.bf16.mxu0 0
      %804 = vmatmul.mubr.bf16.gmra.mrb[0].mxu0 %v690
      %v805 = vpop.f32.mrb[0].mxu0
      %v806 = vadd.f32 %v588, %v805
      %v807 = vpop.f32.mrb[0].mxu0
      %v808 = vpop.f32.mrb[0].mxu0
      %v809 = vadd.f32 %v588, %v808
      %v810 = vpop.f32.mrb[0].mxu0
      %811 = vmatprep.mubr.bf16.mxu0 0
      %812 = vmatmul.mubr.bf16.gmra.mrb[0].mxu0 %v693
      %v813 = vpop.f32.mrb[0].mxu0
      %v814 = vadd.f32 %v588, %v813
      %v815 = vpop.f32.mrb[0].mxu0
      %v816 = vpop.f32.mrb[0].mxu0
      %v817 = vadd.f32 %v588, %v816
      %v818 = vpop.f32.mrb[0].mxu0
      %819 = vmatprep.mubr.bf16.mxu0 0
      %820 = vmatmul.mubr.bf16.gmra.mrb[0].mxu0 %v696
      %v821 = vpop.f32.mrb[0].mxu0
      %v822 = vadd.f32 %v588, %v821
      %v823 = vpop.f32.mrb[0].mxu0
      %v824 = vpop.f32.mrb[0].mxu0
      %v825 = vadd.f32 %v588, %v824
      %v826 = vpop.f32.mrb[0].mxu0
      %827 = vmatprep.mubr.bf16.mxu0 0
      %828 = vmatmul.mubr.bf16.gmra.mrb[0].mxu0 %v699
      %v829 = vpop.f32.mrb[0].mxu0
      %v830 = vadd.f32 %v588, %v829
      %v831 = vpop.f32.mrb[0].mxu0
      %v832 = vpop.f32.mrb[0].mxu0
      %v833 = vadd.f32 %v588, %v832
      %v834 = vpop.f32.mrb[0].mxu0
      %835 = vmatprep.mubr.bf16.mxu0 0
      %836 = vmatmul.mubr.bf16.gmra.mrb[0].mxu0 %v702
      %v837 = vpop.f32.mrb[0].mxu0
      %v838 = vadd.f32 %v588, %v837
      %v839 = vpop.f32.mrb[0].mxu0
      %v840 = vpop.f32.mrb[0].mxu0
      %v841 = vadd.f32 %v588, %v840
      %v842 = vpop.f32.mrb[0].mxu0
      %843 = vmatprep.mubr.bf16.mxu0 0
      %844 = vmatmul.mubr.bf16.gmra.mrb[0].mxu0 %v705
      %v845 = vpop.f32.mrb[0].mxu0
      %v846 = vadd.f32 %v588, %v845
      %v847 = vpop.f32.mrb[0].mxu0
      %v848 = vpop.f32.mrb[0].mxu0
      %v849 = vadd.f32 %v588, %v848
      %v850 = vpop.f32.mrb[0].mxu0
      %851 = vmatprep.mubr.bf16.mxu0 0
      %852 = vmatmul.mubr.bf16.gmra.mrb[0].mxu0 %v708
      %v853 = vpop.f32.mrb[0].mxu0
      %v854 = vadd.f32 %v588, %v853
      %v855 = vpop.f32.mrb[0].mxu0
      %v856 = vpop.f32.mrb[0].mxu0
      %v857 = vadd.f32 %v588, %v856
      %v858 = vpop.f32.mrb[0].mxu0
      %859 = vmatprep.mubr.bf16.mxu0 0
      %860 = vmatmul.mubr.bf16.gmra.mrb[0].mxu0 %v711
      %v861 = vpop.f32.mrb[0].mxu0
      %v862 = vadd.f32 %v588, %v861
      %v863 = vpop.f32.mrb[0].mxu0
      %v864 = vpop.f32.mrb[0].mxu0
      %v865 = vadd.f32 %v588, %v864
      %v866 = vpop.f32.mrb[0].mxu0
      %867 = vmatprep.mubr.bf16.mxu0 0
      %868 = vmatmul.mubr.bf16.gmra.mrb[0].mxu0 %v714
      %v869 = vpop.f32.mrb[0].mxu0
      %v870 = vadd.f32 %v588, %v869
      %v871 = vpop.f32.mrb[0].mxu0
      %v872 = vpop.f32.mrb[0].mxu0
      %v873 = vadd.f32 %v588, %v872
      %v874 = vpop.f32.mrb[0].mxu0
      %875 = vmatprep.mubr.bf16.mxu0 0
      %876 = vmatmul.mubr.bf16.gmra.mrb[0].mxu0 %v717
      %v877 = vpop.f32.mrb[0].mxu0
      %v878 = vadd.f32 %v588, %v877
      %v879 = vpop.f32.mrb[0].mxu0
      %v880 = vpop.f32.mrb[0].mxu0
      %v881 = vadd.f32 %v588, %v880
      %v882 = vpop.f32.mrb[0].mxu0
      %883 = vdwg.mxu0
      %v884 = vmax.f32 %v758, 0.0
      %v885 = vmax.f32 %v761, 0.0
      %v886 = vmax.f32 %v766, 0.0
      %v887 = vmax.f32 %v769, 0.0
      %v888 = vmax.f32 %v774, 0.0
      %v889 = vmax.f32 %v777, 0.0
      %v890 = vmax.f32 %v782, 0.0
      %v891 = vmax.f32 %v785, 0.0
      %v892 = vmax.f32 %v790, 0.0
      %v893 = vmax.f32 %v793, 0.0
      %v894 = vmax.f32 %v798, 0.0
      %v895 = vmax.f32 %v801, 0.0
      %v896 = vmax.f32 %v806, 0.0
      %v897 = vmax.f32 %v809, 0.0
      %v898 = vmax.f32 %v814, 0.0
      %v899 = vmax.f32 %v817, 0.0
      %v900 = vmax.f32 %v822, 0.0
      %v901 = vmax.f32 %v825, 0.0
      %v902 = vmax.f32 %v830, 0.0
      %v903 = vmax.f32 %v833, 0.0
      %v904 = vmax.f32 %v838, 0.0
      %v905 = vmax.f32 %v841, 0.0
      %v906 = vmax.f32 %v846, 0.0
      %v907 = vmax.f32 %v849, 0.0
      %v908 = vmax.f32 %v854, 0.0
      %v909 = vmax.f32 %v857, 0.0
      %v910 = vmax.f32 %v862, 0.0
      %v911 = vmax.f32 %v865, 0.0
      %v912 = vmax.f32 %v870, 0.0
      %v913 = vmax.f32 %v873, 0.0
      %v914 = vmax.f32 %v878, 0.0
      %v915 = vmax.f32 %v881, 0.0
      %v916 = vmax.f32 %v884, %v888
      %v917 = vmax.f32 %v885, %v889
      %v918 = vmax.f32 %v886, %v890
      %v919 = vmax.f32 %v887, %v891
      %v920 = vmax.f32 %v916, %v892
      %v921 = vmax.f32 %v917, %v893
      %v922 = vmax.f32 %v918, %v894
      %v923 = vmax.f32 %v919, %v895
      %v924 = vmax.f32 %v920, %v896
      %v925 = vmax.f32 %v921, %v897
      %v926 = vmax.f32 %v922, %v898
      %v927 = vmax.f32 %v923, %v899
      %v928 = vmax.f32 %v924, %v900
      %v929 = vmax.f32 %v925, %v901
      %v930 = vmax.f32 %v926, %v902
      %v931 = vmax.f32 %v927, %v903
      %v932 = vmax.f32 %v928, %v904
      %v933 = vmax.f32 %v929, %v905
      %v934 = vmax.f32 %v930, %v906
      %v935 = vmax.f32 %v931, %v907
      %v936 = vmax.f32 %v932, %v908
      %v937 = vmax.f32 %v933, %v909
      %v938 = vmax.f32 %v934, %v910
      %v939 = vmax.f32 %v935, %v911
      %v940 = vmax.f32 %v936, %v912
      %v941 = vmax.f32 %v937, %v913
      %v942 = vmax.f32 %v938, %v914
      %v943 = vmax.f32 %v939, %v915
      %v944 = vpack.c.bf16 %v885, %v884
      %v945 = vpack.c.bf16 %v887, %v886
      %v946 = vpack.c.bf16 %v889, %v888
      %v947 = vpack.c.bf16 %v891, %v890
      %v948 = vpack.c.bf16 %v893, %v892
      %v949 = vpack.c.bf16 %v895, %v894
      %v950 = vpack.c.bf16 %v897, %v896
      %v951 = vpack.c.bf16 %v899, %v898
      %v952 = vpack.c.bf16 %v901, %v900
      %v953 = vpack.c.bf16 %v903, %v902
      %v954 = vpack.c.bf16 %v905, %v904
      %v955 = vpack.c.bf16 %v907, %v906
      %v956 = vpack.c.bf16 %v909, %v908
      %v957 = vpack.c.bf16 %v911, %v910
      %v958 = vpack.c.bf16 %v913, %v912
      %v959 = vpack.c.bf16 %v915, %v914
      %v960 = vld [vmem:[%s3] sm:$0xf]
      %v961 = vld [vmem:[%s3 + $0x4] sm:$0xf]
      %v962 = vld [vmem:[%s3 + $0x8] sm:$0xf]
      %v963 = vld [vmem:[%s3 + $0xc] sm:$0xf]
      %v964 = vld [vmem:[%s3 + $0x10] sm:$0xf]
      %v965 = vld [vmem:[%s3 + $0x14] sm:$0xf]
      %v966 = vld [vmem:[%s3 + $0x18] sm:$0xf]
      %v967 = vld [vmem:[%s3 + $0x1c] sm:$0xf]
      %v968 = vld [vmem:[%s4] sm:$0x1]
      %v970 = vlaneseq
      %v971 = vshrl.u32 %v970, 7
      %v972 = vsub.s32 0, %v971
      %v973 = vrot.slane %v968, %v972
      %v983 = vunpack.c.l.b16 %v960
      %v984 = vunpack.c.l.b16 %v961
      %v985 = vunpack.c.l.b16 %v962
      %v986 = vunpack.c.l.b16 %v963
      %v987 = vunpack.c.l.b16 %v964
      %v988 = vunpack.c.l.b16 %v965
      %v989 = vunpack.c.l.b16 %v966
      %v990 = vunpack.c.l.b16 %v967
      %v991 = vpack.c.b16 %v984, %v983
      %v992 = vpack.c.b16 %v986, %v985
      %v993 = vpack.c.b16 %v988, %v987
      %v994 = vpack.c.b16 %v990, %v989
      %vm999 = vcmask 523264
      %v1001 = vsel %vm999, %v944, 0
      %v1004 = vsel %vm999, %v945, 0
      %v1007 = vsel %vm999, %v946, 0
      %v1010 = vsel %vm999, %v947, 0
      %v1013 = vsel %vm999, %v948, 0
      %v1016 = vsel %vm999, %v949, 0
      %v1019 = vsel %vm999, %v950, 0
      %v1022 = vsel %vm999, %v951, 0
      %v1025 = vsel %vm999, %v952, 0
      %v1028 = vsel %vm999, %v953, 0
      %v1031 = vsel %vm999, %v954, 0
      %v1034 = vsel %vm999, %v955, 0
      %v1037 = vsel %vm999, %v956, 0
      %v1040 = vsel %vm999, %v957, 0
      %v1043 = vsel %vm999, %v958, 0
      %v1046 = vsel %vm999, %v959, 0
      %1048 = vmatprep.subr.bf16.mxu0 0
      %1049 = vmatpush1.bf16.msra.mxu0 %v991
      %1050 = vmatprep.subr.bf16.mxu0 0
      %1051 = vmatpush1.bf16.msra.mxu0 %v992
      %1052 = vmatprep.subr.bf16.mxu0 0
      %1053 = vmatpush1.bf16.msra.mxu0 %v993
      %1054 = vmatprep.subr.bf16.mxu0 0
      %1055 = vmatpush1.bf16.msra.mxu0 %v994
      %1056 = vmatprep.subr.bf16.mxu0 0
      %1057 = vmatpush1.bf16.msra.mxu0 0
      %1058 = vmatprep.subr.bf16.mxu0 0
      %1059 = vmatpush1.bf16.msra.mxu0 0
      %1060 = vmatprep.subr.bf16.mxu0 0
      %1061 = vmatpush1.bf16.msra.mxu0 0
      %1062 = vmatprep.subr.bf16.mxu0 0
      %1063 = vmatpush1.bf16.msra.mxu0 0
      %1064 = vmatprep.subr.bf16.mxu0 0
      %1065 = vmatpush1.bf16.msra.mxu0 0
      %1066 = vmatprep.subr.bf16.mxu0 0
      %1067 = vmatpush1.bf16.msra.mxu0 0
      %1068 = vmatprep.subr.bf16.mxu0 0
      %1069 = vmatpush1.bf16.msra.mxu0 0
      %1070 = vmatprep.subr.bf16.mxu0 0
      %1071 = vmatpush1.bf16.msra.mxu0 0
      %1072 = vmatprep.subr.bf16.mxu0 0
      %1073 = vmatpush1.bf16.msra.mxu0 0
      %1074 = vmatprep.subr.bf16.mxu0 0
      %1075 = vmatpush1.bf16.msra.mxu0 0
      %1076 = vmatprep.subr.bf16.mxu0 0
      %1077 = vmatpush1.bf16.msra.mxu0 0
      %1078 = vmatprep.subr.bf16.mxu0 0
      %1079 = vmatpush1.bf16.msra.mxu0 0
      %1080 = vmatprep.mubr.bf16.mxu0 0
      %1081 = vmatmul.mubr.bf16.gmra.mrb[0].mxu0 %v1001
      %v1082 = vpop.f32.mrb[0].mxu0
      %v1083 = vadd.f32 %v973, %v1082
      %v1084 = vpop.f32.mrb[0].mxu0
      %v1085 = vpop.f32.mrb[0].mxu0
      %v1086 = vadd.f32 %v973, %v1085
      %v1087 = vpop.f32.mrb[0].mxu0
      %1088 = vmatprep.mubr.bf16.mxu0 0
      %1089 = vmatmul.mubr.bf16.gmra.mrb[0].mxu0 %v1004
      %v1090 = vpop.f32.mrb[0].mxu0
      %v1091 = vadd.f32 %v973, %v1090
      %v1092 = vpop.f32.mrb[0].mxu0
      %v1093 = vpop.f32.mrb[0].mxu0
      %v1094 = vadd.f32 %v973, %v1093
      %v1095 = vpop.f32.mrb[0].mxu0
      %1096 = vmatprep.mubr.bf16.mxu0 0
      %1097 = vmatmul.mubr.bf16.gmra.mrb[0].mxu0 %v1007
      %v1098 = vpop.f32.mrb[0].mxu0
      %v1099 = vadd.f32 %v973, %v1098
      %v1100 = vpop.f32.mrb[0].mxu0
      %v1101 = vpop.f32.mrb[0].mxu0
      %v1102 = vadd.f32 %v973, %v1101
      %v1103 = vpop.f32.mrb[0].mxu0
      %1104 = vmatprep.mubr.bf16.mxu0 0
      %1105 = vmatmul.mubr.bf16.gmra.mrb[0].mxu0 %v1010
      %v1106 = vpop.f32.mrb[0].mxu0
      %v1107 = vadd.f32 %v973, %v1106
      %v1108 = vpop.f32.mrb[0].mxu0
      %v1109 = vpop.f32.mrb[0].mxu0
      %v1110 = vadd.f32 %v973, %v1109
      %v1111 = vpop.f32.mrb[0].mxu0
      %1112 = vmatprep.mubr.bf16.mxu0 0
      %1113 = vmatmul.mubr.bf16.gmra.mrb[0].mxu0 %v1013
      %v1114 = vpop.f32.mrb[0].mxu0
      %v1115 = vadd.f32 %v973, %v1114
      %v1116 = vpop.f32.mrb[0].mxu0
      %v1117 = vpop.f32.mrb[0].mxu0
      %v1118 = vadd.f32 %v973, %v1117
      %v1119 = vpop.f32.mrb[0].mxu0
      %1120 = vmatprep.mubr.bf16.mxu0 0
      %1121 = vmatmul.mubr.bf16.gmra.mrb[0].mxu0 %v1016
      %v1122 = vpop.f32.mrb[0].mxu0
      %v1123 = vadd.f32 %v973, %v1122
      %v1124 = vpop.f32.mrb[0].mxu0
      %v1125 = vpop.f32.mrb[0].mxu0
      %v1126 = vadd.f32 %v973, %v1125
      %v1127 = vpop.f32.mrb[0].mxu0
      %1128 = vmatprep.mubr.bf16.mxu0 0
      %1129 = vmatmul.mubr.bf16.gmra.mrb[0].mxu0 %v1019
      %v1130 = vpop.f32.mrb[0].mxu0
      %v1131 = vadd.f32 %v973, %v1130
      %v1132 = vpop.f32.mrb[0].mxu0
      %v1133 = vpop.f32.mrb[0].mxu0
      %v1134 = vadd.f32 %v973, %v1133
      %v1135 = vpop.f32.mrb[0].mxu0
      %1136 = vmatprep.mubr.bf16.mxu0 0
      %1137 = vmatmul.mubr.bf16.gmra.mrb[0].mxu0 %v1022
      %v1138 = vpop.f32.mrb[0].mxu0
      %v1139 = vadd.f32 %v973, %v1138
      %v1140 = vpop.f32.mrb[0].mxu0
      %v1141 = vpop.f32.mrb[0].mxu0
      %v1142 = vadd.f32 %v973, %v1141
      %v1143 = vpop.f32.mrb[0].mxu0
      %1144 = vmatprep.mubr.bf16.mxu0 0
      %1145 = vmatmul.mubr.bf16.gmra.mrb[0].mxu0 %v1025
      %v1146 = vpop.f32.mrb[0].mxu0
      %v1147 = vadd.f32 %v973, %v1146
      %v1148 = vpop.f32.mrb[0].mxu0
      %v1149 = vpop.f32.mrb[0].mxu0
      %v1150 = vadd.f32 %v973, %v1149
      %v1151 = vpop.f32.mrb[0].mxu0
      %1152 = vmatprep.mubr.bf16.mxu0 0
      %1153 = vmatmul.mubr.bf16.gmra.mrb[0].mxu0 %v1028
      %v1154 = vpop.f32.mrb[0].mxu0
      %v1155 = vadd.f32 %v973, %v1154
      %v1156 = vpop.f32.mrb[0].mxu0
      %v1157 = vpop.f32.mrb[0].mxu0
      %v1158 = vadd.f32 %v973, %v1157
      %v1159 = vpop.f32.mrb[0].mxu0
      %1160 = vmatprep.mubr.bf16.mxu0 0
      %1161 = vmatmul.mubr.bf16.gmra.mrb[0].mxu0 %v1031
      %v1162 = vpop.f32.mrb[0].mxu0
      %v1163 = vadd.f32 %v973, %v1162
      %v1164 = vpop.f32.mrb[0].mxu0
      %v1165 = vpop.f32.mrb[0].mxu0
      %v1166 = vadd.f32 %v973, %v1165
      %v1167 = vpop.f32.mrb[0].mxu0
      %1168 = vmatprep.mubr.bf16.mxu0 0
      %1169 = vmatmul.mubr.bf16.gmra.mrb[0].mxu0 %v1034
      %v1170 = vpop.f32.mrb[0].mxu0
      %v1171 = vadd.f32 %v973, %v1170
      %v1172 = vpop.f32.mrb[0].mxu0
      %v1173 = vpop.f32.mrb[0].mxu0
      %v1174 = vadd.f32 %v973, %v1173
      %v1175 = vpop.f32.mrb[0].mxu0
      %1176 = vmatprep.mubr.bf16.mxu0 0
      %1177 = vmatmul.mubr.bf16.gmra.mrb[0].mxu0 %v1037
      %v1178 = vpop.f32.mrb[0].mxu0
      %v1179 = vadd.f32 %v973, %v1178
      %v1180 = vpop.f32.mrb[0].mxu0
      %v1181 = vpop.f32.mrb[0].mxu0
      %v1182 = vadd.f32 %v973, %v1181
      %v1183 = vpop.f32.mrb[0].mxu0
      %1184 = vmatprep.mubr.bf16.mxu0 0
      %1185 = vmatmul.mubr.bf16.gmra.mrb[0].mxu0 %v1040
      %v1186 = vpop.f32.mrb[0].mxu0
      %v1187 = vadd.f32 %v973, %v1186
      %v1188 = vpop.f32.mrb[0].mxu0
      %v1189 = vpop.f32.mrb[0].mxu0
      %v1190 = vadd.f32 %v973, %v1189
      %v1191 = vpop.f32.mrb[0].mxu0
      %1192 = vmatprep.mubr.bf16.mxu0 0
      %1193 = vmatmul.mubr.bf16.gmra.mrb[0].mxu0 %v1043
      %v1194 = vpop.f32.mrb[0].mxu0
      %v1195 = vadd.f32 %v973, %v1194
      %v1196 = vpop.f32.mrb[0].mxu0
      %v1197 = vpop.f32.mrb[0].mxu0
      %v1198 = vadd.f32 %v973, %v1197
      %v1199 = vpop.f32.mrb[0].mxu0
      %1200 = vmatprep.mubr.bf16.mxu0 0
      %1201 = vmatmul.mubr.bf16.gmra.mrb[0].mxu0 %v1046
      %v1202 = vpop.f32.mrb[0].mxu0
      %v1203 = vadd.f32 %v973, %v1202
      %v1204 = vpop.f32.mrb[0].mxu0
      %v1205 = vpop.f32.mrb[0].mxu0
      %v1206 = vadd.f32 %v973, %v1205
      %v1207 = vpop.f32.mrb[0].mxu0
      %1208 = vdwg.mxu0
      %v1209 = vmax.f32 %v1083, 0.0
      %v1210 = vmax.f32 %v1086, 0.0
      %v1211 = vmax.f32 %v1091, 0.0
      %v1212 = vmax.f32 %v1094, 0.0
      %v1213 = vmax.f32 %v1099, 0.0
      %v1214 = vmax.f32 %v1102, 0.0
      %v1215 = vmax.f32 %v1107, 0.0
      %v1216 = vmax.f32 %v1110, 0.0
      %v1217 = vmax.f32 %v1115, 0.0
      %v1218 = vmax.f32 %v1118, 0.0
      %v1219 = vmax.f32 %v1123, 0.0
      %v1220 = vmax.f32 %v1126, 0.0
      %v1221 = vmax.f32 %v1131, 0.0
      %v1222 = vmax.f32 %v1134, 0.0
      %v1223 = vmax.f32 %v1139, 0.0
      %v1224 = vmax.f32 %v1142, 0.0
      %v1225 = vmax.f32 %v1147, 0.0
      %v1226 = vmax.f32 %v1150, 0.0
      %v1227 = vmax.f32 %v1155, 0.0
      %v1228 = vmax.f32 %v1158, 0.0
      %v1229 = vmax.f32 %v1163, 0.0
      %v1230 = vmax.f32 %v1166, 0.0
      %v1231 = vmax.f32 %v1171, 0.0
      %v1232 = vmax.f32 %v1174, 0.0
      %v1233 = vmax.f32 %v1179, 0.0
      %v1234 = vmax.f32 %v1182, 0.0
      %v1235 = vmax.f32 %v1187, 0.0
      %v1236 = vmax.f32 %v1190, 0.0
      %v1237 = vmax.f32 %v1195, 0.0
      %v1238 = vmax.f32 %v1198, 0.0
      %v1239 = vmax.f32 %v1203, 0.0
      %v1240 = vmax.f32 %v1206, 0.0
      %v1241 = vmax.f32 %v1209, %v1213
      %v1242 = vmax.f32 %v1210, %v1214
      %v1243 = vmax.f32 %v1211, %v1215
      %v1244 = vmax.f32 %v1212, %v1216
      %v1245 = vmax.f32 %v1241, %v1217
      %v1246 = vmax.f32 %v1242, %v1218
      %v1247 = vmax.f32 %v1243, %v1219
      %v1248 = vmax.f32 %v1244, %v1220
      %v1249 = vmax.f32 %v1245, %v1221
      %v1250 = vmax.f32 %v1246, %v1222
      %v1251 = vmax.f32 %v1247, %v1223
      %v1252 = vmax.f32 %v1248, %v1224
      %v1253 = vmax.f32 %v1249, %v1225
      %v1254 = vmax.f32 %v1250, %v1226
      %v1255 = vmax.f32 %v1251, %v1227
      %v1256 = vmax.f32 %v1252, %v1228
      %v1257 = vmax.f32 %v1253, %v1229
      %v1258 = vmax.f32 %v1254, %v1230
      %v1259 = vmax.f32 %v1255, %v1231
      %v1260 = vmax.f32 %v1256, %v1232
      %v1261 = vmax.f32 %v1257, %v1233
      %v1262 = vmax.f32 %v1258, %v1234
      %v1263 = vmax.f32 %v1259, %v1235
      %v1264 = vmax.f32 %v1260, %v1236
      %v1265 = vmax.f32 %v1261, %v1237
      %v1266 = vmax.f32 %v1262, %v1238
      %v1267 = vmax.f32 %v1263, %v1239
      %v1268 = vmax.f32 %v1264, %v1240
      %v1269 = vpack.c.bf16 %v1210, %v1209
      %v1270 = vpack.c.bf16 %v1212, %v1211
      %v1271 = vpack.c.bf16 %v1214, %v1213
      %v1272 = vpack.c.bf16 %v1216, %v1215
      %v1273 = vpack.c.bf16 %v1218, %v1217
      %v1274 = vpack.c.bf16 %v1220, %v1219
      %v1275 = vpack.c.bf16 %v1222, %v1221
      %v1276 = vpack.c.bf16 %v1224, %v1223
      %v1277 = vpack.c.bf16 %v1226, %v1225
      %v1278 = vpack.c.bf16 %v1228, %v1227
      %v1279 = vpack.c.bf16 %v1230, %v1229
      %v1280 = vpack.c.bf16 %v1232, %v1231
      %v1281 = vpack.c.bf16 %v1234, %v1233
      %v1282 = vpack.c.bf16 %v1236, %v1235
      %v1283 = vpack.c.bf16 %v1238, %v1237
      %v1284 = vpack.c.bf16 %v1240, %v1239
      %v1285 = vld [vmem:[%s5] sm:$0xf]
      %v1286 = vld [vmem:[%s5 + $0x4] sm:$0xf]
      %v1287 = vld [vmem:[%s5 + $0x8] sm:$0xf]
      %v1288 = vld [vmem:[%s5 + $0xc] sm:$0xf]
      %v1289 = vld [vmem:[%s5 + $0x10] sm:$0xf]
      %v1290 = vld [vmem:[%s5 + $0x14] sm:$0xf]
      %v1291 = vld [vmem:[%s5 + $0x18] sm:$0xf]
      %v1292 = vld [vmem:[%s5 + $0x1c] sm:$0xf]
      %v1293 = vld [vmem:[%s6] sm:$0x1]
      %v1295 = vlaneseq
      %v1296 = vshrl.u32 %v1295, 7
      %v1297 = vsub.s32 0, %v1296
      %v1298 = vrot.slane %v1293, %v1297
      %v1308 = vunpack.c.l.b16 %v1285
      %v1309 = vunpack.c.l.b16 %v1286
      %v1310 = vunpack.c.l.b16 %v1287
      %v1311 = vunpack.c.l.b16 %v1288
      %v1312 = vunpack.c.l.b16 %v1289
      %v1313 = vunpack.c.l.b16 %v1290
      %v1314 = vunpack.c.l.b16 %v1291
      %v1315 = vunpack.c.l.b16 %v1292
      %v1316 = vpack.c.b16 %v1309, %v1308
      %v1317 = vpack.c.b16 %v1311, %v1310
      %v1318 = vpack.c.b16 %v1313, %v1312
      %v1319 = vpack.c.b16 %v1315, %v1314
      %v1325 = vsel %vm999, %v1269, 0
      %v1328 = vsel %vm999, %v1270, 0
      %v1331 = vsel %vm999, %v1271, 0
      %v1334 = vsel %vm999, %v1272, 0
      %v1337 = vsel %vm999, %v1273, 0
      %v1340 = vsel %vm999, %v1274, 0
      %v1343 = vsel %vm999, %v1275, 0
      %v1346 = vsel %vm999, %v1276, 0
      %v1349 = vsel %vm999, %v1277, 0
      %v1352 = vsel %vm999, %v1278, 0
      %v1355 = vsel %vm999, %v1279, 0
      %v1358 = vsel %vm999, %v1280, 0
      %v1361 = vsel %vm999, %v1281, 0
      %v1364 = vsel %vm999, %v1282, 0
      %v1367 = vsel %vm999, %v1283, 0
      %v1370 = vsel %vm999, %v1284, 0
      %1372 = vmatprep.subr.bf16.mxu0 0
      %1373 = vmatpush1.bf16.msra.mxu0 %v1316
      %1374 = vmatprep.subr.bf16.mxu0 0
      %1375 = vmatpush1.bf16.msra.mxu0 %v1317
      %1376 = vmatprep.subr.bf16.mxu0 0
      %1377 = vmatpush1.bf16.msra.mxu0 %v1318
      %1378 = vmatprep.subr.bf16.mxu0 0
      %1379 = vmatpush1.bf16.msra.mxu0 %v1319
      %1380 = vmatprep.subr.bf16.mxu0 0
      %1381 = vmatpush1.bf16.msra.mxu0 0
      %1382 = vmatprep.subr.bf16.mxu0 0
      %1383 = vmatpush1.bf16.msra.mxu0 0
      %1384 = vmatprep.subr.bf16.mxu0 0
      %1385 = vmatpush1.bf16.msra.mxu0 0
      %1386 = vmatprep.subr.bf16.mxu0 0
      %1387 = vmatpush1.bf16.msra.mxu0 0
      %1388 = vmatprep.subr.bf16.mxu0 0
      %1389 = vmatpush1.bf16.msra.mxu0 0
      %1390 = vmatprep.subr.bf16.mxu0 0
      %1391 = vmatpush1.bf16.msra.mxu0 0
      %1392 = vmatprep.subr.bf16.mxu0 0
      %1393 = vmatpush1.bf16.msra.mxu0 0
      %1394 = vmatprep.subr.bf16.mxu0 0
      %1395 = vmatpush1.bf16.msra.mxu0 0
      %1396 = vmatprep.subr.bf16.mxu0 0
      %1397 = vmatpush1.bf16.msra.mxu0 0
      %1398 = vmatprep.subr.bf16.mxu0 0
      %1399 = vmatpush1.bf16.msra.mxu0 0
      %1400 = vmatprep.subr.bf16.mxu0 0
      %1401 = vmatpush1.bf16.msra.mxu0 0
      %1402 = vmatprep.subr.bf16.mxu0 0
      %1403 = vmatpush1.bf16.msra.mxu0 0
      %1404 = vmatprep.mubr.bf16.mxu0 0
      %1405 = vmatmul.mubr.bf16.gmra.mrb[0].mxu0 %v1325
      %v1406 = vpop.f32.mrb[0].mxu0
      %v1407 = vadd.f32 %v1298, %v1406
      %v1408 = vpop.f32.mrb[0].mxu0
      %v1409 = vpop.f32.mrb[0].mxu0
      %v1410 = vadd.f32 %v1298, %v1409
      %v1411 = vpop.f32.mrb[0].mxu0
      %1412 = vmatprep.mubr.bf16.mxu0 0
      %1413 = vmatmul.mubr.bf16.gmra.mrb[0].mxu0 %v1328
      %v1414 = vpop.f32.mrb[0].mxu0
      %v1415 = vadd.f32 %v1298, %v1414
      %v1416 = vpop.f32.mrb[0].mxu0
      %v1417 = vpop.f32.mrb[0].mxu0
      %v1418 = vadd.f32 %v1298, %v1417
      %v1419 = vpop.f32.mrb[0].mxu0
      %1420 = vmatprep.mubr.bf16.mxu0 0
      %1421 = vmatmul.mubr.bf16.gmra.mrb[0].mxu0 %v1331
      %v1422 = vpop.f32.mrb[0].mxu0
      %v1423 = vadd.f32 %v1298, %v1422
      %v1424 = vpop.f32.mrb[0].mxu0
      %v1425 = vpop.f32.mrb[0].mxu0
      %v1426 = vadd.f32 %v1298, %v1425
      %v1427 = vpop.f32.mrb[0].mxu0
      %1428 = vmatprep.mubr.bf16.mxu0 0
      %1429 = vmatmul.mubr.bf16.gmra.mrb[0].mxu0 %v1334
      %v1430 = vpop.f32.mrb[0].mxu0
      %v1431 = vadd.f32 %v1298, %v1430
      %v1432 = vpop.f32.mrb[0].mxu0
      %v1433 = vpop.f32.mrb[0].mxu0
      %v1434 = vadd.f32 %v1298, %v1433
      %v1435 = vpop.f32.mrb[0].mxu0
      %1436 = vmatprep.mubr.bf16.mxu0 0
      %1437 = vmatmul.mubr.bf16.gmra.mrb[0].mxu0 %v1337
      %v1438 = vpop.f32.mrb[0].mxu0
      %v1439 = vadd.f32 %v1298, %v1438
      %v1440 = vpop.f32.mrb[0].mxu0
      %v1441 = vpop.f32.mrb[0].mxu0
      %v1442 = vadd.f32 %v1298, %v1441
      %v1443 = vpop.f32.mrb[0].mxu0
      %1444 = vmatprep.mubr.bf16.mxu0 0
      %1445 = vmatmul.mubr.bf16.gmra.mrb[0].mxu0 %v1340
      %v1446 = vpop.f32.mrb[0].mxu0
      %v1447 = vadd.f32 %v1298, %v1446
      %v1448 = vpop.f32.mrb[0].mxu0
      %v1449 = vpop.f32.mrb[0].mxu0
      %v1450 = vadd.f32 %v1298, %v1449
      %v1451 = vpop.f32.mrb[0].mxu0
      %1452 = vmatprep.mubr.bf16.mxu0 0
      %1453 = vmatmul.mubr.bf16.gmra.mrb[0].mxu0 %v1343
      %v1454 = vpop.f32.mrb[0].mxu0
      %v1455 = vadd.f32 %v1298, %v1454
      %v1456 = vpop.f32.mrb[0].mxu0
      %v1457 = vpop.f32.mrb[0].mxu0
      %v1458 = vadd.f32 %v1298, %v1457
      %v1459 = vpop.f32.mrb[0].mxu0
      %1460 = vmatprep.mubr.bf16.mxu0 0
      %1461 = vmatmul.mubr.bf16.gmra.mrb[0].mxu0 %v1346
      %v1462 = vpop.f32.mrb[0].mxu0
      %v1463 = vadd.f32 %v1298, %v1462
      %v1464 = vpop.f32.mrb[0].mxu0
      %v1465 = vpop.f32.mrb[0].mxu0
      %v1466 = vadd.f32 %v1298, %v1465
      %v1467 = vpop.f32.mrb[0].mxu0
      %1468 = vmatprep.mubr.bf16.mxu0 0
      %1469 = vmatmul.mubr.bf16.gmra.mrb[0].mxu0 %v1349
      %v1470 = vpop.f32.mrb[0].mxu0
      %v1471 = vadd.f32 %v1298, %v1470
      %v1472 = vpop.f32.mrb[0].mxu0
      %v1473 = vpop.f32.mrb[0].mxu0
      %v1474 = vadd.f32 %v1298, %v1473
      %v1475 = vpop.f32.mrb[0].mxu0
      %1476 = vmatprep.mubr.bf16.mxu0 0
      %1477 = vmatmul.mubr.bf16.gmra.mrb[0].mxu0 %v1352
      %v1478 = vpop.f32.mrb[0].mxu0
      %v1479 = vadd.f32 %v1298, %v1478
      %v1480 = vpop.f32.mrb[0].mxu0
      %v1481 = vpop.f32.mrb[0].mxu0
      %v1482 = vadd.f32 %v1298, %v1481
      %v1483 = vpop.f32.mrb[0].mxu0
      %1484 = vmatprep.mubr.bf16.mxu0 0
      %1485 = vmatmul.mubr.bf16.gmra.mrb[0].mxu0 %v1355
      %v1486 = vpop.f32.mrb[0].mxu0
      %v1487 = vadd.f32 %v1298, %v1486
      %v1488 = vpop.f32.mrb[0].mxu0
      %v1489 = vpop.f32.mrb[0].mxu0
      %v1490 = vadd.f32 %v1298, %v1489
      %v1491 = vpop.f32.mrb[0].mxu0
      %1492 = vmatprep.mubr.bf16.mxu0 0
      %1493 = vmatmul.mubr.bf16.gmra.mrb[0].mxu0 %v1358
      %v1494 = vpop.f32.mrb[0].mxu0
      %v1495 = vadd.f32 %v1298, %v1494
      %v1496 = vpop.f32.mrb[0].mxu0
      %v1497 = vpop.f32.mrb[0].mxu0
      %v1498 = vadd.f32 %v1298, %v1497
      %v1499 = vpop.f32.mrb[0].mxu0
      %1500 = vmatprep.mubr.bf16.mxu0 0
      %1501 = vmatmul.mubr.bf16.gmra.mrb[0].mxu0 %v1361
      %v1502 = vpop.f32.mrb[0].mxu0
      %v1503 = vadd.f32 %v1298, %v1502
      %v1504 = vpop.f32.mrb[0].mxu0
      %v1505 = vpop.f32.mrb[0].mxu0
      %v1506 = vadd.f32 %v1298, %v1505
      %v1507 = vpop.f32.mrb[0].mxu0
      %1508 = vmatprep.mubr.bf16.mxu0 0
      %1509 = vmatmul.mubr.bf16.gmra.mrb[0].mxu0 %v1364
      %v1510 = vpop.f32.mrb[0].mxu0
      %v1511 = vadd.f32 %v1298, %v1510
      %v1512 = vpop.f32.mrb[0].mxu0
      %v1513 = vpop.f32.mrb[0].mxu0
      %v1514 = vadd.f32 %v1298, %v1513
      %v1515 = vpop.f32.mrb[0].mxu0
      %1516 = vmatprep.mubr.bf16.mxu0 0
      %1517 = vmatmul.mubr.bf16.gmra.mrb[0].mxu0 %v1367
      %v1518 = vpop.f32.mrb[0].mxu0
      %v1519 = vadd.f32 %v1298, %v1518
      %v1520 = vpop.f32.mrb[0].mxu0
      %v1521 = vpop.f32.mrb[0].mxu0
      %v1522 = vadd.f32 %v1298, %v1521
      %v1523 = vpop.f32.mrb[0].mxu0
      %1524 = vmatprep.mubr.bf16.mxu0 0
      %1525 = vmatmul.mubr.bf16.gmra.mrb[0].mxu0 %v1370
      %v1526 = vpop.f32.mrb[0].mxu0
      %v1527 = vadd.f32 %v1298, %v1526
      %v1528 = vpop.f32.mrb[0].mxu0
      %v1529 = vpop.f32.mrb[0].mxu0
      %v1530 = vadd.f32 %v1298, %v1529
      %v1531 = vpop.f32.mrb[0].mxu0
      %1532 = vdwg.mxu0
      %v1533 = vmax.f32 %v1407, 0.0
      %v1534 = vmax.f32 %v1410, 0.0
      %v1535 = vmax.f32 %v1415, 0.0
      %v1536 = vmax.f32 %v1418, 0.0
      %v1537 = vmax.f32 %v1423, 0.0
      %v1538 = vmax.f32 %v1426, 0.0
      %v1539 = vmax.f32 %v1431, 0.0
      %v1540 = vmax.f32 %v1434, 0.0
      %v1541 = vmax.f32 %v1439, 0.0
      %v1542 = vmax.f32 %v1442, 0.0
      %v1543 = vmax.f32 %v1447, 0.0
      %v1544 = vmax.f32 %v1450, 0.0
      %v1545 = vmax.f32 %v1455, 0.0
      %v1546 = vmax.f32 %v1458, 0.0
      %v1547 = vmax.f32 %v1463, 0.0
      %v1548 = vmax.f32 %v1466, 0.0
      %v1549 = vmax.f32 %v1471, 0.0
      %v1550 = vmax.f32 %v1474, 0.0
      %v1551 = vmax.f32 %v1479, 0.0
      %v1552 = vmax.f32 %v1482, 0.0
      %v1553 = vmax.f32 %v1487, 0.0
      %v1554 = vmax.f32 %v1490, 0.0
      %v1555 = vmax.f32 %v1495, 0.0
      %v1556 = vmax.f32 %v1498, 0.0
      %v1557 = vmax.f32 %v1503, 0.0
      %v1558 = vmax.f32 %v1506, 0.0
      %v1559 = vmax.f32 %v1511, 0.0
      %v1560 = vmax.f32 %v1514, 0.0
      %v1561 = vmax.f32 %v1519, 0.0
      %v1562 = vmax.f32 %v1522, 0.0
      %v1563 = vmax.f32 %v1527, 0.0
      %v1564 = vmax.f32 %v1530, 0.0
      %v1565 = vmax.f32 %v1533, %v1537
      %v1566 = vmax.f32 %v1534, %v1538
      %v1567 = vmax.f32 %v1535, %v1539
      %v1568 = vmax.f32 %v1536, %v1540
      %v1569 = vmax.f32 %v1565, %v1541
      %v1570 = vmax.f32 %v1566, %v1542
      %v1571 = vmax.f32 %v1567, %v1543
      %v1572 = vmax.f32 %v1568, %v1544
      %v1573 = vmax.f32 %v1569, %v1545
      %v1574 = vmax.f32 %v1570, %v1546
      %v1575 = vmax.f32 %v1571, %v1547
      %v1576 = vmax.f32 %v1572, %v1548
      %v1577 = vmax.f32 %v1573, %v1549
      %v1578 = vmax.f32 %v1574, %v1550
      %v1579 = vmax.f32 %v1575, %v1551
      %v1580 = vmax.f32 %v1576, %v1552
      %v1581 = vmax.f32 %v1577, %v1553
      %v1582 = vmax.f32 %v1578, %v1554
      %v1583 = vmax.f32 %v1579, %v1555
      %v1584 = vmax.f32 %v1580, %v1556
      %v1585 = vmax.f32 %v1581, %v1557
      %v1586 = vmax.f32 %v1582, %v1558
      %v1587 = vmax.f32 %v1583, %v1559
      %v1588 = vmax.f32 %v1584, %v1560
      %v1589 = vmax.f32 %v1585, %v1561
      %v1590 = vmax.f32 %v1586, %v1562
      %v1591 = vmax.f32 %v1587, %v1563
      %v1592 = vmax.f32 %v1588, %v1564
      %v1593 = vpack.c.bf16 %v1534, %v1533
      %v1594 = vpack.c.bf16 %v1536, %v1535
      %v1595 = vpack.c.bf16 %v1538, %v1537
      %v1596 = vpack.c.bf16 %v1540, %v1539
      %v1597 = vpack.c.bf16 %v1542, %v1541
      %v1598 = vpack.c.bf16 %v1544, %v1543
      %v1599 = vpack.c.bf16 %v1546, %v1545
      %v1600 = vpack.c.bf16 %v1548, %v1547
      %v1601 = vpack.c.bf16 %v1550, %v1549
      %v1602 = vpack.c.bf16 %v1552, %v1551
      %v1603 = vpack.c.bf16 %v1554, %v1553
      %v1604 = vpack.c.bf16 %v1556, %v1555
      %v1605 = vpack.c.bf16 %v1558, %v1557
      %v1606 = vpack.c.bf16 %v1560, %v1559
      %v1607 = vpack.c.bf16 %v1562, %v1561
      %v1608 = vpack.c.bf16 %v1564, %v1563
      %v1609 = vld [vmem:[%s7] sm:$0xff]
      %v1610 = vld [vmem:[%s7 + $0x8] sm:$0xff]
      %v1611 = vld [vmem:[%s7 + $0x10] sm:$0xff]
      %v1612 = vld [vmem:[%s7 + $0x18] sm:$0xff]
      %v1613 = vld [vmem:[%s7 + $0x20] sm:$0xff]
      %v1614 = vld [vmem:[%s7 + $0x28] sm:$0xff]
      %v1615 = vld [vmem:[%s7 + $0x30] sm:$0xff]
      %v1616 = vld [vmem:[%s7 + $0x38] sm:$0xff]
      %v1617 = vld [vmem:[%s7 + $0x40] sm:$0xff]
      %v1618 = vld [vmem:[%s7 + $0x48] sm:$0xff]
      %v1619 = vld [vmem:[%s7 + $0x50] sm:$0xff]
      %v1620 = vld [vmem:[%s7 + $0x58] sm:$0xff]
      %v1621 = vld [vmem:[%s7 + $0x60] sm:$0xff]
      %v1622 = vld [vmem:[%s7 + $0x68] sm:$0xff]
      %v1623 = vld [vmem:[%s7 + $0x70] sm:$0xff]
      %v1624 = vld [vmem:[%s7 + $0x78] sm:$0xff]
      %v1625 = vld [vmem:[%s8] sm:$0x3]
      %v1627 = vlaneseq
      %v1628 = vshrl.u32 %v1627, 7
      %v1629 = vsub.s32 0, %v1628
      %v1630 = vrot.slane %v1625, %v1629
      %v1631 = vlaneseq
      %v1632 = vshrl.u32 %v1631, 7
      %v1633 = vsub.s32 1, %v1632
      %v1634 = vrot.slane %v1625, %v1633
      %v1653 = vunpack.c.l.b16 %v1609
      %v1654 = vunpack.c.h.b16 %v1609
      %v1655 = vunpack.c.l.b16 %v1610
      %v1656 = vunpack.c.h.b16 %v1610
      %v1657 = vunpack.c.l.b16 %v1611
      %v1658 = vunpack.c.h.b16 %v1611
      %v1659 = vunpack.c.l.b16 %v1612
      %v1660 = vunpack.c.h.b16 %v1612
      %v1661 = vunpack.c.l.b16 %v1613
      %v1662 = vunpack.c.h.b16 %v1613
      %v1663 = vunpack.c.l.b16 %v1614
      %v1664 = vunpack.c.h.b16 %v1614
      %v1665 = vunpack.c.l.b16 %v1615
      %v1666 = vunpack.c.h.b16 %v1615
      %v1667 = vunpack.c.l.b16 %v1616
      %v1668 = vunpack.c.h.b16 %v1616
      %v1669 = vunpack.c.l.b16 %v1617
      %v1670 = vunpack.c.h.b16 %v1617
      %v1671 = vunpack.c.l.b16 %v1618
      %v1672 = vunpack.c.h.b16 %v1618
      %v1673 = vunpack.c.l.b16 %v1619
      %v1674 = vunpack.c.h.b16 %v1619
      %v1675 = vunpack.c.l.b16 %v1620
      %v1676 = vunpack.c.h.b16 %v1620
      %v1677 = vunpack.c.l.b16 %v1621
      %v1678 = vunpack.c.h.b16 %v1621
      %v1679 = vunpack.c.l.b16 %v1622
      %v1680 = vunpack.c.h.b16 %v1622
      %v1681 = vunpack.c.l.b16 %v1623
      %v1682 = vunpack.c.h.b16 %v1623
      %v1683 = vunpack.c.l.b16 %v1624
      %v1684 = vunpack.c.h.b16 %v1624
      %v1685 = vpack.c.b16 %v1655, %v1653
      %v1686 = vpack.c.b16 %v1656, %v1654
      %v1687 = vpack.c.b16 %v1659, %v1657
      %v1688 = vpack.c.b16 %v1660, %v1658
      %v1689 = vpack.c.b16 %v1663, %v1661
      %v1690 = vpack.c.b16 %v1664, %v1662
      %v1691 = vpack.c.b16 %v1667, %v1665
      %v1692 = vpack.c.b16 %v1668, %v1666
      %v1693 = vpack.c.b16 %v1671, %v1669
      %v1694 = vpack.c.b16 %v1672, %v1670
      %v1695 = vpack.c.b16 %v1675, %v1673
      %v1696 = vpack.c.b16 %v1676, %v1674
      %v1697 = vpack.c.b16 %v1679, %v1677
      %v1698 = vpack.c.b16 %v1680, %v1678
      %v1699 = vpack.c.b16 %v1683, %v1681
      %v1700 = vpack.c.b16 %v1684, %v1682
      %1717 = vmatprep.subr.bf16.mxu0 %v1686
      %1718 = vmatpush1.bf16.msra.mxu0 %v1685
      %1719 = vmatprep.subr.bf16.mxu0 %v1688
      %1720 = vmatpush1.bf16.msra.mxu0 %v1687
      %1721 = vmatprep.subr.bf16.mxu0 %v1690
      %1722 = vmatpush1.bf16.msra.mxu0 %v1689
      %1723 = vmatprep.subr.bf16.mxu0 %v1692
      %1724 = vmatpush1.bf16.msra.mxu0 %v1691
      %1725 = vmatprep.subr.bf16.mxu0 %v1694
      %1726 = vmatpush1.bf16.msra.mxu0 %v1693
      %1727 = vmatprep.subr.bf16.mxu0 %v1696
      %1728 = vmatpush1.bf16.msra.mxu0 %v1695
      %1729 = vmatprep.subr.bf16.mxu0 %v1698
      %1730 = vmatpush1.bf16.msra.mxu0 %v1697
      %1731 = vmatprep.subr.bf16.mxu0 %v1700
      %1732 = vmatpush1.bf16.msra.mxu0 %v1699
      %1733 = vmatprep.subr.bf16.mxu0 0
      %1734 = vmatpush1.bf16.msra.mxu0 0
      %1735 = vmatprep.subr.bf16.mxu0 0
      %1736 = vmatpush1.bf16.msra.mxu0 0
      %1737 = vmatprep.subr.bf16.mxu0 0
      %1738 = vmatpush1.bf16.msra.mxu0 0
      %1739 = vmatprep.subr.bf16.mxu0 0
      %1740 = vmatpush1.bf16.msra.mxu0 0
      %1741 = vmatprep.subr.bf16.mxu0 0
      %1742 = vmatpush1.bf16.msra.mxu0 0
      %1743 = vmatprep.subr.bf16.mxu0 0
      %1744 = vmatpush1.bf16.msra.mxu0 0
      %1745 = vmatprep.subr.bf16.mxu0 0
      %1746 = vmatpush1.bf16.msra.mxu0 0
      %1747 = vmatprep.subr.bf16.mxu0 0
      %1748 = vmatpush1.bf16.msra.mxu0 0
      %1749 = vmatprep.mubr.bf16.mxu0 0
      %1750 = vmatmul.mubr.bf16.gmra.mrb[0].mxu0 %v1593
      %v1751 = vpop.f32.mrb[0].mxu0
      %v1752 = vadd.f32 %v1630, %v1751
      %v1753 = vpop.f32.mrb[0].mxu0
      %v1754 = vadd.f32 %v1634, %v1753
      %v1755 = vpop.f32.mrb[0].mxu0
      %v1756 = vadd.f32 %v1630, %v1755
      %v1757 = vpop.f32.mrb[0].mxu0
      %v1758 = vadd.f32 %v1634, %v1757
      %1759 = vmatprep.mubr.bf16.mxu0 0
      %1760 = vmatmul.mubr.bf16.gmra.mrb[0].mxu0 %v1594
      %v1761 = vpop.f32.mrb[0].mxu0
      %v1762 = vadd.f32 %v1630, %v1761
      %v1763 = vpop.f32.mrb[0].mxu0
      %v1764 = vadd.f32 %v1634, %v1763
      %v1765 = vpop.f32.mrb[0].mxu0
      %v1766 = vadd.f32 %v1630, %v1765
      %v1767 = vpop.f32.mrb[0].mxu0
      %v1768 = vadd.f32 %v1634, %v1767
      %1769 = vmatprep.mubr.bf16.mxu0 0
      %1770 = vmatmul.mubr.bf16.gmra.mrb[0].mxu0 %v1595
      %v1771 = vpop.f32.mrb[0].mxu0
      %v1772 = vadd.f32 %v1630, %v1771
      %v1773 = vpop.f32.mrb[0].mxu0
      %v1774 = vadd.f32 %v1634, %v1773
      %v1775 = vpop.f32.mrb[0].mxu0
      %v1776 = vadd.f32 %v1630, %v1775
      %v1777 = vpop.f32.mrb[0].mxu0
      %v1778 = vadd.f32 %v1634, %v1777
      %1779 = vmatprep.mubr.bf16.mxu0 0
      %1780 = vmatmul.mubr.bf16.gmra.mrb[0].mxu0 %v1596
      %v1781 = vpop.f32.mrb[0].mxu0
      %v1782 = vadd.f32 %v1630, %v1781
      %v1783 = vpop.f32.mrb[0].mxu0
      %v1784 = vadd.f32 %v1634, %v1783
      %v1785 = vpop.f32.mrb[0].mxu0
      %v1786 = vadd.f32 %v1630, %v1785
      %v1787 = vpop.f32.mrb[0].mxu0
      %v1788 = vadd.f32 %v1634, %v1787
      %1789 = vmatprep.mubr.bf16.mxu0 0
      %1790 = vmatmul.mubr.bf16.gmra.mrb[0].mxu0 %v1597
      %v1791 = vpop.f32.mrb[0].mxu0
      %v1792 = vadd.f32 %v1630, %v1791
      %v1793 = vpop.f32.mrb[0].mxu0
      %v1794 = vadd.f32 %v1634, %v1793
      %v1795 = vpop.f32.mrb[0].mxu0
      %v1796 = vadd.f32 %v1630, %v1795
      %v1797 = vpop.f32.mrb[0].mxu0
      %v1798 = vadd.f32 %v1634, %v1797
      %1799 = vmatprep.mubr.bf16.mxu0 0
      %1800 = vmatmul.mubr.bf16.gmra.mrb[0].mxu0 %v1598
      %v1801 = vpop.f32.mrb[0].mxu0
      %v1802 = vadd.f32 %v1630, %v1801
      %v1803 = vpop.f32.mrb[0].mxu0
      %v1804 = vadd.f32 %v1634, %v1803
      %v1805 = vpop.f32.mrb[0].mxu0
      %v1806 = vadd.f32 %v1630, %v1805
      %v1807 = vpop.f32.mrb[0].mxu0
      %v1808 = vadd.f32 %v1634, %v1807
      %1809 = vmatprep.mubr.bf16.mxu0 0
      %1810 = vmatmul.mubr.bf16.gmra.mrb[0].mxu0 %v1599
      %v1811 = vpop.f32.mrb[0].mxu0
      %v1812 = vadd.f32 %v1630, %v1811
      %v1813 = vpop.f32.mrb[0].mxu0
      %v1814 = vadd.f32 %v1634, %v1813
      %v1815 = vpop.f32.mrb[0].mxu0
      %v1816 = vadd.f32 %v1630, %v1815
      %v1817 = vpop.f32.mrb[0].mxu0
      %v1818 = vadd.f32 %v1634, %v1817
      %1819 = vmatprep.mubr.bf16.mxu0 0
      %1820 = vmatmul.mubr.bf16.gmra.mrb[0].mxu0 %v1600
      %v1821 = vpop.f32.mrb[0].mxu0
      %v1822 = vadd.f32 %v1630, %v1821
      %v1823 = vpop.f32.mrb[0].mxu0
      %v1824 = vadd.f32 %v1634, %v1823
      %v1825 = vpop.f32.mrb[0].mxu0
      %v1826 = vadd.f32 %v1630, %v1825
      %v1827 = vpop.f32.mrb[0].mxu0
      %v1828 = vadd.f32 %v1634, %v1827
      %1829 = vmatprep.mubr.bf16.mxu0 0
      %1830 = vmatmul.mubr.bf16.gmra.mrb[0].mxu0 %v1601
      %v1831 = vpop.f32.mrb[0].mxu0
      %v1832 = vadd.f32 %v1630, %v1831
      %v1833 = vpop.f32.mrb[0].mxu0
      %v1834 = vadd.f32 %v1634, %v1833
      %v1835 = vpop.f32.mrb[0].mxu0
      %v1836 = vadd.f32 %v1630, %v1835
      %v1837 = vpop.f32.mrb[0].mxu0
      %v1838 = vadd.f32 %v1634, %v1837
      %1839 = vmatprep.mubr.bf16.mxu0 0
      %1840 = vmatmul.mubr.bf16.gmra.mrb[0].mxu0 %v1602
      %v1841 = vpop.f32.mrb[0].mxu0
      %v1842 = vadd.f32 %v1630, %v1841
      %v1843 = vpop.f32.mrb[0].mxu0
      %v1844 = vadd.f32 %v1634, %v1843
      %v1845 = vpop.f32.mrb[0].mxu0
      %v1846 = vadd.f32 %v1630, %v1845
      %v1847 = vpop.f32.mrb[0].mxu0
      %v1848 = vadd.f32 %v1634, %v1847
      %1849 = vmatprep.mubr.bf16.mxu0 0
      %1850 = vmatmul.mubr.bf16.gmra.mrb[0].mxu0 %v1603
      %v1851 = vpop.f32.mrb[0].mxu0
      %v1852 = vadd.f32 %v1630, %v1851
      %v1853 = vpop.f32.mrb[0].mxu0
      %v1854 = vadd.f32 %v1634, %v1853
      %v1855 = vpop.f32.mrb[0].mxu0
      %v1856 = vadd.f32 %v1630, %v1855
      %v1857 = vpop.f32.mrb[0].mxu0
      %v1858 = vadd.f32 %v1634, %v1857
      %1859 = vmatprep.mubr.bf16.mxu0 0
      %1860 = vmatmul.mubr.bf16.gmra.mrb[0].mxu0 %v1604
      %v1861 = vpop.f32.mrb[0].mxu0
      %v1862 = vadd.f32 %v1630, %v1861
      %v1863 = vpop.f32.mrb[0].mxu0
      %v1864 = vadd.f32 %v1634, %v1863
      %v1865 = vpop.f32.mrb[0].mxu0
      %v1866 = vadd.f32 %v1630, %v1865
      %v1867 = vpop.f32.mrb[0].mxu0
      %v1868 = vadd.f32 %v1634, %v1867
      %1869 = vmatprep.mubr.bf16.mxu0 0
      %1870 = vmatmul.mubr.bf16.gmra.mrb[0].mxu0 %v1605
      %v1871 = vpop.f32.mrb[0].mxu0
      %v1872 = vadd.f32 %v1630, %v1871
      %v1873 = vpop.f32.mrb[0].mxu0
      %v1874 = vadd.f32 %v1634, %v1873
      %v1875 = vpop.f32.mrb[0].mxu0
      %v1876 = vadd.f32 %v1630, %v1875
      %v1877 = vpop.f32.mrb[0].mxu0
      %v1878 = vadd.f32 %v1634, %v1877
      %1879 = vmatprep.mubr.bf16.mxu0 0
      %1880 = vmatmul.mubr.bf16.gmra.mrb[0].mxu0 %v1606
      %v1881 = vpop.f32.mrb[0].mxu0
      %v1882 = vadd.f32 %v1630, %v1881
      %v1883 = vpop.f32.mrb[0].mxu0
      %v1884 = vadd.f32 %v1634, %v1883
      %v1885 = vpop.f32.mrb[0].mxu0
      %v1886 = vadd.f32 %v1630, %v1885
      %v1887 = vpop.f32.mrb[0].mxu0
      %v1888 = vadd.f32 %v1634, %v1887
      %1889 = vmatprep.mubr.bf16.mxu0 0
      %1890 = vmatmul.mubr.bf16.gmra.mrb[0].mxu0 %v1607
      %v1891 = vpop.f32.mrb[0].mxu0
      %v1892 = vadd.f32 %v1630, %v1891
      %v1893 = vpop.f32.mrb[0].mxu0
      %v1894 = vadd.f32 %v1634, %v1893
      %v1895 = vpop.f32.mrb[0].mxu0
      %v1896 = vadd.f32 %v1630, %v1895
      %v1897 = vpop.f32.mrb[0].mxu0
      %v1898 = vadd.f32 %v1634, %v1897
      %1899 = vmatprep.mubr.bf16.mxu0 0
      %1900 = vmatmul.mubr.bf16.gmra.mrb[0].mxu0 %v1608
      %v1901 = vpop.f32.mrb[0].mxu0
      %v1902 = vadd.f32 %v1630, %v1901
      %v1903 = vpop.f32.mrb[0].mxu0
      %v1904 = vadd.f32 %v1634, %v1903
      %v1905 = vpop.f32.mrb[0].mxu0
      %v1906 = vadd.f32 %v1630, %v1905
      %v1907 = vpop.f32.mrb[0].mxu0
      %v1908 = vadd.f32 %v1634, %v1907
      %1909 = vdwg.mxu0
      %v1910 = vmax.f32 %v1752, 0.0
      %v1911 = vmax.f32 %v1754, 0.0
      %v1912 = vmax.f32 %v1756, 0.0
      %v1913 = vmax.f32 %v1758, 0.0
      %v1914 = vmax.f32 %v1762, 0.0
      %v1915 = vmax.f32 %v1764, 0.0
      %v1916 = vmax.f32 %v1766, 0.0
      %v1917 = vmax.f32 %v1768, 0.0
      %v1918 = vmax.f32 %v1772, 0.0
      %v1919 = vmax.f32 %v1774, 0.0
      %v1920 = vmax.f32 %v1776, 0.0
      %v1921 = vmax.f32 %v1778, 0.0
      %v1922 = vmax.f32 %v1782, 0.0
      %v1923 = vmax.f32 %v1784, 0.0
      %v1924 = vmax.f32 %v1786, 0.0
      %v1925 = vmax.f32 %v1788, 0.0
      %v1926 = vmax.f32 %v1792, 0.0
      %v1927 = vmax.f32 %v1794, 0.0
      %v1928 = vmax.f32 %v1796, 0.0
      %v1929 = vmax.f32 %v1798, 0.0
      %v1930 = vmax.f32 %v1802, 0.0
      %v1931 = vmax.f32 %v1804, 0.0
      %v1932 = vmax.f32 %v1806, 0.0
      %v1933 = vmax.f32 %v1808, 0.0
      %v1934 = vmax.f32 %v1812, 0.0
      %v1935 = vmax.f32 %v1814, 0.0
      %v1936 = vmax.f32 %v1816, 0.0
      %v1937 = vmax.f32 %v1818, 0.0
      %v1938 = vmax.f32 %v1822, 0.0
      %v1939 = vmax.f32 %v1824, 0.0
      %v1940 = vmax.f32 %v1826, 0.0
      %v1941 = vmax.f32 %v1828, 0.0
      %v1942 = vmax.f32 %v1832, 0.0
      %v1943 = vmax.f32 %v1834, 0.0
      %v1944 = vmax.f32 %v1836, 0.0
      %v1945 = vmax.f32 %v1838, 0.0
      %v1946 = vmax.f32 %v1842, 0.0
      %v1947 = vmax.f32 %v1844, 0.0
      %v1948 = vmax.f32 %v1846, 0.0
      %v1949 = vmax.f32 %v1848, 0.0
      %v1950 = vmax.f32 %v1852, 0.0
      %v1951 = vmax.f32 %v1854, 0.0
      %v1952 = vmax.f32 %v1856, 0.0
      %v1953 = vmax.f32 %v1858, 0.0
      %v1954 = vmax.f32 %v1862, 0.0
      %v1955 = vmax.f32 %v1864, 0.0
      %v1956 = vmax.f32 %v1866, 0.0
      %v1957 = vmax.f32 %v1868, 0.0
      %v1958 = vmax.f32 %v1872, 0.0
      %v1959 = vmax.f32 %v1874, 0.0
      %v1960 = vmax.f32 %v1876, 0.0
      %v1961 = vmax.f32 %v1878, 0.0
      %v1962 = vmax.f32 %v1882, 0.0
      %v1963 = vmax.f32 %v1884, 0.0
      %v1964 = vmax.f32 %v1886, 0.0
      %v1965 = vmax.f32 %v1888, 0.0
      %v1966 = vmax.f32 %v1892, 0.0
      %v1967 = vmax.f32 %v1894, 0.0
      %v1968 = vmax.f32 %v1896, 0.0
      %v1969 = vmax.f32 %v1898, 0.0
      %v1970 = vmax.f32 %v1902, 0.0
      %v1971 = vmax.f32 %v1904, 0.0
      %v1972 = vmax.f32 %v1906, 0.0
      %v1973 = vmax.f32 %v1908, 0.0
      %v1974 = vmax.f32 %v1910, %v1918
      %v1975 = vmax.f32 %v1911, %v1919
      %v1976 = vmax.f32 %v1912, %v1920
      %v1977 = vmax.f32 %v1913, %v1921
      %v1978 = vmax.f32 %v1914, %v1922
      %v1979 = vmax.f32 %v1915, %v1923
      %v1980 = vmax.f32 %v1916, %v1924
      %v1981 = vmax.f32 %v1917, %v1925
      %v1982 = vmax.f32 %v1974, %v1926
      %v1983 = vmax.f32 %v1975, %v1927
      %v1984 = vmax.f32 %v1976, %v1928
      %v1985 = vmax.f32 %v1977, %v1929
      %v1986 = vmax.f32 %v1978, %v1930
      %v1987 = vmax.f32 %v1979, %v1931
      %v1988 = vmax.f32 %v1980, %v1932
      %v1989 = vmax.f32 %v1981, %v1933
      %v1990 = vmax.f32 %v1982, %v1934
      %v1991 = vmax.f32 %v1983, %v1935
      %v1992 = vmax.f32 %v1984, %v1936
      %v1993 = vmax.f32 %v1985, %v1937
      %v1994 = vmax.f32 %v1986, %v1938
      %v1995 = vmax.f32 %v1987, %v1939
      %v1996 = vmax.f32 %v1988, %v1940
      %v1997 = vmax.f32 %v1989, %v1941
      %v1998 = vmax.f32 %v1990, %v1942
      %v1999 = vmax.f32 %v1991, %v1943
      %v2000 = vmax.f32 %v1992, %v1944
      %v2001 = vmax.f32 %v1993, %v1945
      %v2002 = vmax.f32 %v1994, %v1946
      %v2003 = vmax.f32 %v1995, %v1947
      %v2004 = vmax.f32 %v1996, %v1948
      %v2005 = vmax.f32 %v1997, %v1949
      %v2006 = vmax.f32 %v1998, %v1950
      %v2007 = vmax.f32 %v1999, %v1951
      %v2008 = vmax.f32 %v2000, %v1952
      %v2009 = vmax.f32 %v2001, %v1953
      %v2010 = vmax.f32 %v2002, %v1954
      %v2011 = vmax.f32 %v2003, %v1955
      %v2012 = vmax.f32 %v2004, %v1956
      %v2013 = vmax.f32 %v2005, %v1957
      %v2014 = vmax.f32 %v2006, %v1958
      %v2015 = vmax.f32 %v2007, %v1959
      %v2016 = vmax.f32 %v2008, %v1960
      %v2017 = vmax.f32 %v2009, %v1961
      %v2018 = vmax.f32 %v2010, %v1962
      %v2019 = vmax.f32 %v2011, %v1963
      %v2020 = vmax.f32 %v2012, %v1964
      %v2021 = vmax.f32 %v2013, %v1965
      %v2022 = vmax.f32 %v2014, %v1966
      %v2023 = vmax.f32 %v2015, %v1967
      %v2024 = vmax.f32 %v2016, %v1968
      %v2025 = vmax.f32 %v2017, %v1969
      %v2026 = vmax.f32 %v2018, %v1970
      %v2027 = vmax.f32 %v2019, %v1971
      %v2028 = vmax.f32 %v2020, %v1972
      %v2029 = vmax.f32 %v2021, %v1973
      %v2030 = vpack.c.bf16 %v941, %v940
      %v2031 = vpack.c.bf16 %v943, %v942
      %v2032 = vld [vmem:[%s9] sm:$0xf]
      %v2033 = vld [vmem:[%s9 + $0x4] sm:$0xf]
      %v2034 = vld [vmem:[%s9 + $0x8] sm:$0xf]
      %v2035 = vld [vmem:[%s9 + $0xc] sm:$0xf]
      %v2036 = vld [vmem:[%s9 + $0x10] sm:$0xf]
      %v2037 = vld [vmem:[%s9 + $0x14] sm:$0xf]
      %v2038 = vld [vmem:[%s9 + $0x18] sm:$0xf]
      %v2039 = vld [vmem:[%s9 + $0x1c] sm:$0xf]
      %v2040 = vpack.c.bf16 %v1266, %v1265
      %v2041 = vpack.c.bf16 %v1268, %v1267
      %v2042 = vld [vmem:[%s9 + $0x20] sm:$0xf]
      %v2043 = vld [vmem:[%s9 + $0x24] sm:$0xf]
      %v2044 = vld [vmem:[%s9 + $0x28] sm:$0xf]
      %v2045 = vld [vmem:[%s9 + $0x2c] sm:$0xf]
      %v2046 = vld [vmem:[%s9 + $0x30] sm:$0xf]
      %v2047 = vld [vmem:[%s9 + $0x34] sm:$0xf]
      %v2048 = vld [vmem:[%s9 + $0x38] sm:$0xf]
      %v2049 = vld [vmem:[%s9 + $0x3c] sm:$0xf]
      %v2058 = vunpack.c.l.b16 %v2042
      %v2059 = vunpack.c.l.b16 %v2043
      %v2060 = vunpack.c.l.b16 %v2044
      %v2061 = vunpack.c.l.b16 %v2045
      %v2062 = vunpack.c.l.b16 %v2046
      %v2063 = vunpack.c.l.b16 %v2047
      %v2064 = vunpack.c.l.b16 %v2048
      %v2065 = vunpack.c.l.b16 %v2049
      %v2066 = vpack.c.b16 %v2059, %v2058
      %v2067 = vpack.c.b16 %v2061, %v2060
      %v2068 = vpack.c.b16 %v2063, %v2062
      %v2069 = vpack.c.b16 %v2065, %v2064
      %v2075 = vsel %vm999, %v2040, 0
      %v2078 = vsel %vm999, %v2041, 0
      %2080 = vmatprep.subr.bf16.mxu0 0
      %2081 = vmatpush1.bf16.msra.mxu0 %v2066
      %2082 = vmatprep.subr.bf16.mxu0 0
      %2083 = vmatpush1.bf16.msra.mxu0 %v2067
      %2084 = vmatprep.subr.bf16.mxu0 0
      %2085 = vmatpush1.bf16.msra.mxu0 %v2068
      %2086 = vmatprep.subr.bf16.mxu0 0
      %2087 = vmatpush1.bf16.msra.mxu0 %v2069
      %2088 = vmatprep.subr.bf16.mxu0 0
      %2089 = vmatpush1.bf16.msra.mxu0 0
      %2090 = vmatprep.subr.bf16.mxu0 0
      %2091 = vmatpush1.bf16.msra.mxu0 0
      %2092 = vmatprep.subr.bf16.mxu0 0
      %2093 = vmatpush1.bf16.msra.mxu0 0
      %2094 = vmatprep.subr.bf16.mxu0 0
      %2095 = vmatpush1.bf16.msra.mxu0 0
      %2096 = vmatprep.subr.bf16.mxu0 0
      %2097 = vmatpush1.bf16.msra.mxu0 0
      %2098 = vmatprep.subr.bf16.mxu0 0
      %2099 = vmatpush1.bf16.msra.mxu0 0
      %2100 = vmatprep.subr.bf16.mxu0 0
      %2101 = vmatpush1.bf16.msra.mxu0 0
      %2102 = vmatprep.subr.bf16.mxu0 0
      %2103 = vmatpush1.bf16.msra.mxu0 0
      %2104 = vmatprep.subr.bf16.mxu0 0
      %2105 = vmatpush1.bf16.msra.mxu0 0
      %2106 = vmatprep.subr.bf16.mxu0 0
      %2107 = vmatpush1.bf16.msra.mxu0 0
      %2108 = vmatprep.subr.bf16.mxu0 0
      %2109 = vmatpush1.bf16.msra.mxu0 0
      %2110 = vmatprep.subr.bf16.mxu0 0
      %2111 = vmatpush1.bf16.msra.mxu0 0
      %2112 = vmatprep.mubr.bf16.mxu0 0
      %2113 = vmatmul.mubr.bf16.gmra.mrb[0].mxu0 %v2075
      %v2114 = vpop.f32.mrb[0].mxu0
      %v2115 = vadd.f32 0.0, %v2114
      %v2116 = vpop.f32.mrb[0].mxu0
      %v2117 = vpop.f32.mrb[0].mxu0
      %v2118 = vadd.f32 0.0, %v2117
      %v2119 = vpop.f32.mrb[0].mxu0
      %2120 = vmatprep.mubr.bf16.mxu0 0
      %2121 = vmatmul.mubr.bf16.gmra.mrb[0].mxu0 %v2078
      %v2122 = vpop.f32.mrb[0].mxu0
      %v2123 = vadd.f32 0.0, %v2122
      %v2124 = vpop.f32.mrb[0].mxu0
      %v2125 = vpop.f32.mrb[0].mxu0
      %v2126 = vadd.f32 0.0, %v2125
      %v2127 = vpop.f32.mrb[0].mxu0
      %2128 = vdwg.mxu0
      %v2137 = vunpack.c.l.b16 %v2032
      %v2138 = vunpack.c.l.b16 %v2033
      %v2139 = vunpack.c.l.b16 %v2034
      %v2140 = vunpack.c.l.b16 %v2035
      %v2141 = vunpack.c.l.b16 %v2036
      %v2142 = vunpack.c.l.b16 %v2037
      %v2143 = vunpack.c.l.b16 %v2038
      %v2144 = vunpack.c.l.b16 %v2039
      %v2145 = vpack.c.b16 %v2138, %v2137
      %v2146 = vpack.c.b16 %v2140, %v2139
      %v2147 = vpack.c.b16 %v2142, %v2141
      %v2148 = vpack.c.b16 %v2144, %v2143
      %v2154 = vsel %vm999, %v2030, 0
      %v2157 = vsel %vm999, %v2031, 0
      %2159 = vmatprep.subr.bf16.mxu0 0
      %2160 = vmatpush1.bf16.msra.mxu0 %v2145
      %2161 = vmatprep.subr.bf16.mxu0 0
      %2162 = vmatpush1.bf16.msra.mxu0 %v2146
      %2163 = vmatprep.subr.bf16.mxu0 0
      %2164 = vmatpush1.bf16.msra.mxu0 %v2147
      %2165 = vmatprep.subr.bf16.mxu0 0
      %2166 = vmatpush1.bf16.msra.mxu0 %v2148
      %2167 = vmatprep.subr.bf16.mxu0 0
      %2168 = vmatpush1.bf16.msra.mxu0 0
      %2169 = vmatprep.subr.bf16.mxu0 0
      %2170 = vmatpush1.bf16.msra.mxu0 0
      %2171 = vmatprep.subr.bf16.mxu0 0
      %2172 = vmatpush1.bf16.msra.mxu0 0
      %2173 = vmatprep.subr.bf16.mxu0 0
      %2174 = vmatpush1.bf16.msra.mxu0 0
      %2175 = vmatprep.subr.bf16.mxu0 0
      %2176 = vmatpush1.bf16.msra.mxu0 0
      %2177 = vmatprep.subr.bf16.mxu0 0
      %2178 = vmatpush1.bf16.msra.mxu0 0
      %2179 = vmatprep.subr.bf16.mxu0 0
      %2180 = vmatpush1.bf16.msra.mxu0 0
      %2181 = vmatprep.subr.bf16.mxu0 0
      %2182 = vmatpush1.bf16.msra.mxu0 0
      %2183 = vmatprep.subr.bf16.mxu0 0
      %2184 = vmatpush1.bf16.msra.mxu0 0
      %2185 = vmatprep.subr.bf16.mxu0 0
      %2186 = vmatpush1.bf16.msra.mxu0 0
      %2187 = vmatprep.subr.bf16.mxu0 0
      %2188 = vmatpush1.bf16.msra.mxu0 0
      %2189 = vmatprep.subr.bf16.mxu0 0
      %2190 = vmatpush1.bf16.msra.mxu0 0
      %2191 = vmatprep.mubr.bf16.mxu0 0
      %2192 = vmatmul.mubr.bf16.gmra.mrb[0].mxu0 %v2154
      %v2193 = vpop.f32.mrb[0].mxu0
      %v2194 = vadd.f32 %v2115, %v2193
      %v2195 = vpop.f32.mrb[0].mxu0
      %v2196 = vpop.f32.mrb[0].mxu0
      %v2197 = vadd.f32 %v2118, %v2196
      %v2198 = vpop.f32.mrb[0].mxu0
      %2199 = vmatprep.mubr.bf16.mxu0 0
      %2200 = vmatmul.mubr.bf16.gmra.mrb[0].mxu0 %v2157
      %v2201 = vpop.f32.mrb[0].mxu0
      %v2202 = vadd.f32 %v2123, %v2201
      %v2203 = vpop.f32.mrb[0].mxu0
      %v2204 = vpop.f32.mrb[0].mxu0
      %v2205 = vadd.f32 %v2126, %v2204
      %v2206 = vpop.f32.mrb[0].mxu0
      %2207 = vdwg.mxu0
      %v2208 = vpack.c.bf16 %v1590, %v1589
      %v2209 = vpack.c.bf16 %v1592, %v1591
      %v2210 = vld [vmem:[%s9 + $0x40] sm:$0xf]
      %v2211 = vld [vmem:[%s9 + $0x44] sm:$0xf]
      %v2212 = vld [vmem:[%s9 + $0x48] sm:$0xf]
      %v2213 = vld [vmem:[%s9 + $0x4c] sm:$0xf]
      %v2214 = vld [vmem:[%s9 + $0x50] sm:$0xf]
      %v2215 = vld [vmem:[%s9 + $0x54] sm:$0xf]
      %v2216 = vld [vmem:[%s9 + $0x58] sm:$0xf]
      %v2217 = vld [vmem:[%s9 + $0x5c] sm:$0xf]
      %v2218 = vld [vmem:[%s9 + $0x60] sm:$0xf]
      %v2219 = vld [vmem:[%s9 + $0x64] sm:$0xf]
      %v2220 = vld [vmem:[%s9 + $0x68] sm:$0xf]
      %v2221 = vld [vmem:[%s9 + $0x6c] sm:$0xf]
      %v2222 = vld [vmem:[%s9 + $0x70] sm:$0xf]
      %v2223 = vld [vmem:[%s9 + $0x74] sm:$0xf]
      %v2224 = vld [vmem:[%s9 + $0x78] sm:$0xf]
      %v2225 = vld [vmem:[%s9 + $0x7c] sm:$0xf]
      %v2242 = vunpack.c.l.b16 %v2210
      %v2243 = vunpack.c.l.b16 %v2211
      %v2244 = vunpack.c.l.b16 %v2212
      %v2245 = vunpack.c.l.b16 %v2213
      %v2246 = vunpack.c.l.b16 %v2214
      %v2247 = vunpack.c.l.b16 %v2215
      %v2248 = vunpack.c.l.b16 %v2216
      %v2249 = vunpack.c.l.b16 %v2217
      %v2250 = vunpack.c.l.b16 %v2218
      %v2251 = vunpack.c.l.b16 %v2219
      %v2252 = vunpack.c.l.b16 %v2220
      %v2253 = vunpack.c.l.b16 %v2221
      %v2254 = vunpack.c.l.b16 %v2222
      %v2255 = vunpack.c.l.b16 %v2223
      %v2256 = vunpack.c.l.b16 %v2224
      %v2257 = vunpack.c.l.b16 %v2225
      %v2258 = vpack.c.b16 %v2243, %v2242
      %v2259 = vpack.c.b16 %v2245, %v2244
      %v2260 = vpack.c.b16 %v2247, %v2246
      %v2261 = vpack.c.b16 %v2249, %v2248
      %v2262 = vpack.c.b16 %v2251, %v2250
      %v2263 = vpack.c.b16 %v2253, %v2252
      %v2264 = vpack.c.b16 %v2255, %v2254
      %v2265 = vpack.c.b16 %v2257, %v2256
      %2274 = vmatprep.subr.bf16.mxu0 0
      %2275 = vmatpush1.bf16.msra.mxu0 %v2258
      %2276 = vmatprep.subr.bf16.mxu0 0
      %2277 = vmatpush1.bf16.msra.mxu0 %v2259
      %2278 = vmatprep.subr.bf16.mxu0 0
      %2279 = vmatpush1.bf16.msra.mxu0 %v2260
      %2280 = vmatprep.subr.bf16.mxu0 0
      %2281 = vmatpush1.bf16.msra.mxu0 %v2261
      %2282 = vmatprep.subr.bf16.mxu0 0
      %2283 = vmatpush1.bf16.msra.mxu0 %v2262
      %2284 = vmatprep.subr.bf16.mxu0 0
      %2285 = vmatpush1.bf16.msra.mxu0 %v2263
      %2286 = vmatprep.subr.bf16.mxu0 0
      %2287 = vmatpush1.bf16.msra.mxu0 %v2264
      %2288 = vmatprep.subr.bf16.mxu0 0
      %2289 = vmatpush1.bf16.msra.mxu0 %v2265
      %2290 = vmatprep.subr.bf16.mxu0 0
      %2291 = vmatpush1.bf16.msra.mxu0 0
      %2292 = vmatprep.subr.bf16.mxu0 0
      %2293 = vmatpush1.bf16.msra.mxu0 0
      %2294 = vmatprep.subr.bf16.mxu0 0
      %2295 = vmatpush1.bf16.msra.mxu0 0
      %2296 = vmatprep.subr.bf16.mxu0 0
      %2297 = vmatpush1.bf16.msra.mxu0 0
      %2298 = vmatprep.subr.bf16.mxu0 0
      %2299 = vmatpush1.bf16.msra.mxu0 0
      %2300 = vmatprep.subr.bf16.mxu0 0
      %2301 = vmatpush1.bf16.msra.mxu0 0
      %2302 = vmatprep.subr.bf16.mxu0 0
      %2303 = vmatpush1.bf16.msra.mxu0 0
      %2304 = vmatprep.subr.bf16.mxu0 0
      %2305 = vmatpush1.bf16.msra.mxu0 0
      %2306 = vmatprep.mubr.bf16.mxu0 0
      %2307 = vmatmul.mubr.bf16.gmra.mrb[0].mxu0 %v2208
      %v2308 = vpop.f32.mrb[0].mxu0
      %v2309 = vadd.f32 0.0, %v2308
      %v2310 = vpop.f32.mrb[0].mxu0
      %v2311 = vpop.f32.mrb[0].mxu0
      %v2312 = vadd.f32 0.0, %v2311
      %v2313 = vpop.f32.mrb[0].mxu0
      %2314 = vmatprep.mubr.bf16.mxu0 0
      %2315 = vmatmul.mubr.bf16.gmra.mrb[0].mxu0 %v2209
      %v2316 = vpop.f32.mrb[0].mxu0
      %v2317 = vadd.f32 0.0, %v2316
      %v2318 = vpop.f32.mrb[0].mxu0
      %v2319 = vpop.f32.mrb[0].mxu0
      %v2320 = vadd.f32 0.0, %v2319
      %v2321 = vpop.f32.mrb[0].mxu0
      %2322 = vdwg.mxu0
      %v2323 = vadd.f32 %v2194, %v2309
      %v2324 = vadd.f32 %v2197, %v2312
      %v2325 = vadd.f32 %v2202, %v2317
      %v2326 = vadd.f32 %v2205, %v2320
      %v2327 = vpack.c.bf16 %v2024, %v2022
      %v2328 = vpack.c.bf16 %v2025, %v2023
      %v2329 = vpack.c.bf16 %v2028, %v2026
      %v2330 = vpack.c.bf16 %v2029, %v2027
      %v2331 = vld [vmem:[%s9 + $0x80] sm:$0xf]
      %v2332 = vld [vmem:[%s9 + $0x84] sm:$0xf]
      %v2333 = vld [vmem:[%s9 + $0x88] sm:$0xf]
      %v2334 = vld [vmem:[%s9 + $0x8c] sm:$0xf]
      %v2335 = vld [vmem:[%s9 + $0x90] sm:$0xf]
      %v2336 = vld [vmem:[%s9 + $0x94] sm:$0xf]
      %v2337 = vld [vmem:[%s9 + $0x98] sm:$0xf]
      %v2338 = vld [vmem:[%s9 + $0x9c] sm:$0xf]
      %v2339 = vld [vmem:[%s9 + $0xa0] sm:$0xf]
      %v2340 = vld [vmem:[%s9 + $0xa4] sm:$0xf]
      %v2341 = vld [vmem:[%s9 + $0xa8] sm:$0xf]
      %v2342 = vld [vmem:[%s9 + $0xac] sm:$0xf]
      %v2343 = vld [vmem:[%s9 + $0xb0] sm:$0xf]
      %v2344 = vld [vmem:[%s9 + $0xb4] sm:$0xf]
      %v2345 = vld [vmem:[%s9 + $0xb8] sm:$0xf]
      %v2346 = vld [vmem:[%s9 + $0xbc] sm:$0xf]
      %v2347 = vld [vmem:[%s9 + $0xc0] sm:$0xf]
      %v2348 = vld [vmem:[%s9 + $0xc4] sm:$0xf]
      %v2349 = vld [vmem:[%s9 + $0xc8] sm:$0xf]
      %v2350 = vld [vmem:[%s9 + $0xcc] sm:$0xf]
      %v2351 = vld [vmem:[%s9 + $0xd0] sm:$0xf]
      %v2352 = vld [vmem:[%s9 + $0xd4] sm:$0xf]
      %v2353 = vld [vmem:[%s9 + $0xd8] sm:$0xf]
      %v2354 = vld [vmem:[%s9 + $0xdc] sm:$0xf]
      %v2355 = vld [vmem:[%s9 + $0xe0] sm:$0xf]
      %v2356 = vld [vmem:[%s9 + $0xe4] sm:$0xf]
      %v2357 = vld [vmem:[%s9 + $0xe8] sm:$0xf]
      %v2358 = vld [vmem:[%s9 + $0xec] sm:$0xf]
      %v2359 = vld [vmem:[%s9 + $0xf0] sm:$0xf]
      %v2360 = vld [vmem:[%s9 + $0xf4] sm:$0xf]
      %v2361 = vld [vmem:[%s9 + $0xf8] sm:$0xf]
      %v2362 = vld [vmem:[%s9 + $0xfc] sm:$0xf]
      %v2395 = vunpack.c.l.b16 %v2331
      %v2396 = vunpack.c.l.b16 %v2332
      %v2397 = vunpack.c.l.b16 %v2333
      %v2398 = vunpack.c.l.b16 %v2334
      %v2399 = vunpack.c.l.b16 %v2335
      %v2400 = vunpack.c.l.b16 %v2336
      %v2401 = vunpack.c.l.b16 %v2337
      %v2402 = vunpack.c.l.b16 %v2338
      %v2403 = vunpack.c.l.b16 %v2339
      %v2404 = vunpack.c.l.b16 %v2340
      %v2405 = vunpack.c.l.b16 %v2341
      %v2406 = vunpack.c.l.b16 %v2342
      %v2407 = vunpack.c.l.b16 %v2343
      %v2408 = vunpack.c.l.b16 %v2344
      %v2409 = vunpack.c.l.b16 %v2345
      %v2410 = vunpack.c.l.b16 %v2346
      %v2411 = vunpack.c.l.b16 %v2347
      %v2412 = vunpack.c.l.b16 %v2348
      %v2413 = vunpack.c.l.b16 %v2349
      %v2414 = vunpack.c.l.b16 %v2350
      %v2415 = vunpack.c.l.b16 %v2351
      %v2416 = vunpack.c.l.b16 %v2352
      %v2417 = vunpack.c.l.b16 %v2353
      %v2418 = vunpack.c.l.b16 %v2354
      %v2419 = vunpack.c.l.b16 %v2355
      %v2420 = vunpack.c.l.b16 %v2356
      %v2421 = vunpack.c.l.b16 %v2357
      %v2422 = vunpack.c.l.b16 %v2358
      %v2423 = vunpack.c.l.b16 %v2359
      %v2424 = vunpack.c.l.b16 %v2360
      %v2425 = vunpack.c.l.b16 %v2361
      %v2426 = vunpack.c.l.b16 %v2362
      %v2427 = vpack.c.b16 %v2396, %v2395
      %v2428 = vpack.c.b16 %v2398, %v2397
      %v2429 = vpack.c.b16 %v2400, %v2399
      %v2430 = vpack.c.b16 %v2402, %v2401
      %v2431 = vpack.c.b16 %v2404, %v2403
      %v2432 = vpack.c.b16 %v2406, %v2405
      %v2433 = vpack.c.b16 %v2408, %v2407
      %v2434 = vpack.c.b16 %v2410, %v2409
      %v2435 = vpack.c.b16 %v2412, %v2411
      %v2436 = vpack.c.b16 %v2414, %v2413
      %v2437 = vpack.c.b16 %v2416, %v2415
      %v2438 = vpack.c.b16 %v2418, %v2417
      %v2439 = vpack.c.b16 %v2420, %v2419
      %v2440 = vpack.c.b16 %v2422, %v2421
      %v2441 = vpack.c.b16 %v2424, %v2423
      %v2442 = vpack.c.b16 %v2426, %v2425
      %2459 = vmatprep.subr.bf16.mxu0 0
      %2460 = vmatpush1.bf16.msra.mxu0 %v2427
      %2461 = vmatprep.subr.bf16.mxu0 0
      %2462 = vmatpush1.bf16.msra.mxu0 %v2428
      %2463 = vmatprep.subr.bf16.mxu0 0
      %2464 = vmatpush1.bf16.msra.mxu0 %v2429
      %2465 = vmatprep.subr.bf16.mxu0 0
      %2466 = vmatpush1.bf16.msra.mxu0 %v2430
      %2467 = vmatprep.subr.bf16.mxu0 0
      %2468 = vmatpush1.bf16.msra.mxu0 %v2431
      %2469 = vmatprep.subr.bf16.mxu0 0
      %2470 = vmatpush1.bf16.msra.mxu0 %v2432
      %2471 = vmatprep.subr.bf16.mxu0 0
      %2472 = vmatpush1.bf16.msra.mxu0 %v2433
      %2473 = vmatprep.subr.bf16.mxu0 0
      %2474 = vmatpush1.bf16.msra.mxu0 %v2434
      %2475 = vmatprep.subr.bf16.mxu0 0
      %2476 = vmatpush1.bf16.msra.mxu0 %v2435
      %2477 = vmatprep.subr.bf16.mxu0 0
      %2478 = vmatpush1.bf16.msra.mxu0 %v2436
      %2479 = vmatprep.subr.bf16.mxu0 0
      %2480 = vmatpush1.bf16.msra.mxu0 %v2437
      %2481 = vmatprep.subr.bf16.mxu0 0
      %2482 = vmatpush1.bf16.msra.mxu0 %v2438
      %2483 = vmatprep.subr.bf16.mxu0 0
      %2484 = vmatpush1.bf16.msra.mxu0 %v2439
      %2485 = vmatprep.subr.bf16.mxu0 0
      %2486 = vmatpush1.bf16.msra.mxu0 %v2440
      %2487 = vmatprep.subr.bf16.mxu0 0
      %2488 = vmatpush1.bf16.msra.mxu0 %v2441
      %2489 = vmatprep.subr.bf16.mxu0 0
      %2490 = vmatpush1.bf16.msra.mxu0 %v2442
      %2491 = vmatprep.mubr.bf16.mxu0 %v2328
      %2492 = vmatmul.mubr.bf16.gmra.mrb[0].mxu0 %v2327
      %v2493 = vpop.f32.mrb[0].mxu0
      %v2494 = vadd.f32 0.0, %v2493
      %v2495 = vpop.f32.mrb[0].mxu0
      %v2496 = vpop.f32.mrb[0].mxu0
      %v2497 = vadd.f32 0.0, %v2496
      %v2498 = vpop.f32.mrb[0].mxu0
      %2499 = vmatprep.mubr.bf16.mxu0 %v2330
      %2500 = vmatmul.mubr.bf16.gmra.mrb[0].mxu0 %v2329
      %v2501 = vpop.f32.mrb[0].mxu0
      %v2502 = vadd.f32 0.0, %v2501
      %v2503 = vpop.f32.mrb[0].mxu0
      %v2504 = vpop.f32.mrb[0].mxu0
      %v2505 = vadd.f32 0.0, %v2504
      %v2506 = vpop.f32.mrb[0].mxu0
      %2507 = vdwg.mxu0
      %v2508 = vadd.f32 %v2323, %v2494
      %v2509 = vadd.f32 %v2324, %v2497
      %v2510 = vadd.f32 %v2325, %v2502
      %v2511 = vadd.f32 %v2326, %v2505
      %v2512 = vld [vmem:[%s10] sm:$0x1]
      %v2514 = vlaneseq
      %v2515 = vshrl.u32 %v2514, 7
      %v2516 = vsub.s32 0, %v2515
      %v2517 = vrot.slane %v2512, %v2516
      %v2519 = vadd.f32 %v2508, %v2517
      %v2520 = vadd.f32 %v2509, %v2517
      %v2521 = vadd.f32 %v2510, %v2517
      %v2522 = vadd.f32 %v2511, %v2517
      %v2523 = vmax.f32 %v2519, 0.0
      %v2524 = vmax.f32 %v2520, 0.0
      %v2525 = vmax.f32 %v2521, 0.0
      %v2526 = vmax.f32 %v2522, 0.0
      %v2527 = vpack.c.bf16 %v2524, %v2523
      %v2528 = vpack.c.bf16 %v2526, %v2525
      %v2529 = vld [vmem:[%s11] sm:$0xff]
      %v2530 = vld [vmem:[%s11 + $0x8] sm:$0xff]
      %v2531 = vld [vmem:[%s11 + $0x10] sm:$0xff]
      %v2532 = vld [vmem:[%s11 + $0x18] sm:$0xff]
      %v2533 = vld [vmem:[%s11 + $0x20] sm:$0xff]
      %v2534 = vld [vmem:[%s11 + $0x28] sm:$0xff]
      %v2535 = vld [vmem:[%s11 + $0x30] sm:$0xff]
      %v2536 = vld [vmem:[%s11 + $0x38] sm:$0xff]
      %v2537 = vld [vmem:[%s11 + $0x40] sm:$0xff]
      %v2538 = vld [vmem:[%s11 + $0x48] sm:$0xff]
      %v2539 = vld [vmem:[%s11 + $0x50] sm:$0xff]
      %v2540 = vld [vmem:[%s11 + $0x58] sm:$0xff]
      %v2541 = vld [vmem:[%s11 + $0x60] sm:$0xff]
      %v2542 = vld [vmem:[%s11 + $0x68] sm:$0xff]
      %v2543 = vld [vmem:[%s11 + $0x70] sm:$0xff]
      %v2544 = vld [vmem:[%s11 + $0x78] sm:$0xff]
      %v2545 = vld [vmem:[%s12] sm:$0x3]
      %v2547 = vlaneseq
      %v2548 = vshrl.u32 %v2547, 7
      %v2549 = vsub.s32 0, %v2548
      %v2550 = vrot.slane %v2545, %v2549
      %v2551 = vlaneseq
      %v2552 = vshrl.u32 %v2551, 7
      %v2553 = vsub.s32 1, %v2552
      %v2554 = vrot.slane %v2545, %v2553
      %v2573 = vunpack.c.l.b16 %v2529
      %v2574 = vunpack.c.h.b16 %v2529
      %v2575 = vunpack.c.l.b16 %v2530
      %v2576 = vunpack.c.h.b16 %v2530
      %v2577 = vunpack.c.l.b16 %v2531
      %v2578 = vunpack.c.h.b16 %v2531
      %v2579 = vunpack.c.l.b16 %v2532
      %v2580 = vunpack.c.h.b16 %v2532
      %v2581 = vunpack.c.l.b16 %v2533
      %v2582 = vunpack.c.h.b16 %v2533
      %v2583 = vunpack.c.l.b16 %v2534
      %v2584 = vunpack.c.h.b16 %v2534
      %v2585 = vunpack.c.l.b16 %v2535
      %v2586 = vunpack.c.h.b16 %v2535
      %v2587 = vunpack.c.l.b16 %v2536
      %v2588 = vunpack.c.h.b16 %v2536
      %v2589 = vunpack.c.l.b16 %v2537
      %v2590 = vunpack.c.h.b16 %v2537
      %v2591 = vunpack.c.l.b16 %v2538
      %v2592 = vunpack.c.h.b16 %v2538
      %v2593 = vunpack.c.l.b16 %v2539
      %v2594 = vunpack.c.h.b16 %v2539
      %v2595 = vunpack.c.l.b16 %v2540
      %v2596 = vunpack.c.h.b16 %v2540
      %v2597 = vunpack.c.l.b16 %v2541
      %v2598 = vunpack.c.h.b16 %v2541
      %v2599 = vunpack.c.l.b16 %v2542
      %v2600 = vunpack.c.h.b16 %v2542
      %v2601 = vunpack.c.l.b16 %v2543
      %v2602 = vunpack.c.h.b16 %v2543
      %v2603 = vunpack.c.l.b16 %v2544
      %v2604 = vunpack.c.h.b16 %v2544
      %v2605 = vpack.c.b16 %v2575, %v2573
      %v2606 = vpack.c.b16 %v2576, %v2574
      %v2607 = vpack.c.b16 %v2579, %v2577
      %v2608 = vpack.c.b16 %v2580, %v2578
      %v2609 = vpack.c.b16 %v2583, %v2581
      %v2610 = vpack.c.b16 %v2584, %v2582
      %v2611 = vpack.c.b16 %v2587, %v2585
      %v2612 = vpack.c.b16 %v2588, %v2586
      %v2613 = vpack.c.b16 %v2591, %v2589
      %v2614 = vpack.c.b16 %v2592, %v2590
      %v2615 = vpack.c.b16 %v2595, %v2593
      %v2616 = vpack.c.b16 %v2596, %v2594
      %v2617 = vpack.c.b16 %v2599, %v2597
      %v2618 = vpack.c.b16 %v2600, %v2598
      %v2619 = vpack.c.b16 %v2603, %v2601
      %v2620 = vpack.c.b16 %v2604, %v2602
      %2637 = vmatprep.subr.bf16.mxu0 %v2606
      %2638 = vmatpush1.bf16.msra.mxu0 %v2605
      %2639 = vmatprep.subr.bf16.mxu0 %v2608
      %2640 = vmatpush1.bf16.msra.mxu0 %v2607
      %2641 = vmatprep.subr.bf16.mxu0 %v2610
      %2642 = vmatpush1.bf16.msra.mxu0 %v2609
      %2643 = vmatprep.subr.bf16.mxu0 %v2612
      %2644 = vmatpush1.bf16.msra.mxu0 %v2611
      %2645 = vmatprep.subr.bf16.mxu0 %v2614
      %2646 = vmatpush1.bf16.msra.mxu0 %v2613
      %2647 = vmatprep.subr.bf16.mxu0 %v2616
      %2648 = vmatpush1.bf16.msra.mxu0 %v2615
      %2649 = vmatprep.subr.bf16.mxu0 %v2618
      %2650 = vmatpush1.bf16.msra.mxu0 %v2617
      %2651 = vmatprep.subr.bf16.mxu0 %v2620
      %2652 = vmatpush1.bf16.msra.mxu0 %v2619
      %2653 = vmatprep.subr.bf16.mxu0 0
      %2654 = vmatpush1.bf16.msra.mxu0 0
      %2655 = vmatprep.subr.bf16.mxu0 0
      %2656 = vmatpush1.bf16.msra.mxu0 0
      %2657 = vmatprep.subr.bf16.mxu0 0
      %2658 = vmatpush1.bf16.msra.mxu0 0
      %2659 = vmatprep.subr.bf16.mxu0 0
      %2660 = vmatpush1.bf16.msra.mxu0 0
      %2661 = vmatprep.subr.bf16.mxu0 0
      %2662 = vmatpush1.bf16.msra.mxu0 0
      %2663 = vmatprep.subr.bf16.mxu0 0
      %2664 = vmatpush1.bf16.msra.mxu0 0
      %2665 = vmatprep.subr.bf16.mxu0 0
      %2666 = vmatpush1.bf16.msra.mxu0 0
      %2667 = vmatprep.subr.bf16.mxu0 0
      %2668 = vmatpush1.bf16.msra.mxu0 0
      %2669 = vmatprep.mubr.bf16.mxu0 0
      %2670 = vmatmul.mubr.bf16.gmra.mrb[0].mxu0 %v2527
      %v2671 = vpop.f32.mrb[0].mxu0
      %v2672 = vadd.f32 %v2550, %v2671
      %v2673 = vpop.f32.mrb[0].mxu0
      %v2674 = vadd.f32 %v2554, %v2673
      %v2675 = vpop.f32.mrb[0].mxu0
      %v2676 = vadd.f32 %v2550, %v2675
      %v2677 = vpop.f32.mrb[0].mxu0
      %v2678 = vadd.f32 %v2554, %v2677
      %2679 = vmatprep.mubr.bf16.mxu0 0
      %2680 = vmatmul.mubr.bf16.gmra.mrb[0].mxu0 %v2528
      %v2681 = vpop.f32.mrb[0].mxu0
      %v2682 = vadd.f32 %v2550, %v2681
      %v2683 = vpop.f32.mrb[0].mxu0
      %v2684 = vadd.f32 %v2554, %v2683
      %v2685 = vpop.f32.mrb[0].mxu0
      %v2686 = vadd.f32 %v2550, %v2685
      %v2687 = vpop.f32.mrb[0].mxu0
      %v2688 = vadd.f32 %v2554, %v2687
      %2689 = vdwg.mxu0
      %v2690 = vmax.f32 %v2672, 0.0
      %v2691 = vmax.f32 %v2674, 0.0
      %v2692 = vmax.f32 %v2676, 0.0
      %v2693 = vmax.f32 %v2678, 0.0
      %v2694 = vmax.f32 %v2682, 0.0
      %v2695 = vmax.f32 %v2684, 0.0
      %v2696 = vmax.f32 %v2686, 0.0
      %v2697 = vmax.f32 %v2688, 0.0
      %v2698 = vpack.c.bf16 %v2692, %v2690
      %v2699 = vpack.c.bf16 %v2693, %v2691
      %v2700 = vpack.c.bf16 %v2696, %v2694
      %v2701 = vpack.c.bf16 %v2697, %v2695
      %v2702 = vld [vmem:[%s13] sm:$0xf]
      %v2703 = vld [vmem:[%s13 + $0x4] sm:$0xf]
      %v2704 = vld [vmem:[%s13 + $0x8] sm:$0xf]
      %v2705 = vld [vmem:[%s13 + $0xc] sm:$0xf]
      %v2706 = vld [vmem:[%s13 + $0x10] sm:$0xf]
      %v2707 = vld [vmem:[%s13 + $0x14] sm:$0xf]
      %v2708 = vld [vmem:[%s13 + $0x18] sm:$0xf]
      %v2709 = vld [vmem:[%s13 + $0x1c] sm:$0xf]
      %v2710 = vld [vmem:[%s13 + $0x20] sm:$0xf]
      %v2711 = vld [vmem:[%s13 + $0x24] sm:$0xf]
      %v2712 = vld [vmem:[%s13 + $0x28] sm:$0xf]
      %v2713 = vld [vmem:[%s13 + $0x2c] sm:$0xf]
      %v2714 = vld [vmem:[%s13 + $0x30] sm:$0xf]
      %v2715 = vld [vmem:[%s13 + $0x34] sm:$0xf]
      %v2716 = vld [vmem:[%s13 + $0x38] sm:$0xf]
      %v2717 = vld [vmem:[%s13 + $0x3c] sm:$0xf]
      %v2718 = vld [vmem:[%s13 + $0x40] sm:$0xf]
      %v2719 = vld [vmem:[%s13 + $0x44] sm:$0xf]
      %v2720 = vld [vmem:[%s13 + $0x48] sm:$0xf]
      %v2721 = vld [vmem:[%s13 + $0x4c] sm:$0xf]
      %v2722 = vld [vmem:[%s13 + $0x50] sm:$0xf]
      %v2723 = vld [vmem:[%s13 + $0x54] sm:$0xf]
      %v2724 = vld [vmem:[%s13 + $0x58] sm:$0xf]
      %v2725 = vld [vmem:[%s13 + $0x5c] sm:$0xf]
      %v2726 = vld [vmem:[%s13 + $0x60] sm:$0xf]
      %v2727 = vld [vmem:[%s13 + $0x64] sm:$0xf]
      %v2728 = vld [vmem:[%s13 + $0x68] sm:$0xf]
      %v2729 = vld [vmem:[%s13 + $0x6c] sm:$0xf]
      %v2730 = vld [vmem:[%s13 + $0x70] sm:$0xf]
      %v2731 = vld [vmem:[%s13 + $0x74] sm:$0xf]
      %v2732 = vld [vmem:[%s13 + $0x78] sm:$0xf]
      %v2733 = vld [vmem:[%s13 + $0x7c] sm:$0xf]
      %v2734 = vld [vmem:[%s14] sm:$0x1]
      %v2736 = vlaneseq
      %v2737 = vshrl.u32 %v2736, 7
      %v2738 = vsub.s32 0, %v2737
      %v2739 = vrot.slane %v2734, %v2738
      %v2773 = vunpack.c.l.b16 %v2702
      %v2774 = vunpack.c.l.b16 %v2703
      %v2775 = vunpack.c.l.b16 %v2704
      %v2776 = vunpack.c.l.b16 %v2705
      %v2777 = vunpack.c.l.b16 %v2706
      %v2778 = vunpack.c.l.b16 %v2707
      %v2779 = vunpack.c.l.b16 %v2708
      %v2780 = vunpack.c.l.b16 %v2709
      %v2781 = vunpack.c.l.b16 %v2710
      %v2782 = vunpack.c.l.b16 %v2711
      %v2783 = vunpack.c.l.b16 %v2712
      %v2784 = vunpack.c.l.b16 %v2713
      %v2785 = vunpack.c.l.b16 %v2714
      %v2786 = vunpack.c.l.b16 %v2715
      %v2787 = vunpack.c.l.b16 %v2716
      %v2788 = vunpack.c.l.b16 %v2717
      %v2789 = vunpack.c.l.b16 %v2718
      %v2790 = vunpack.c.l.b16 %v2719
      %v2791 = vunpack.c.l.b16 %v2720
      %v2792 = vunpack.c.l.b16 %v2721
      %v2793 = vunpack.c.l.b16 %v2722
      %v2794 = vunpack.c.l.b16 %v2723
      %v2795 = vunpack.c.l.b16 %v2724
      %v2796 = vunpack.c.l.b16 %v2725
      %v2797 = vunpack.c.l.b16 %v2726
      %v2798 = vunpack.c.l.b16 %v2727
      %v2799 = vunpack.c.l.b16 %v2728
      %v2800 = vunpack.c.l.b16 %v2729
      %v2801 = vunpack.c.l.b16 %v2730
      %v2802 = vunpack.c.l.b16 %v2731
      %v2803 = vunpack.c.l.b16 %v2732
      %v2804 = vunpack.c.l.b16 %v2733
      %v2805 = vpack.c.b16 %v2774, %v2773
      %v2806 = vpack.c.b16 %v2776, %v2775
      %v2807 = vpack.c.b16 %v2778, %v2777
      %v2808 = vpack.c.b16 %v2780, %v2779
      %v2809 = vpack.c.b16 %v2782, %v2781
      %v2810 = vpack.c.b16 %v2784, %v2783
      %v2811 = vpack.c.b16 %v2786, %v2785
      %v2812 = vpack.c.b16 %v2788, %v2787
      %v2813 = vpack.c.b16 %v2790, %v2789
      %v2814 = vpack.c.b16 %v2792, %v2791
      %v2815 = vpack.c.b16 %v2794, %v2793
      %v2816 = vpack.c.b16 %v2796, %v2795
      %v2817 = vpack.c.b16 %v2798, %v2797
      %v2818 = vpack.c.b16 %v2800, %v2799
      %v2819 = vpack.c.b16 %v2802, %v2801
      %v2820 = vpack.c.b16 %v2804, %v2803
      %2837 = vmatprep.subr.bf16.mxu0 0
      %2838 = vmatpush1.bf16.msra.mxu0 %v2805
      %2839 = vmatprep.subr.bf16.mxu0 0
      %2840 = vmatpush1.bf16.msra.mxu0 %v2806
      %2841 = vmatprep.subr.bf16.mxu0 0
      %2842 = vmatpush1.bf16.msra.mxu0 %v2807
      %2843 = vmatprep.subr.bf16.mxu0 0
      %2844 = vmatpush1.bf16.msra.mxu0 %v2808
      %2845 = vmatprep.subr.bf16.mxu0 0
      %2846 = vmatpush1.bf16.msra.mxu0 %v2809
      %2847 = vmatprep.subr.bf16.mxu0 0
      %2848 = vmatpush1.bf16.msra.mxu0 %v2810
      %2849 = vmatprep.subr.bf16.mxu0 0
      %2850 = vmatpush1.bf16.msra.mxu0 %v2811
      %2851 = vmatprep.subr.bf16.mxu0 0
      %2852 = vmatpush1.bf16.msra.mxu0 %v2812
      %2853 = vmatprep.subr.bf16.mxu0 0
      %2854 = vmatpush1.bf16.msra.mxu0 %v2813
      %2855 = vmatprep.subr.bf16.mxu0 0
      %2856 = vmatpush1.bf16.msra.mxu0 %v2814
      %2857 = vmatprep.subr.bf16.mxu0 0
      %2858 = vmatpush1.bf16.msra.mxu0 %v2815
      %2859 = vmatprep.subr.bf16.mxu0 0
      %2860 = vmatpush1.bf16.msra.mxu0 %v2816
      %2861 = vmatprep.subr.bf16.mxu0 0
      %2862 = vmatpush1.bf16.msra.mxu0 %v2817
      %2863 = vmatprep.subr.bf16.mxu0 0
      %2864 = vmatpush1.bf16.msra.mxu0 %v2818
      %2865 = vmatprep.subr.bf16.mxu0 0
      %2866 = vmatpush1.bf16.msra.mxu0 %v2819
      %2867 = vmatprep.subr.bf16.mxu0 0
      %2868 = vmatpush1.bf16.msra.mxu0 %v2820
      %2869 = vmatprep.mubr.bf16.mxu0 %v2699
      %2870 = vmatmul.mubr.bf16.gmra.mrb[0].mxu0 %v2698
      %v2871 = vpop.f32.mrb[0].mxu0
      %v2872 = vadd.f32 %v2739, %v2871
      %v2873 = vpop.f32.mrb[0].mxu0
      %v2874 = vpop.f32.mrb[0].mxu0
      %v2875 = vadd.f32 %v2739, %v2874
      %v2876 = vpop.f32.mrb[0].mxu0
      %2877 = vmatprep.mubr.bf16.mxu0 %v2701
      %2878 = vmatmul.mubr.bf16.gmra.mrb[0].mxu0 %v2700
      %v2879 = vpop.f32.mrb[0].mxu0
      %v2880 = vadd.f32 %v2739, %v2879
      %v2881 = vpop.f32.mrb[0].mxu0
      %v2882 = vpop.f32.mrb[0].mxu0
      %v2883 = vadd.f32 %v2739, %v2882
      %v2884 = vpop.f32.mrb[0].mxu0
      %2885 = vdwg.mxu0
      %v2886 = vmax.f32 %v2872, 0.0
      %v2887 = vmax.f32 %v2875, 0.0
      %v2888 = vmax.f32 %v2880, 0.0
      %v2889 = vmax.f32 %v2883, 0.0
      %v2890 = vpack.c.bf16 %v2887, %v2886
      %v2891 = vpack.c.bf16 %v2889, %v2888
      %v2892 = vld [vmem:[%s15] sm:$0xf]
      %v2893 = vld [vmem:[%s15 + $0x4] sm:$0xf]
      %v2894 = vld [vmem:[%s15 + $0x8] sm:$0xf]
      %v2895 = vld [vmem:[%s15 + $0xc] sm:$0xf]
      %v2896 = vld [vmem:[%s15 + $0x10] sm:$0xf]
      %v2897 = vld [vmem:[%s15 + $0x14] sm:$0xf]
      %v2898 = vld [vmem:[%s15 + $0x18] sm:$0xf]
      %v2899 = vld [vmem:[%s15 + $0x1c] sm:$0xf]
      %v2900 = vld [vmem:[%s15 + $0x20] sm:$0xf]
      %v2901 = vld [vmem:[%s15 + $0x24] sm:$0xf]
      %v2902 = vld [vmem:[%s15 + $0x28] sm:$0xf]
      %v2903 = vld [vmem:[%s15 + $0x2c] sm:$0xf]
      %v2904 = vld [vmem:[%s15 + $0x30] sm:$0xf]
      %v2905 = vld [vmem:[%s15 + $0x34] sm:$0xf]
      %v2906 = vld [vmem:[%s15 + $0x38] sm:$0xf]
      %v2907 = vld [vmem:[%s15 + $0x3c] sm:$0xf]
      %v2908 = vld [vmem:[%s16] sm:$0x1]
      %v2910 = vlaneseq
      %v2911 = vshrl.u32 %v2910, 7
      %v2912 = vsub.s32 0, %v2911
      %v2913 = vrot.slane %v2908, %v2912
      %v2931 = vunpack.c.l.b16 %v2892
      %v2932 = vunpack.c.l.b16 %v2893
      %v2933 = vunpack.c.l.b16 %v2894
      %v2934 = vunpack.c.l.b16 %v2895
      %v2935 = vunpack.c.l.b16 %v2896
      %v2936 = vunpack.c.l.b16 %v2897
      %v2937 = vunpack.c.l.b16 %v2898
      %v2938 = vunpack.c.l.b16 %v2899
      %v2939 = vunpack.c.l.b16 %v2900
      %v2940 = vunpack.c.l.b16 %v2901
      %v2941 = vunpack.c.l.b16 %v2902
      %v2942 = vunpack.c.l.b16 %v2903
      %v2943 = vunpack.c.l.b16 %v2904
      %v2944 = vunpack.c.l.b16 %v2905
      %v2945 = vunpack.c.l.b16 %v2906
      %v2946 = vunpack.c.l.b16 %v2907
      %v2947 = vpack.c.b16 %v2932, %v2931
      %v2948 = vpack.c.b16 %v2934, %v2933
      %v2949 = vpack.c.b16 %v2936, %v2935
      %v2950 = vpack.c.b16 %v2938, %v2937
      %v2951 = vpack.c.b16 %v2940, %v2939
      %v2952 = vpack.c.b16 %v2942, %v2941
      %v2953 = vpack.c.b16 %v2944, %v2943
      %v2954 = vpack.c.b16 %v2946, %v2945
      %2963 = vmatprep.subr.bf16.mxu0 0
      %2964 = vmatpush1.bf16.msra.mxu0 %v2947
      %2965 = vmatprep.subr.bf16.mxu0 0
      %2966 = vmatpush1.bf16.msra.mxu0 %v2948
      %2967 = vmatprep.subr.bf16.mxu0 0
      %2968 = vmatpush1.bf16.msra.mxu0 %v2949
      %2969 = vmatprep.subr.bf16.mxu0 0
      %2970 = vmatpush1.bf16.msra.mxu0 %v2950
      %2971 = vmatprep.subr.bf16.mxu0 0
      %2972 = vmatpush1.bf16.msra.mxu0 %v2951
      %2973 = vmatprep.subr.bf16.mxu0 0
      %2974 = vmatpush1.bf16.msra.mxu0 %v2952
      %2975 = vmatprep.subr.bf16.mxu0 0
      %2976 = vmatpush1.bf16.msra.mxu0 %v2953
      %2977 = vmatprep.subr.bf16.mxu0 0
      %2978 = vmatpush1.bf16.msra.mxu0 %v2954
      %2979 = vmatprep.subr.bf16.mxu0 0
      %2980 = vmatpush1.bf16.msra.mxu0 0
      %2981 = vmatprep.subr.bf16.mxu0 0
      %2982 = vmatpush1.bf16.msra.mxu0 0
      %2983 = vmatprep.subr.bf16.mxu0 0
      %2984 = vmatpush1.bf16.msra.mxu0 0
      %2985 = vmatprep.subr.bf16.mxu0 0
      %2986 = vmatpush1.bf16.msra.mxu0 0
      %2987 = vmatprep.subr.bf16.mxu0 0
      %2988 = vmatpush1.bf16.msra.mxu0 0
      %2989 = vmatprep.subr.bf16.mxu0 0
      %2990 = vmatpush1.bf16.msra.mxu0 0
      %2991 = vmatprep.subr.bf16.mxu0 0
      %2992 = vmatpush1.bf16.msra.mxu0 0
      %2993 = vmatprep.subr.bf16.mxu0 0
      %2994 = vmatpush1.bf16.msra.mxu0 0
      %2995 = vmatprep.mubr.bf16.mxu0 0
      %2996 = vmatmul.mubr.bf16.gmra.mrb[0].mxu0 %v2890
      %v2997 = vpop.f32.mrb[0].mxu0
      %v2998 = vadd.f32 %v2913, %v2997
      %v2999 = vpop.f32.mrb[0].mxu0
      %v3000 = vpop.f32.mrb[0].mxu0
      %v3001 = vadd.f32 %v2913, %v3000
      %v3002 = vpop.f32.mrb[0].mxu0
      %3003 = vmatprep.mubr.bf16.mxu0 0
      %3004 = vmatmul.mubr.bf16.gmra.mrb[0].mxu0 %v2891
      %v3005 = vpop.f32.mrb[0].mxu0
      %v3006 = vadd.f32 %v2913, %v3005
      %v3007 = vpop.f32.mrb[0].mxu0
      %v3008 = vpop.f32.mrb[0].mxu0
      %v3009 = vadd.f32 %v2913, %v3008
      %v3010 = vpop.f32.mrb[0].mxu0
      %3011 = vdwg.mxu0
      %v3012 = vadd.f32 %v2523, %v2998
      %v3013 = vadd.f32 %v2524, %v3001
      %v3014 = vadd.f32 %v2525, %v3006
      %v3015 = vadd.f32 %v2526, %v3009
      %v3016 = vpack.c.bf16 %v3013, %v3012
      %v3017 = vpack.c.bf16 %v3015, %v3014
      %v3020 = vunpack.c.l.b16 %v3016
      %v3021 = vunpack.c.h.b16 %v3016
      %v3022 = vunpack.c.l.b16 %v3017
      %v3023 = vunpack.c.h.b16 %v3017
      %v3024 = vpack.c.b16 %v3020, %v3020
      %v3025 = vpack.c.b16 %v3021, %v3021
      %v3026 = vpack.c.b16 %v3022, %v3022
      %v3027 = vpack.c.b16 %v3023, %v3023
      %3032 = vst [vmem:[%s548] sm:$0xf] %v3024
      %3033 = vst [vmem:[%s548 + $0x4] sm:$0xf] %v3025
      %3034 = vst [vmem:[%s548 + $0x8] sm:$0xf] %v3026
      %3035 = vst [vmem:[%s548 + $0xc] sm:$0xf] %v3027
      %p3036 = scmp.lt.s32.totalorder %s28, 1
      %s3037 = scalar_select %p3036, %s28, 1
      %s3038 = smul.addr %s3037, 4
      %s3039 = smul.addr %s3038, 4
      %s3040 = scalar_lea.vmem %s17, %s3039
      // Predicated region
      $region89: #{correspondence_flow_diff_emb_mlp.5} parent=87 // pred_check
        %p3041 = pneg %p408
      $region90: #{correspondence_flow_diff_emb_mlp.5} parent=87 // pred_check_branch
        %3043 = sbr.rel (%p3041) target = $region92
      $region91: #{correspondence_flow_diff_emb_mlp.5} parent=87 // pred_region
        _
      $region92: #{correspondence_flow_diff_emb_mlp.5} parent=87 // pred_fallthru
        _
    $region88: #{correspondence_flow_diff_emb_mlp.5} parent=5 // pred_fallthru
      _
    %p3044 = scmp.le.s32.totalorder 2, %s23
    // Predicated region
    $region93: #{correspondence_flow_diff_emb_mlp.5} parent=5 // pred_check
      %p3045 = pneg %p3044
    $region94: #{correspondence_flow_diff_emb_mlp.5} parent=5 // pred_check_branch
      %3047 = sbr.rel (%p3045) target = $region96
    $region95: #{correspondence_flow_diff_emb_mlp.5} parent=5 // pred_region
      %s3048 = ssub.s32 %s23, 2
      // Predicated region
      $region97: #{correspondence_flow_diff_emb_mlp.5} parent=95 // pred_check
        %p3049 = pneg %p414
      $region98: #{correspondence_flow_diff_emb_mlp.5} parent=95 // pred_check_branch
        %3051 = sbr.rel (%p3049) target = $region100
      $region99: #{correspondence_flow_diff_emb_mlp.5} parent=95 // pred_region
        %p3052 = scmp.lt.s32.totalorder %s29, 1
        %s3053 = scalar_select %p3052, %s29, 1
        %s3054 = smul.addr %s3053, 4
        %s3055 = smul.addr %s3054, 4
        %s3056 = scalar_lea.vmem %s17, %s3055
      $region100: #{correspondence_flow_diff_emb_mlp.5} parent=95 // pred_fallthru
        _
    $region96: #{correspondence_flow_diff_emb_mlp.5} parent=5 // pred_fallthru
      _
  $region6: #{correspondence_flow_diff_emb_mlp.5} parent=0 // loop_footer
    %s27 = sadd.s32 1, %s23
  $region7: #{correspondence_flow_diff_emb_mlp.5} parent=0 // loop_footer_branch
    %22 = sbr.rel target = $region3
  $region8: #{correspondence_flow_diff_emb_mlp.5} parent=0 // loop_exit
    _

</llo_original>
